<compile_context>
chip_gen: v7x
topology: tpu7x:2x2x1
jax: 0.10.0
libtpu: 0.0.40
codegen_flags: <defaults>
</compile_context>

<pallas_src>
import functools

import jax
import jax.numpy as jnp
from jax import lax
from jax.experimental import pallas as pl
from jax.experimental.pallas import tpu as pltpu

LANE = 128


def _round_up(x, m):
    return (x + m - 1) // m * m


# ------------------------------ fused kernel -------------------------------

def _clip_encoder_kernel(
        # inputs
        tokens_ref,        # (TB, S, CPPp) bf16 patch pixels (row 0 zeros = CLS slot)
        pos_cls_ref,       # (S, HP)  f32  pos embeds (+ class embed folded into row 0)
        patch_w_ref,       # (CPPp, HP) bf16
        pre_g_ref, pre_b_ref,            # (1, HP) f32
        ln1_g_ref, ln1_b_ref,            # (1, 1, HP) f32
        qkv_w_ref,         # (1, HP, 3*HP) bf16  dense Q|K|V chunks, heads side by side
        qkv_b_ref,         # (1, 1, 3*HP)  f32   (attention scale folded into Q)
        o_w_ref,           # (1, H, HP)    bf16
        o_b_ref,           # (1, 1, HP)    f32
        ln2_g_ref, ln2_b_ref,            # (1, 1, HP) f32
        fc1_w_ref,         # (1, HP, IP) bf16
        fc1_b_ref,         # (1, 1, IP)  f32
        fc2_w_ref,         # (1, IP, HP) bf16
        fc2_b_ref,         # (1, 1, HP)  f32
        post_g_ref, post_b_ref,          # (1, HP) f32
        proj_w_ref,        # (HP, PP) bf16
        # outputs
        out_ref,           # (1, TB, PP) f32
        # scratch
        state_ref,         # (TB*S, HP) f32  hidden state carried across layer steps
        *, TB, S, S_real, H, HP, NH, DH, eps):
    layer = pl.program_id(1)
    n_layers = pl.num_programs(1)

    # Lane mask marking the real hidden features (lanes < H); the rest of the
    # 128-wide slab is zero padding and must not contribute to LN statistics.
    lane_id = lax.broadcasted_iota(jnp.int32, (1, HP), 1)
    feat_mask = (lane_id < H).astype(jnp.float32)
    inv_h = 1.0 / H

    def layernorm(x, g, b):                                  # f32 math (v5e-safe)
        xm = x * feat_mask
        mean = jnp.sum(xm, axis=-1, keepdims=True) * inv_h
        c = (x - mean) * feat_mask
        var = jnp.sum(c * c, axis=-1, keepdims=True) * inv_h
        return c * lax.rsqrt(var + eps) * g + b              # padded lanes stay 0

    # ---- layer 0: patch embedding + CLS/pos embeddings + pre-LayerNorm ----
    @pl.when(layer == 0)
    def _():
        for i in range(TB):  # tiny static loop, runs once per batch group only
            patch = jnp.dot(tokens_ref[i], patch_w_ref[...],
                            preferred_element_type=jnp.float32)        # (S, HP)
            emb = patch + pos_cls_ref[...]                   # CLS folded into row 0
            state_ref[i * S:(i + 1) * S, :] = layernorm(
                emb, pre_g_ref[...], pre_b_ref[...])

    x = state_ref[...]                                       # (TB*S, HP) f32

    # ------------------------- self-attention block -------------------------
    xn = layernorm(x, ln1_g_ref[0], ln1_b_ref[0]).astype(jnp.bfloat16)
    qkv = jnp.dot(xn, qkv_w_ref[0],
                  preferred_element_type=jnp.float32) + qkv_b_ref[0]   # (TB*S, 3*HP)

    # Padded key rows (>= S_real) must not receive attention mass.
    key_pos = lax.broadcasted_iota(jnp.int32, (1, S), 1)
    kmask = jnp.where(key_pos < S_real, 0.0, -1e9).astype(jnp.float32)

    # TODO(synk): at real CLIP sizes (NH>=12, TB>=4) replace this static unroll
    # with a head-group-batched dot_general / fori_loop over 128-lane head
    # groups to bound code size and vreg pressure; at toy size TB*NH=4.
    ctx_imgs = []
    for i in range(TB):
        rows = slice(i * S, (i + 1) * S)
        ctx_heads = []
        for h in range(NH):
            q = qkv[rows, h * DH:(h + 1) * DH].astype(jnp.bfloat16)
            k = qkv[rows, HP + h * DH:HP + (h + 1) * DH].astype(jnp.bfloat16)
            v = qkv[rows, 2 * HP + h * DH:2 * HP + (h + 1) * DH].astype(jnp.bfloat16)
            # q.k^T without materializing a transpose (contract the lane dims);
            # the attention scale is already folded into the Q weights.
            s = lax.dot_general(q, k, (((1,), (1,)), ((), ())),
                                preferred_element_type=jnp.float32)    # (S, S)
            s = s + kmask
            s = s - jnp.max(s, axis=-1, keepdims=True)
            p = jnp.exp(s)
            p = p * pl.reciprocal(jnp.sum(p, axis=-1, keepdims=True), approx=True)
            ctx_heads.append(jnp.dot(p.astype(jnp.bfloat16), v,
                                     preferred_element_type=jnp.float32))  # (S, DH)
        ctx_imgs.append(jnp.concatenate(ctx_heads, axis=-1))             # (S, H)
    ctx = jnp.concatenate(ctx_imgs, axis=0).astype(jnp.bfloat16)         # (TB*S, H)
    # Single hoisted output projection: one deep-K matmul instead of NH small ones.
    attn = jnp.dot(ctx, o_w_ref[0], preferred_element_type=jnp.float32)  # (TB*S, HP)
    x = x + attn + o_b_ref[0]                                # residual + out-proj bias

    # ------------------ MLP block (fc1 -> quick-GELU -> fc2) ----------------
    xn = layernorm(x, ln2_g_ref[0], ln2_b_ref[0]).astype(jnp.bfloat16)
    a1 = jnp.dot(xn, fc1_w_ref[0],
                 preferred_element_type=jnp.float32) + fc1_b_ref[0]      # (TB*S, IP)
    a1 = a1 * jax.nn.sigmoid(1.702 * a1)                     # quick-GELU in f32
    a2 = jnp.dot(a1.astype(jnp.bfloat16), fc2_w_ref[0],
                 preferred_element_type=jnp.float32) + fc2_b_ref[0]
    x = x + a2
    state_ref[...] = x

    # ---- last layer: pool CLS tokens, post-LN, visual_projection ----------
    @pl.when(layer == n_layers - 1)
    def _():
        pooled = jnp.concatenate([x[i * S:i * S + 1, :] for i in range(TB)],
                                 axis=0)                                  # (TB, HP)
        pooled = layernorm(pooled, post_g_ref[...], post_b_ref[...])
        out_ref[0] = jnp.dot(pooled.astype(jnp.bfloat16), proj_w_ref[...],
                             preferred_element_type=jnp.float32)          # (TB, PP)


# ------------------------------ forward wrapper -----------------------------

def _pick_tb(batch):
    """Largest batch-fold factor <= 8 dividing B while keeping >= 2 steps on
    the parallel batch axis (so both v7x TensorCores stay busy)."""
    tb = 1
    for cand in range(2, min(batch, 8) + 1):
        if batch % cand == 0 and batch // cand >= 2:
            tb = cand
    return tb


def _pick_vmem_limit():
    """~3/4 of this chip's physical VMEM (96 MiB on v5e/v6e, 48 MiB on v7x)."""
    limit = 48 * 1024 * 1024
    try:
        cap = int(pltpu.get_tpu_info().vmem_capacity_bytes)
        limit = max(32 * 1024 * 1024, min(cap * 3 // 4, 100 * 1024 * 1024))
    except Exception:
        pass
    return limit


def clip_vision_forward(packed, pixel_values, cfg):
    """ClipVisionModel.forward: CLIPVisionModel -> pooled CLS -> visual_projection.
    Returns image_embeds of shape (B, projection_dim), float32."""
    B = pixel_values.shape[0]
    P, C, H = cfg.patch_size, cfg.num_channels, cfg.hidden_size
    G = cfg.image_size // P
    S_real = G * G + 1
    CPP = C * P * P
    NH = cfg.num_heads
    DH = H // NH

    S, HP = packed["pos_cls"].shape
    CPPp = packed["patch_w"].shape[0]
    QKVP = packed["qkv_w"].shape[-1]
    IP = packed["fc1_w"].shape[-1]
    PP = packed["proj_w"].shape[-1]
    L = packed["qkv_w"].shape[0]

    TB = _pick_tb(B)

    # Conv2d(stride=P) rewritten as a PxP patch gather; tokens are emitted in
    # bf16 with the per-patch feature dim padded to a multiple of 128 lanes.
    # Row 0 is a zero token standing in for the CLS position (its embedding is
    # folded into pos_cls row 0); rows >= S_real are sublane padding.
    x = pixel_values.reshape(B, C, G, P, G, P)
    x = x.transpose(0, 2, 4, 1, 3, 5).reshape(B, G * G, CPP)
    tokens = jnp.zeros((B, S, CPPp), jnp.bfloat16)
    tokens = tokens.at[:, 1:G * G + 1, :CPP].set(x.astype(jnp.bfloat16))

    kernel = functools.partial(
        _clip_encoder_kernel, TB=TB, S=S, S_real=S_real, H=H, HP=HP,
        NH=NH, DH=DH, eps=cfg.layer_norm_eps)

    batch_3d = lambda b, l: (b, 0, 0)
    layer_3d = lambda b, l: (l, 0, 0)
    const_2d = lambda b, l: (0, 0)

    # TODO(synk): at real CLIP sizes, move the boundary-only inputs (tokens,
    # patch_w, proj_w, post_g/post_b) to memory_space=pl.ANY and DMA them
    # manually under pl.when(layer==0 / layer==L-1) so they are not held in
    # VMEM across all L layer steps (matters most for v7x's 64 MiB VMEM).
    out = pl.pallas_call(
        kernel,
        out_shape=jax.ShapeDtypeStruct((B // TB, TB, PP), jnp.float32),
        grid=(B // TB, L),
        in_specs=[
            pl.BlockSpec((TB, S, CPPp), batch_3d),        # tokens
            pl.BlockSpec((S, HP), const_2d),              # pos_cls
            pl.BlockSpec((CPPp, HP), const_2d),           # patch_w
            pl.BlockSpec((1, HP), const_2d),              # pre_g
            pl.BlockSpec((1, HP), const_2d),              # pre_b
            pl.BlockSpec((1, 1, HP), layer_3d),           # ln1_g
            pl.BlockSpec((1, 1, HP), layer_3d),           # ln1_b
            pl.BlockSpec((1, HP, QKVP), layer_3d),        # qkv_w
            pl.BlockSpec((1, 1, QKVP), layer_3d),         # qkv_b
            pl.BlockSpec((1, H, HP), layer_3d),           # o_w
            pl.BlockSpec((1, 1, HP), layer_3d),           # o_b
            pl.BlockSpec((1, 1, HP), layer_3d),           # ln2_g
            pl.BlockSpec((1, 1, HP), layer_3d),           # ln2_b
            pl.BlockSpec((1, HP, IP), layer_3d),          # fc1_w
            pl.BlockSpec((1, 1, IP), layer_3d),           # fc1_b
            pl.BlockSpec((1, IP, HP), layer_3d),          # fc2_w
            pl.BlockSpec((1, 1, HP), layer_3d),           # fc2_b
            pl.BlockSpec((1, HP), const_2d),              # post_g
            pl.BlockSpec((1, HP), const_2d),              # post_b
            pl.BlockSpec((HP, PP), const_2d),             # proj_w
        ],
        out_specs=pl.BlockSpec((1, TB, PP), batch_3d),
        scratch_shapes=[pltpu.VMEM((TB * S, HP), jnp.float32)],
        compiler_params=pltpu.CompilerParams(
            dimension_semantics=("parallel", "arbitrary"),
            vmem_limit_bytes=_pick_vmem_limit()),
    )(
        tokens, packed["pos_cls"], packed["patch_w"],
        packed["pre_g"], packed["pre_b"],
        packed["ln1_g"], packed["ln1_b"],
        packed["qkv_w"], packed["qkv_b"],
        packed["o_w"], packed["o_b"],
        packed["ln2_g"], packed["ln2_b"],
        packed["fc1_w"], packed["fc1_b"],
        packed["fc2_w"], packed["fc2_b"],
        packed["post_g"], packed["post_b"], packed["proj_w"],
    )
    # Un-fold the batch groups and drop the lane padding of the projection.
    return out.reshape(B, PP)[:, :cfg.projection_dim]


# ------------------------------ model config --------------------------------

class Config:
    image_size = 16
    patch_size = 8
    num_channels = 3
    hidden_size = 32
    num_heads = 2
    intermediate_size = 64
    num_layers = 2
    projection_dim = 64        # stands in for CLIP's 512, same semantics
    layer_norm_eps = 1e-5


def init_params(key, cfg):
    """Deterministic synthetic parameters (shapes follow HF CLIPVisionModel)."""
    P, C, H = cfg.patch_size, cfg.num_channels, cfg.hidden_size
    num_pos = (cfg.image_size // P) ** 2 + 1
    keys = iter(jax.random.split(key, 64))

    def w(shape, scale=0.02):
        return (scale * jax.random.normal(next(keys), shape)).astype(jnp.float32)

    params = {
        "patch_w": w((C * P * P, H)),          # Conv2d weight reshaped (in, out)
        "class_embed": w((H,)),
        "pos_embed": w((num_pos, H)),
        "pre_ln_g": jnp.ones((H,), jnp.float32),
        "pre_ln_b": jnp.zeros((H,), jnp.float32),
        "post_ln_g": jnp.ones((H,), jnp.float32),
        "post_ln_b": jnp.zeros((H,), jnp.float32),
        "proj_w": w((H, cfg.projection_dim)),  # visual_projection (no bias)
        "layers": [],
    }
    for _ in range(cfg.num_layers):
        params["layers"].append({
            "ln1_g": jnp.ones((H,), jnp.float32),
            "ln1_b": jnp.zeros((H,), jnp.float32),
            "q_w": w((H, H)), "q_b": jnp.zeros((H,), jnp.float32),
            "k_w": w((H, H)), "k_b": jnp.zeros((H,), jnp.float32),
            "v_w": w((H, H)), "v_b": jnp.zeros((H,), jnp.float32),
            "o_w": w((H, H)), "o_b": jnp.zeros((H,), jnp.float32),
            "ln2_g": jnp.ones((H,), jnp.float32),
            "ln2_b": jnp.zeros((H,), jnp.float32),
            "fc1_w": w((H, cfg.intermediate_size)),
            "fc1_b": jnp.zeros((cfg.intermediate_size,), jnp.float32),
            "fc2_w": w((cfg.intermediate_size, H)),
            "fc2_b": jnp.zeros((H,), jnp.float32),
        })
    return params


def pack_params(params, cfg):
    """Zero-pad to lane-dense (multiple-of-128) shapes, pack Q/K/V densely
    (heads side by side inside one 128-aligned chunk each, attention scale
    folded into Q), pad S to a multiple of 8 sublanes, cast matmul weights to
    bf16 and stack per-layer tensors along a leading layer axis."""
    H, NH = cfg.hidden_size, cfg.num_heads
    DH = H // NH
    I, PD = cfg.intermediate_size, cfg.projection_dim
    P, C = cfg.patch_size, cfg.num_channels
    G = cfg.image_size // P
    S_real = G * G + 1
    S = _round_up(S_real, 8)
    CPP = C * P * P
    CPPp = _round_up(CPP, LANE)
    HP = _round_up(H, LANE)
    IP = _round_up(I, LANE)
    PP = _round_up(PD, LANE)
    scale = DH ** -0.5

    def pad2(m, r, c):
        return jnp.zeros((r, c), jnp.float32).at[:m.shape[0], :m.shape[1]].set(m)

    def pad_row(v, n):
        return jnp.zeros((1, n), jnp.float32).at[0, :v.shape[0]].set(v)

    # Position embeddings with the class embedding folded into row 0
    # (the kernel feeds a zero pixel-token for the CLS position).
    pos_cls = jnp.zeros((S, HP), jnp.float32)
    pos_cls = pos_cls.at[:S_real, :H].set(params["pos_embed"])
    pos_cls = pos_cls.at[0, :H].add(params["class_embed"])

    packed = {
        "patch_w": pad2(params["patch_w"], CPPp, HP).astype(jnp.bfloat16),
        "pos_cls": pos_cls,
        "pre_g": pad_row(params["pre_ln_g"], HP),
        "pre_b": pad_row(params["pre_ln_b"], HP),
        "post_g": pad_row(params["post_ln_g"], HP),
        "post_b": pad_row(params["post_ln_b"], HP),
        "proj_w": pad2(params["proj_w"], HP, PP).astype(jnp.bfloat16),
    }

    per_layer = {k: [] for k in
                 ("ln1_g", "ln1_b", "qkv_w", "qkv_b", "o_w", "o_b",
                  "ln2_g", "ln2_b", "fc1_w", "fc1_b", "fc2_w", "fc2_b")}
    for lp in params["layers"]:
        # Dense Q|K|V packing: chunk j (j=0 Q, j=1 K, j=2 V) occupies lanes
        # [j*HP, j*HP+H) with head h at [h*DH, (h+1)*DH); scale folded into Q.
        qkv_w = jnp.zeros((HP, 3 * HP), jnp.float32)
        qkv_b = jnp.zeros((1, 3 * HP), jnp.float32)
        qkv_w = qkv_w.at[:H, 0:H].set(lp["q_w"] * scale)
        qkv_w = qkv_w.at[:H, HP:HP + H].set(lp["k_w"])
        qkv_w = qkv_w.at[:H, 2 * HP:2 * HP + H].set(lp["v_w"])
        qkv_b = qkv_b.at[0, 0:H].set(lp["q_b"] * scale)
        qkv_b = qkv_b.at[0, HP:HP + H].set(lp["k_b"])
        qkv_b = qkv_b.at[0, 2 * HP:2 * HP + H].set(lp["v_b"])
        o_w = jnp.zeros((H, HP), jnp.float32).at[:, :H].set(lp["o_w"])

        per_layer["qkv_w"].append(qkv_w.astype(jnp.bfloat16))
        per_layer["qkv_b"].append(qkv_b)
        per_layer["o_w"].append(o_w.astype(jnp.bfloat16))
        per_layer["o_b"].append(pad_row(lp["o_b"], HP))
        per_layer["ln1_g"].append(pad_row(lp["ln1_g"], HP))
        per_layer["ln1_b"].append(pad_row(lp["ln1_b"], HP))
        per_layer["ln2_g"].append(pad_row(lp["ln2_g"], HP))
        per_layer["ln2_b"].append(pad_row(lp["ln2_b"], HP))
        per_layer["fc1_w"].append(pad2(lp["fc1_w"], HP, IP).astype(jnp.bfloat16))
        per_layer["fc1_b"].append(pad_row(lp["fc1_b"], IP))
        per_layer["fc2_w"].append(pad2(lp["fc2_w"], IP, HP).astype(jnp.bfloat16))
        per_layer["fc2_b"].append(pad_row(lp["fc2_b"], HP))

    for k, v in per_layer.items():
        packed[k] = jnp.stack(v)                 # leading layer axis
    return packed


# ----------------------------------- main ----------------------------------

if __name__ == "__main__":
    cfg = Config()
    key = jax.random.PRNGKey(0)
    k_params, k_pixels = jax.random.split(key)

    params = init_params(k_params, cfg)
    packed = pack_params(params, cfg)

    B = 4   # folded as TB=2 images per grid step, 2 "parallel" batch steps
    pixel_values = jax.random.normal(
        k_pixels,
        (B, cfg.num_channels, cfg.image_size, cfg.image_size),
        dtype=jnp.float32)

    fwd = jax.jit(functools.partial(clip_vision_forward, cfg=cfg))
    image_embeds = jax.block_until_ready(fwd(packed, pixel_values))

    assert image_embeds.shape == (B, cfg.projection_dim)
    assert image_embeds.dtype == jnp.float32
    print("KERNEL_OK")
</pallas_src>

<mosaic_0001>
module attributes {stable_mosaic.version = 11 : i64} {
  func.func @_clip_encoder_kernel(%arg0: i32, %arg1: i32, %arg2: memref<2x8x256xbf16, #tpu.memory_space<vmem>>, %arg3: memref<8x128xf32, #tpu.memory_space<vmem>>, %arg4: memref<256x128xbf16, #tpu.memory_space<vmem>>, %arg5: memref<1x128xf32, #tpu.memory_space<vmem>>, %arg6: memref<1x128xf32, #tpu.memory_space<vmem>>, %arg7: memref<1x1x128xf32, #tpu.memory_space<vmem>>, %arg8: memref<1x1x128xf32, #tpu.memory_space<vmem>>, %arg9: memref<1x128x384xbf16, #tpu.memory_space<vmem>>, %arg10: memref<1x1x384xf32, #tpu.memory_space<vmem>>, %arg11: memref<1x32x128xbf16, #tpu.memory_space<vmem>>, %arg12: memref<1x1x128xf32, #tpu.memory_space<vmem>>, %arg13: memref<1x1x128xf32, #tpu.memory_space<vmem>>, %arg14: memref<1x1x128xf32, #tpu.memory_space<vmem>>, %arg15: memref<1x128x128xbf16, #tpu.memory_space<vmem>>, %arg16: memref<1x1x128xf32, #tpu.memory_space<vmem>>, %arg17: memref<1x128x128xbf16, #tpu.memory_space<vmem>>, %arg18: memref<1x1x128xf32, #tpu.memory_space<vmem>>, %arg19: memref<1x128xf32, #tpu.memory_space<vmem>>, %arg20: memref<1x128xf32, #tpu.memory_space<vmem>>, %arg21: memref<128x128xbf16, #tpu.memory_space<vmem>>, %arg22: memref<1x2x128xf32, #tpu.memory_space<vmem>>, %arg23: memref<16x128xf32, #tpu.memory_space<vmem>>) attributes {dimension_semantics = [#tpu.dimension_semantics<parallel>, #tpu.dimension_semantics<arbitrary>], iteration_bounds = array<i64: 2, 2>, scalar_prefetch = 0 : i64, scratch_operands = 1 : i64, tpu.core_type = #tpu.core_type<tc>, window_params = [{transform_indices = @transform_0, window_bounds = array<i64: 2, 8, 256>}, {pipeline_mode = #tpu.pipeline_mode<synchronous>, transform_indices = @transform_1, window_bounds = array<i64: 8, 128>}, {pipeline_mode = #tpu.pipeline_mode<synchronous>, transform_indices = @transform_2, window_bounds = array<i64: 256, 128>}, {pipeline_mode = #tpu.pipeline_mode<synchronous>, transform_indices = @transform_3, window_bounds = array<i64: 1, 128>}, {pipeline_mode = #tpu.pipeline_mode<synchronous>, transform_indices = @transform_4, window_bounds = array<i64: 1, 128>}, {transform_indices = @transform_5, window_bounds = array<i64: 1, 1, 128>}, {transform_indices = @transform_6, window_bounds = array<i64: 1, 1, 128>}, {transform_indices = @transform_7, window_bounds = array<i64: 1, 128, 384>}, {transform_indices = @transform_8, window_bounds = array<i64: 1, 1, 384>}, {transform_indices = @transform_9, window_bounds = array<i64: 1, 32, 128>}, {transform_indices = @transform_10, window_bounds = array<i64: 1, 1, 128>}, {transform_indices = @transform_11, window_bounds = array<i64: 1, 1, 128>}, {transform_indices = @transform_12, window_bounds = array<i64: 1, 1, 128>}, {transform_indices = @transform_13, window_bounds = array<i64: 1, 128, 128>}, {transform_indices = @transform_14, window_bounds = array<i64: 1, 1, 128>}, {transform_indices = @transform_15, window_bounds = array<i64: 1, 128, 128>}, {transform_indices = @transform_16, window_bounds = array<i64: 1, 1, 128>}, {pipeline_mode = #tpu.pipeline_mode<synchronous>, transform_indices = @transform_17, window_bounds = array<i64: 1, 128>}, {pipeline_mode = #tpu.pipeline_mode<synchronous>, transform_indices = @transform_18, window_bounds = array<i64: 1, 128>}, {pipeline_mode = #tpu.pipeline_mode<synchronous>, transform_indices = @transform_19, window_bounds = array<i64: 128, 128>}, {transform_indices = @transform_20, window_bounds = array<i64: 1, 2, 128>}]} {
    %0 = tpu.iota {dimensions = array<i32: 1>} : vector<1x128xi32>
    %c32_i32 = arith.constant 32 : i32
    %1 = vector.broadcast %c32_i32 : i32 to vector<1x128xi32>
    %2 = arith.cmpi slt, %0, %1 : vector<1x128xi32>
    %3 = arith.extui %2 : vector<1x128xi1> to vector<1x128xi32>
    %4 = arith.sitofp %3 : vector<1x128xi32> to vector<1x128xf32>
    %c0_i32 = arith.constant 0 : i32
    %5 = arith.cmpi eq, %arg1, %c0_i32 : i32
    %6 = arith.extui %5 : i1 to i32
    %c0_i32_0 = arith.constant 0 : i32
    %7 = arith.cmpi ne, %6, %c0_i32_0 : i32
    scf.if %7 {
      %c0_74 = arith.constant 0 : index
      %c0_75 = arith.constant 0 : index
      %c0_76 = arith.constant 0 : index
      %204 = vector.load %arg2[%c0_74, %c0_75, %c0_76] : memref<2x8x256xbf16, #tpu.memory_space<vmem>>, vector<1x8x256xbf16>
      %205 = vector.shape_cast %204 : vector<1x8x256xbf16> to vector<8x256xbf16>
      %c0_77 = arith.constant 0 : index
      %c0_78 = arith.constant 0 : index
      %206 = vector.load %arg4[%c0_77, %c0_78] : memref<256x128xbf16, #tpu.memory_space<vmem>>, vector<256x128xbf16>
      %cst_79 = arith.constant dense<0.000000e+00> : vector<8x128xf32>
      %207 = tpu.matmul %205, %206, %cst_79 {dimension_numbers = #tpu.dot_dimension_numbers<[1], [0], [0], [1], [0, 0, 1, 1], [], []>} : vector<8x256xbf16>, vector<256x128xbf16>, vector<8x128xf32> -> vector<8x128xf32>
      %c0_80 = arith.constant 0 : index
      %c0_81 = arith.constant 0 : index
      %208 = vector.load %arg3[%c0_80, %c0_81] : memref<8x128xf32, #tpu.memory_space<vmem>>, vector<8x128xf32>
      %209 = arith.addf %207, %208 : vector<8x128xf32>
      %c0_82 = arith.constant 0 : index
      %c0_83 = arith.constant 0 : index
      %210 = vector.load %arg5[%c0_82, %c0_83] : memref<1x128xf32, #tpu.memory_space<vmem>>, vector<1x128xf32>
      %c0_84 = arith.constant 0 : index
      %c0_85 = arith.constant 0 : index
      %211 = vector.load %arg6[%c0_84, %c0_85] : memref<1x128xf32, #tpu.memory_space<vmem>>, vector<1x128xf32>
      %212 = vector.broadcast %4 : vector<1x128xf32> to vector<8x128xf32>
      %213 = arith.mulf %209, %212 : vector<8x128xf32>
      %cst_86 = arith.constant dense<0.000000e+00> : vector<8xf32>
      %214 = vector.multi_reduction <add>, %213, %cst_86 [1] : vector<8x128xf32> to vector<8xf32>
      %215 = vector.shape_cast %214 : vector<8xf32> to vector<8x1xf32>
      %cst_87 = arith.constant 3.125000e-02 : f32
      %216 = vector.broadcast %cst_87 : f32 to vector<8x1xf32>
      %217 = arith.mulf %215, %216 : vector<8x1xf32>
      %218 = vector.broadcast %217 : vector<8x1xf32> to vector<8x128xf32>
      %219 = arith.subf %209, %218 : vector<8x128xf32>
      %220 = vector.broadcast %4 : vector<1x128xf32> to vector<8x128xf32>
      %221 = arith.mulf %219, %220 : vector<8x128xf32>
      %222 = arith.mulf %221, %221 : vector<8x128xf32>
      %cst_88 = arith.constant dense<0.000000e+00> : vector<8xf32>
      %223 = vector.multi_reduction <add>, %222, %cst_88 [1] : vector<8x128xf32> to vector<8xf32>
      %224 = vector.shape_cast %223 : vector<8xf32> to vector<8x1xf32>
      %cst_89 = arith.constant 3.125000e-02 : f32
      %225 = vector.broadcast %cst_89 : f32 to vector<8x1xf32>
      %226 = arith.mulf %224, %225 : vector<8x1xf32>
      %cst_90 = arith.constant 9.99999974E-6 : f32
      %227 = vector.broadcast %cst_90 : f32 to vector<8x1xf32>
      %228 = arith.addf %226, %227 : vector<8x1xf32>
      %229 = math.rsqrt %228 : vector<8x1xf32>
      %230 = vector.broadcast %229 : vector<8x1xf32> to vector<8x128xf32>
      %231 = arith.mulf %221, %230 : vector<8x128xf32>
      %232 = vector.broadcast %210 : vector<1x128xf32> to vector<8x128xf32>
      %233 = arith.mulf %231, %232 : vector<8x128xf32>
      %234 = vector.broadcast %211 : vector<1x128xf32> to vector<8x128xf32>
      %235 = arith.addf %233, %234 : vector<8x128xf32>
      %c0_91 = arith.constant 0 : index
      %c0_92 = arith.constant 0 : index
      %236 = vector.load %arg23[%c0_91, %c0_92] : memref<16x128xf32, #tpu.memory_space<vmem>>, vector<8x128xf32>
      tpu.vector_store %arg23[%c0_91, %c0_92], %235 {strides = array<i32>} : memref<16x128xf32, #tpu.memory_space<vmem>>, vector<8x128xf32>,
      %c1 = arith.constant 1 : index
      %c0_93 = arith.constant 0 : index
      %c0_94 = arith.constant 0 : index
      %237 = vector.load %arg2[%c1, %c0_93, %c0_94] : memref<2x8x256xbf16, #tpu.memory_space<vmem>>, vector<1x8x256xbf16>
      %238 = vector.shape_cast %237 : vector<1x8x256xbf16> to vector<8x256xbf16>
      %c0_95 = arith.constant 0 : index
      %c0_96 = arith.constant 0 : index
      %239 = vector.load %arg4[%c0_95, %c0_96] : memref<256x128xbf16, #tpu.memory_space<vmem>>, vector<256x128xbf16>
      %cst_97 = arith.constant dense<0.000000e+00> : vector<8x128xf32>
      %240 = tpu.matmul %238, %239, %cst_97 {dimension_numbers = #tpu.dot_dimension_numbers<[1], [0], [0], [1], [0, 0, 1, 1], [], []>} : vector<8x256xbf16>, vector<256x128xbf16>, vector<8x128xf32> -> vector<8x128xf32>
      %c0_98 = arith.constant 0 : index
      %c0_99 = arith.constant 0 : index
      %241 = vector.load %arg3[%c0_98, %c0_99] : memref<8x128xf32, #tpu.memory_space<vmem>>, vector<8x128xf32>
      %242 = arith.addf %240, %241 : vector<8x128xf32>
      %c0_100 = arith.constant 0 : index
      %c0_101 = arith.constant 0 : index
      %243 = vector.load %arg5[%c0_100, %c0_101] : memref<1x128xf32, #tpu.memory_space<vmem>>, vector<1x128xf32>
      %c0_102 = arith.constant 0 : index
      %c0_103 = arith.constant 0 : index
      %244 = vector.load %arg6[%c0_102, %c0_103] : memref<1x128xf32, #tpu.memory_space<vmem>>, vector<1x128xf32>
      %245 = vector.broadcast %4 : vector<1x128xf32> to vector<8x128xf32>
      %246 = arith.mulf %242, %245 : vector<8x128xf32>
      %cst_104 = arith.constant dense<0.000000e+00> : vector<8xf32>
      %247 = vector.multi_reduction <add>, %246, %cst_104 [1] : vector<8x128xf32> to vector<8xf32>
      %248 = vector.shape_cast %247 : vector<8xf32> to vector<8x1xf32>
      %cst_105 = arith.constant 3.125000e-02 : f32
      %249 = vector.broadcast %cst_105 : f32 to vector<8x1xf32>
      %250 = arith.mulf %248, %249 : vector<8x1xf32>
      %251 = vector.broadcast %250 : vector<8x1xf32> to vector<8x128xf32>
      %252 = arith.subf %242, %251 : vector<8x128xf32>
      %253 = vector.broadcast %4 : vector<1x128xf32> to vector<8x128xf32>
      %254 = arith.mulf %252, %253 : vector<8x128xf32>
      %255 = arith.mulf %254, %254 : vector<8x128xf32>
      %cst_106 = arith.constant dense<0.000000e+00> : vector<8xf32>
      %256 = vector.multi_reduction <add>, %255, %cst_106 [1] : vector<8x128xf32> to vector<8xf32>
      %257 = vector.shape_cast %256 : vector<8xf32> to vector<8x1xf32>
      %cst_107 = arith.constant 3.125000e-02 : f32
      %258 = vector.broadcast %cst_107 : f32 to vector<8x1xf32>
      %259 = arith.mulf %257, %258 : vector<8x1xf32>
      %cst_108 = arith.constant 9.99999974E-6 : f32
      %260 = vector.broadcast %cst_108 : f32 to vector<8x1xf32>
      %261 = arith.addf %259, %260 : vector<8x1xf32>
      %262 = math.rsqrt %261 : vector<8x1xf32>
      %263 = vector.broadcast %262 : vector<8x1xf32> to vector<8x128xf32>
      %264 = arith.mulf %254, %263 : vector<8x128xf32>
      %265 = vector.broadcast %243 : vector<1x128xf32> to vector<8x128xf32>
      %266 = arith.mulf %264, %265 : vector<8x128xf32>
      %267 = vector.broadcast %244 : vector<1x128xf32> to vector<8x128xf32>
      %268 = arith.addf %266, %267 : vector<8x128xf32>
      %c8 = arith.constant 8 : index
      %c0_109 = arith.constant 0 : index
      %269 = vector.load %arg23[%c8, %c0_109] : memref<16x128xf32, #tpu.memory_space<vmem>>, vector<8x128xf32>
      tpu.vector_store %arg23[%c8, %c0_109], %268 {strides = array<i32>} : memref<16x128xf32, #tpu.memory_space<vmem>>, vector<8x128xf32>,
    } else {
    }
    %c0 = arith.constant 0 : index
    %c0_1 = arith.constant 0 : index
    %8 = vector.load %arg23[%c0, %c0_1] : memref<16x128xf32, #tpu.memory_space<vmem>>, vector<16x128xf32>
    %c0_2 = arith.constant 0 : index
    %c0_3 = arith.constant 0 : index
    %c0_4 = arith.constant 0 : index
    %9 = vector.load %arg7[%c0_2, %c0_3, %c0_4] : memref<1x1x128xf32, #tpu.memory_space<vmem>>, vector<1x1x128xf32>
    %10 = vector.shape_cast %9 : vector<1x1x128xf32> to vector<1x128xf32>
    %c0_5 = arith.constant 0 : index
    %c0_6 = arith.constant 0 : index
    %c0_7 = arith.constant 0 : index
    %11 = vector.load %arg8[%c0_5, %c0_6, %c0_7] : memref<1x1x128xf32, #tpu.memory_space<vmem>>, vector<1x1x128xf32>
    %12 = vector.shape_cast %11 : vector<1x1x128xf32> to vector<1x128xf32>
    %13 = vector.broadcast %4 : vector<1x128xf32> to vector<16x128xf32>
    %14 = arith.mulf %8, %13 : vector<16x128xf32>
    %cst = arith.constant dense<0.000000e+00> : vector<16xf32>
    %15 = vector.multi_reduction <add>, %14, %cst [1] : vector<16x128xf32> to vector<16xf32>
    %16 = vector.shape_cast %15 : vector<16xf32> to vector<16x1xf32>
    %cst_8 = arith.constant 3.125000e-02 : f32
    %17 = vector.broadcast %cst_8 : f32 to vector<16x1xf32>
    %18 = arith.mulf %16, %17 : vector<16x1xf32>
    %19 = vector.broadcast %18 : vector<16x1xf32> to vector<16x128xf32>
    %20 = arith.subf %8, %19 : vector<16x128xf32>
    %21 = vector.broadcast %4 : vector<1x128xf32> to vector<16x128xf32>
    %22 = arith.mulf %20, %21 : vector<16x128xf32>
    %23 = arith.mulf %22, %22 : vector<16x128xf32>
    %cst_9 = arith.constant dense<0.000000e+00> : vector<16xf32>
    %24 = vector.multi_reduction <add>, %23, %cst_9 [1] : vector<16x128xf32> to vector<16xf32>
    %25 = vector.shape_cast %24 : vector<16xf32> to vector<16x1xf32>
    %cst_10 = arith.constant 3.125000e-02 : f32
    %26 = vector.broadcast %cst_10 : f32 to vector<16x1xf32>
    %27 = arith.mulf %25, %26 : vector<16x1xf32>
    %cst_11 = arith.constant 9.99999974E-6 : f32
    %28 = vector.broadcast %cst_11 : f32 to vector<16x1xf32>
    %29 = arith.addf %27, %28 : vector<16x1xf32>
    %30 = math.rsqrt %29 : vector<16x1xf32>
    %31 = vector.broadcast %30 : vector<16x1xf32> to vector<16x128xf32>
    %32 = arith.mulf %22, %31 : vector<16x128xf32>
    %33 = vector.broadcast %10 : vector<1x128xf32> to vector<16x128xf32>
    %34 = arith.mulf %32, %33 : vector<16x128xf32>
    %35 = vector.broadcast %12 : vector<1x128xf32> to vector<16x128xf32>
    %36 = arith.addf %34, %35 : vector<16x128xf32>
    %37 = arith.truncf %36 : vector<16x128xf32> to vector<16x128xbf16>
    %c0_12 = arith.constant 0 : index
    %c0_13 = arith.constant 0 : index
    %c0_14 = arith.constant 0 : index
    %38 = vector.load %arg9[%c0_12, %c0_13, %c0_14] : memref<1x128x384xbf16, #tpu.memory_space<vmem>>, vector<1x128x384xbf16>
    %39 = vector.shape_cast %38 : vector<1x128x384xbf16> to vector<128x384xbf16>
    %cst_15 = arith.constant dense<0.000000e+00> : vector<16x384xf32>
    %40 = tpu.matmul %37, %39, %cst_15 {dimension_numbers = #tpu.dot_dimension_numbers<[1], [0], [0], [1], [0, 0, 1, 1], [], []>} : vector<16x128xbf16>, vector<128x384xbf16>, vector<16x384xf32> -> vector<16x384xf32>
    %c0_16 = arith.constant 0 : index
    %c0_17 = arith.constant 0 : index
    %c0_18 = arith.constant 0 : index
    %41 = vector.load %arg10[%c0_16, %c0_17, %c0_18] : memref<1x1x384xf32, #tpu.memory_space<vmem>>, vector<1x1x384xf32>
    %42 = vector.shape_cast %41 : vector<1x1x384xf32> to vector<1x384xf32>
    %43 = vector.broadcast %42 : vector<1x384xf32> to vector<16x384xf32>
    %44 = arith.addf %40, %43 : vector<16x384xf32>
    %45 = tpu.iota {dimensions = array<i32: 1>} : vector<1x8xi32>
    %c5_i32 = arith.constant 5 : i32
    %46 = vector.broadcast %c5_i32 : i32 to vector<1x8xi32>
    %47 = arith.cmpi slt, %45, %46 : vector<1x8xi32>
    %cst_19 = arith.constant 0.000000e+00 : f32
    %cst_20 = arith.constant -1.000000e+09 : f32
    %48 = vector.broadcast %cst_19 : f32 to vector<1x8xf32>
    %49 = vector.broadcast %cst_20 : f32 to vector<1x8xf32>
    %50 = arith.select %47, %48, %49 : vector<1x8xi1>, vector<1x8xf32>
    %51 = vector.extract_strided_slice %44 {offsets = [0, 0], sizes = [8, 16], strides = [1, 1]} : vector<16x384xf32> to vector<8x16xf32>
    %52 = arith.truncf %51 : vector<8x16xf32> to vector<8x16xbf16>
    %53 = vector.extract_strided_slice %44 {offsets = [0, 128], sizes = [8, 16], strides = [1, 1]} : vector<16x384xf32> to vector<8x16xf32>
    %54 = arith.truncf %53 : vector<8x16xf32> to vector<8x16xbf16>
    %55 = vector.extract_strided_slice %44 {offsets = [0, 256], sizes = [8, 16], strides = [1, 1]} : vector<16x384xf32> to vector<8x16xf32>
    %56 = arith.truncf %55 : vector<8x16xf32> to vector<8x16xbf16>
    %cst_21 = arith.constant dense<0.000000e+00> : vector<8x8xf32>
    %57 = tpu.matmul %52, %54, %cst_21 {dimension_numbers = #tpu.dot_dimension_numbers<[1], [1], [0], [0], [0, 0, 1, 0], [], []>} : vector<8x16xbf16>, vector<8x16xbf16>, vector<8x8xf32> -> vector<8x8xf32>
    %58 = vector.broadcast %50 : vector<1x8xf32> to vector<8x8xf32>
    %59 = arith.addf %57, %58 : vector<8x8xf32>
    %cst_22 = arith.constant dense<0xFF800000> : vector<8xf32>
    %60 = vector.multi_reduction <maximumf>, %59, %cst_22 [1] : vector<8x8xf32> to vector<8xf32>
    %61 = vector.shape_cast %60 : vector<8xf32> to vector<8x1xf32>
    %62 = vector.broadcast %61 : vector<8x1xf32> to vector<8x8xf32>
    %63 = arith.subf %59, %62 : vector<8x8xf32>
    %64 = math.exp %63 : vector<8x8xf32>
    %cst_23 = arith.constant dense<0.000000e+00> : vector<8xf32>
    %65 = vector.multi_reduction <add>, %64, %cst_23 [1] : vector<8x8xf32> to vector<8xf32>
    %66 = vector.shape_cast %65 : vector<8xf32> to vector<8x1xf32>
    %67 = tpu.reciprocal %66 {approx = true} : vector<8x1xf32> -> vector<8x1xf32>
    %68 = vector.broadcast %67 : vector<8x1xf32> to vector<8x8xf32>
    %69 = arith.mulf %64, %68 : vector<8x8xf32>
    %70 = arith.truncf %69 : vector<8x8xf32> to vector<8x8xbf16>
    %cst_24 = arith.constant dense<0.000000e+00> : vector<8x16xf32>
    %71 = tpu.matmul %70, %56, %cst_24 {dimension_numbers = #tpu.dot_dimension_numbers<[1], [0], [0], [1], [0, 0, 1, 1], [], []>} : vector<8x8xbf16>, vector<8x16xbf16>, vector<8x16xf32> -> vector<8x16xf32>
    %72 = vector.extract_strided_slice %44 {offsets = [0, 16], sizes = [8, 16], strides = [1, 1]} : vector<16x384xf32> to vector<8x16xf32>
    %73 = arith.truncf %72 : vector<8x16xf32> to vector<8x16xbf16>
    %74 = vector.extract_strided_slice %44 {offsets = [0, 144], sizes = [8, 16], strides = [1, 1]} : vector<16x384xf32> to vector<8x16xf32>
    %75 = arith.truncf %74 : vector<8x16xf32> to vector<8x16xbf16>
    %76 = vector.extract_strided_slice %44 {offsets = [0, 272], sizes = [8, 16], strides = [1, 1]} : vector<16x384xf32> to vector<8x16xf32>
    %77 = arith.truncf %76 : vector<8x16xf32> to vector<8x16xbf16>
    %cst_25 = arith.constant dense<0.000000e+00> : vector<8x8xf32>
    %78 = tpu.matmul %73, %75, %cst_25 {dimension_numbers = #tpu.dot_dimension_numbers<[1], [1], [0], [0], [0, 0, 1, 0], [], []>} : vector<8x16xbf16>, vector<8x16xbf16>, vector<8x8xf32> -> vector<8x8xf32>
    %79 = vector.broadcast %50 : vector<1x8xf32> to vector<8x8xf32>
    %80 = arith.addf %78, %79 : vector<8x8xf32>
    %cst_26 = arith.constant dense<0xFF800000> : vector<8xf32>
    %81 = vector.multi_reduction <maximumf>, %80, %cst_26 [1] : vector<8x8xf32> to vector<8xf32>
    %82 = vector.shape_cast %81 : vector<8xf32> to vector<8x1xf32>
    %83 = vector.broadcast %82 : vector<8x1xf32> to vector<8x8xf32>
    %84 = arith.subf %80, %83 : vector<8x8xf32>
    %85 = math.exp %84 : vector<8x8xf32>
    %cst_27 = arith.constant dense<0.000000e+00> : vector<8xf32>
    %86 = vector.multi_reduction <add>, %85, %cst_27 [1] : vector<8x8xf32> to vector<8xf32>
    %87 = vector.shape_cast %86 : vector<8xf32> to vector<8x1xf32>
    %88 = tpu.reciprocal %87 {approx = true} : vector<8x1xf32> -> vector<8x1xf32>
    %89 = vector.broadcast %88 : vector<8x1xf32> to vector<8x8xf32>
    %90 = arith.mulf %85, %89 : vector<8x8xf32>
    %91 = arith.truncf %90 : vector<8x8xf32> to vector<8x8xbf16>
    %cst_28 = arith.constant dense<0.000000e+00> : vector<8x16xf32>
    %92 = tpu.matmul %91, %77, %cst_28 {dimension_numbers = #tpu.dot_dimension_numbers<[1], [0], [0], [1], [0, 0, 1, 1], [], []>} : vector<8x8xbf16>, vector<8x16xbf16>, vector<8x16xf32> -> vector<8x16xf32>
    %93 = tpu.concatenate %71, %92 in 1 : vector<8x16xf32>, vector<8x16xf32> -> vector<8x32xf32>
    %94 = vector.extract_strided_slice %44 {offsets = [8, 0], sizes = [8, 16], strides = [1, 1]} : vector<16x384xf32> to vector<8x16xf32>
    %95 = arith.truncf %94 : vector<8x16xf32> to vector<8x16xbf16>
    %96 = vector.extract_strided_slice %44 {offsets = [8, 128], sizes = [8, 16], strides = [1, 1]} : vector<16x384xf32> to vector<8x16xf32>
    %97 = arith.truncf %96 : vector<8x16xf32> to vector<8x16xbf16>
    %98 = vector.extract_strided_slice %44 {offsets = [8, 256], sizes = [8, 16], strides = [1, 1]} : vector<16x384xf32> to vector<8x16xf32>
    %99 = arith.truncf %98 : vector<8x16xf32> to vector<8x16xbf16>
    %cst_29 = arith.constant dense<0.000000e+00> : vector<8x8xf32>
    %100 = tpu.matmul %95, %97, %cst_29 {dimension_numbers = #tpu.dot_dimension_numbers<[1], [1], [0], [0], [0, 0, 1, 0], [], []>} : vector<8x16xbf16>, vector<8x16xbf16>, vector<8x8xf32> -> vector<8x8xf32>
    %101 = vector.broadcast %50 : vector<1x8xf32> to vector<8x8xf32>
    %102 = arith.addf %100, %101 : vector<8x8xf32>
    %cst_30 = arith.constant dense<0xFF800000> : vector<8xf32>
    %103 = vector.multi_reduction <maximumf>, %102, %cst_30 [1] : vector<8x8xf32> to vector<8xf32>
    %104 = vector.shape_cast %103 : vector<8xf32> to vector<8x1xf32>
    %105 = vector.broadcast %104 : vector<8x1xf32> to vector<8x8xf32>
    %106 = arith.subf %102, %105 : vector<8x8xf32>
    %107 = math.exp %106 : vector<8x8xf32>
    %cst_31 = arith.constant dense<0.000000e+00> : vector<8xf32>
    %108 = vector.multi_reduction <add>, %107, %cst_31 [1] : vector<8x8xf32> to vector<8xf32>
    %109 = vector.shape_cast %108 : vector<8xf32> to vector<8x1xf32>
    %110 = tpu.reciprocal %109 {approx = true} : vector<8x1xf32> -> vector<8x1xf32>
    %111 = vector.broadcast %110 : vector<8x1xf32> to vector<8x8xf32>
    %112 = arith.mulf %107, %111 : vector<8x8xf32>
    %113 = arith.truncf %112 : vector<8x8xf32> to vector<8x8xbf16>
    %cst_32 = arith.constant dense<0.000000e+00> : vector<8x16xf32>
    %114 = tpu.matmul %113, %99, %cst_32 {dimension_numbers = #tpu.dot_dimension_numbers<[1], [0], [0], [1], [0, 0, 1, 1], [], []>} : vector<8x8xbf16>, vector<8x16xbf16>, vector<8x16xf32> -> vector<8x16xf32>
    %115 = vector.extract_strided_slice %44 {offsets = [8, 16], sizes = [8, 16], strides = [1, 1]} : vector<16x384xf32> to vector<8x16xf32>
    %116 = arith.truncf %115 : vector<8x16xf32> to vector<8x16xbf16>
    %117 = vector.extract_strided_slice %44 {offsets = [8, 144], sizes = [8, 16], strides = [1, 1]} : vector<16x384xf32> to vector<8x16xf32>
    %118 = arith.truncf %117 : vector<8x16xf32> to vector<8x16xbf16>
    %119 = vector.extract_strided_slice %44 {offsets = [8, 272], sizes = [8, 16], strides = [1, 1]} : vector<16x384xf32> to vector<8x16xf32>
    %120 = arith.truncf %119 : vector<8x16xf32> to vector<8x16xbf16>
    %cst_33 = arith.constant dense<0.000000e+00> : vector<8x8xf32>
    %121 = tpu.matmul %116, %118, %cst_33 {dimension_numbers = #tpu.dot_dimension_numbers<[1], [1], [0], [0], [0, 0, 1, 0], [], []>} : vector<8x16xbf16>, vector<8x16xbf16>, vector<8x8xf32> -> vector<8x8xf32>
    %122 = vector.broadcast %50 : vector<1x8xf32> to vector<8x8xf32>
    %123 = arith.addf %121, %122 : vector<8x8xf32>
    %cst_34 = arith.constant dense<0xFF800000> : vector<8xf32>
    %124 = vector.multi_reduction <maximumf>, %123, %cst_34 [1] : vector<8x8xf32> to vector<8xf32>
    %125 = vector.shape_cast %124 : vector<8xf32> to vector<8x1xf32>
    %126 = vector.broadcast %125 : vector<8x1xf32> to vector<8x8xf32>
    %127 = arith.subf %123, %126 : vector<8x8xf32>
    %128 = math.exp %127 : vector<8x8xf32>
    %cst_35 = arith.constant dense<0.000000e+00> : vector<8xf32>
    %129 = vector.multi_reduction <add>, %128, %cst_35 [1] : vector<8x8xf32> to vector<8xf32>
    %130 = vector.shape_cast %129 : vector<8xf32> to vector<8x1xf32>
    %131 = tpu.reciprocal %130 {approx = true} : vector<8x1xf32> -> vector<8x1xf32>
    %132 = vector.broadcast %131 : vector<8x1xf32> to vector<8x8xf32>
    %133 = arith.mulf %128, %132 : vector<8x8xf32>
    %134 = arith.truncf %133 : vector<8x8xf32> to vector<8x8xbf16>
    %cst_36 = arith.constant dense<0.000000e+00> : vector<8x16xf32>
    %135 = tpu.matmul %134, %120, %cst_36 {dimension_numbers = #tpu.dot_dimension_numbers<[1], [0], [0], [1], [0, 0, 1, 1], [], []>} : vector<8x8xbf16>, vector<8x16xbf16>, vector<8x16xf32> -> vector<8x16xf32>
    %136 = tpu.concatenate %114, %135 in 1 : vector<8x16xf32>, vector<8x16xf32> -> vector<8x32xf32>
    %137 = tpu.concatenate %93, %136 in 0 : vector<8x32xf32>, vector<8x32xf32> -> vector<16x32xf32>
    %138 = arith.truncf %137 : vector<16x32xf32> to vector<16x32xbf16>
    %c0_37 = arith.constant 0 : index
    %c0_38 = arith.constant 0 : index
    %c0_39 = arith.constant 0 : index
    %139 = vector.load %arg11[%c0_37, %c0_38, %c0_39] : memref<1x32x128xbf16, #tpu.memory_space<vmem>>, vector<1x32x128xbf16>
    %140 = vector.shape_cast %139 : vector<1x32x128xbf16> to vector<32x128xbf16>
    %cst_40 = arith.constant dense<0.000000e+00> : vector<16x128xf32>
    %141 = tpu.matmul %138, %140, %cst_40 {dimension_numbers = #tpu.dot_dimension_numbers<[1], [0], [0], [1], [0, 0, 1, 1], [], []>} : vector<16x32xbf16>, vector<32x128xbf16>, vector<16x128xf32> -> vector<16x128xf32>
    %142 = arith.addf %8, %141 : vector<16x128xf32>
    %c0_41 = arith.constant 0 : index
    %c0_42 = arith.constant 0 : index
    %c0_43 = arith.constant 0 : index
    %143 = vector.load %arg12[%c0_41, %c0_42, %c0_43] : memref<1x1x128xf32, #tpu.memory_space<vmem>>, vector<1x1x128xf32>
    %144 = vector.shape_cast %143 : vector<1x1x128xf32> to vector<1x128xf32>
    %145 = vector.broadcast %144 : vector<1x128xf32> to vector<16x128xf32>
    %146 = arith.addf %142, %145 : vector<16x128xf32>
    %c0_44 = arith.constant 0 : index
    %c0_45 = arith.constant 0 : index
    %c0_46 = arith.constant 0 : index
    %147 = vector.load %arg13[%c0_44, %c0_45, %c0_46] : memref<1x1x128xf32, #tpu.memory_space<vmem>>, vector<1x1x128xf32>
    %148 = vector.shape_cast %147 : vector<1x1x128xf32> to vector<1x128xf32>
    %c0_47 = arith.constant 0 : index
    %c0_48 = arith.constant 0 : index
    %c0_49 = arith.constant 0 : index
    %149 = vector.load %arg14[%c0_47, %c0_48, %c0_49] : memref<1x1x128xf32, #tpu.memory_space<vmem>>, vector<1x1x128xf32>
    %150 = vector.shape_cast %149 : vector<1x1x128xf32> to vector<1x128xf32>
    %151 = vector.broadcast %4 : vector<1x128xf32> to vector<16x128xf32>
    %152 = arith.mulf %146, %151 : vector<16x128xf32>
    %cst_50 = arith.constant dense<0.000000e+00> : vector<16xf32>
    %153 = vector.multi_reduction <add>, %152, %cst_50 [1] : vector<16x128xf32> to vector<16xf32>
    %154 = vector.shape_cast %153 : vector<16xf32> to vector<16x1xf32>
    %cst_51 = arith.constant 3.125000e-02 : f32
    %155 = vector.broadcast %cst_51 : f32 to vector<16x1xf32>
    %156 = arith.mulf %154, %155 : vector<16x1xf32>
    %157 = vector.broadcast %156 : vector<16x1xf32> to vector<16x128xf32>
    %158 = arith.subf %146, %157 : vector<16x128xf32>
    %159 = vector.broadcast %4 : vector<1x128xf32> to vector<16x128xf32>
    %160 = arith.mulf %158, %159 : vector<16x128xf32>
    %161 = arith.mulf %160, %160 : vector<16x128xf32>
    %cst_52 = arith.constant dense<0.000000e+00> : vector<16xf32>
    %162 = vector.multi_reduction <add>, %161, %cst_52 [1] : vector<16x128xf32> to vector<16xf32>
    %163 = vector.shape_cast %162 : vector<16xf32> to vector<16x1xf32>
    %cst_53 = arith.constant 3.125000e-02 : f32
    %164 = vector.broadcast %cst_53 : f32 to vector<16x1xf32>
    %165 = arith.mulf %163, %164 : vector<16x1xf32>
    %cst_54 = arith.constant 9.99999974E-6 : f32
    %166 = vector.broadcast %cst_54 : f32 to vector<16x1xf32>
    %167 = arith.addf %165, %166 : vector<16x1xf32>
    %168 = math.rsqrt %167 : vector<16x1xf32>
    %169 = vector.broadcast %168 : vector<16x1xf32> to vector<16x128xf32>
    %170 = arith.mulf %160, %169 : vector<16x128xf32>
    %171 = vector.broadcast %148 : vector<1x128xf32> to vector<16x128xf32>
    %172 = arith.mulf %170, %171 : vector<16x128xf32>
    %173 = vector.broadcast %150 : vector<1x128xf32> to vector<16x128xf32>
    %174 = arith.addf %172, %173 : vector<16x128xf32>
    %175 = arith.truncf %174 : vector<16x128xf32> to vector<16x128xbf16>
    %c0_55 = arith.constant 0 : index
    %c0_56 = arith.constant 0 : index
    %c0_57 = arith.constant 0 : index
    %176 = vector.load %arg15[%c0_55, %c0_56, %c0_57] : memref<1x128x128xbf16, #tpu.memory_space<vmem>>, vector<1x128x128xbf16>
    %177 = vector.shape_cast %176 : vector<1x128x128xbf16> to vector<128x128xbf16>
    %cst_58 = arith.constant dense<0.000000e+00> : vector<16x128xf32>
    %178 = tpu.matmul %175, %177, %cst_58 {dimension_numbers = #tpu.dot_dimension_numbers<[1], [0], [0], [1], [0, 0, 1, 1], [], []>} : vector<16x128xbf16>, vector<128x128xbf16>, vector<16x128xf32> -> vector<16x128xf32>
    %c0_59 = arith.constant 0 : index
    %c0_60 = arith.constant 0 : index
    %c0_61 = arith.constant 0 : index
    %179 = vector.load %arg16[%c0_59, %c0_60, %c0_61] : memref<1x1x128xf32, #tpu.memory_space<vmem>>, vector<1x1x128xf32>
    %180 = vector.shape_cast %179 : vector<1x1x128xf32> to vector<1x128xf32>
    %181 = vector.broadcast %180 : vector<1x128xf32> to vector<16x128xf32>
    %182 = arith.addf %178, %181 : vector<16x128xf32>
    %cst_62 = arith.constant 1.702000e+00 : f32
    %183 = vector.broadcast %cst_62 : f32 to vector<16x128xf32>
    %184 = arith.mulf %183, %182 : vector<16x128xf32>
    %185 = arith.negf %184 : vector<16x128xf32>
    %186 = math.exp %185 : vector<16x128xf32>
    %cst_63 = arith.constant 1.000000e+00 : f32
    %187 = vector.broadcast %cst_63 : f32 to vector<16x128xf32>
    %188 = arith.addf %187, %186 : vector<16x128xf32>
    %189 = arith.divf %187, %188 : vector<16x128xf32>
    %190 = arith.mulf %182, %189 : vector<16x128xf32>
    %191 = arith.truncf %190 : vector<16x128xf32> to vector<16x128xbf16>
    %c0_64 = arith.constant 0 : index
    %c0_65 = arith.constant 0 : index
    %c0_66 = arith.constant 0 : index
    %192 = vector.load %arg17[%c0_64, %c0_65, %c0_66] : memref<1x128x128xbf16, #tpu.memory_space<vmem>>, vector<1x128x128xbf16>
    %193 = vector.shape_cast %192 : vector<1x128x128xbf16> to vector<128x128xbf16>
    %cst_67 = arith.constant dense<0.000000e+00> : vector<16x128xf32>
    %194 = tpu.matmul %191, %193, %cst_67 {dimension_numbers = #tpu.dot_dimension_numbers<[1], [0], [0], [1], [0, 0, 1, 1], [], []>} : vector<16x128xbf16>, vector<128x128xbf16>, vector<16x128xf32> -> vector<16x128xf32>
    %c0_68 = arith.constant 0 : index
    %c0_69 = arith.constant 0 : index
    %c0_70 = arith.constant 0 : index
    %195 = vector.load %arg18[%c0_68, %c0_69, %c0_70] : memref<1x1x128xf32, #tpu.memory_space<vmem>>, vector<1x1x128xf32>
    %196 = vector.shape_cast %195 : vector<1x1x128xf32> to vector<1x128xf32>
    %197 = vector.broadcast %196 : vector<1x128xf32> to vector<16x128xf32>
    %198 = arith.addf %194, %197 : vector<16x128xf32>
    %199 = arith.addf %146, %198 : vector<16x128xf32>
    %c0_71 = arith.constant 0 : index
    %c0_72 = arith.constant 0 : index
    %200 = vector.load %arg23[%c0_71, %c0_72] : memref<16x128xf32, #tpu.memory_space<vmem>>, vector<16x128xf32>
    tpu.vector_store %arg23[%c0_71, %c0_72], %199 {strides = array<i32>} : memref<16x128xf32, #tpu.memory_space<vmem>>, vector<16x128xf32>,
    %c1_i32 = arith.constant 1 : i32
    %201 = arith.cmpi eq, %arg1, %c1_i32 : i32
    %202 = arith.extui %201 : i1 to i32
    %c0_i32_73 = arith.constant 0 : i32
    %203 = arith.cmpi ne, %202, %c0_i32_73 : i32
    scf.if %203 {
      %204 = vector.extract_strided_slice %199 {offsets = [0, 0], sizes = [1, 128], strides = [1, 1]} : vector<16x128xf32> to vector<1x128xf32>
      %205 = vector.extract_strided_slice %199 {offsets = [8, 0], sizes = [1, 128], strides = [1, 1]} : vector<16x128xf32> to vector<1x128xf32>
      %206 = tpu.concatenate %204, %205 in 0 : vector<1x128xf32>, vector<1x128xf32> -> vector<2x128xf32>
      %c0_74 = arith.constant 0 : index
      %c0_75 = arith.constant 0 : index
      %207 = vector.load %arg19[%c0_74, %c0_75] : memref<1x128xf32, #tpu.memory_space<vmem>>, vector<1x128xf32>
      %c0_76 = arith.constant 0 : index
      %c0_77 = arith.constant 0 : index
      %208 = vector.load %arg20[%c0_76, %c0_77] : memref<1x128xf32, #tpu.memory_space<vmem>>, vector<1x128xf32>
      %209 = vector.broadcast %4 : vector<1x128xf32> to vector<2x128xf32>
      %210 = arith.mulf %206, %209 : vector<2x128xf32>
      %cst_78 = arith.constant dense<0.000000e+00> : vector<2xf32>
      %211 = vector.multi_reduction <add>, %210, %cst_78 [1] : vector<2x128xf32> to vector<2xf32>
      %212 = vector.shape_cast %211 : vector<2xf32> to vector<2x1xf32>
      %cst_79 = arith.constant 3.125000e-02 : f32
      %213 = vector.broadcast %cst_79 : f32 to vector<2x1xf32>
      %214 = arith.mulf %212, %213 : vector<2x1xf32>
      %215 = vector.broadcast %214 : vector<2x1xf32> to vector<2x128xf32>
      %216 = arith.subf %206, %215 : vector<2x128xf32>
      %217 = vector.broadcast %4 : vector<1x128xf32> to vector<2x128xf32>
      %218 = arith.mulf %216, %217 : vector<2x128xf32>
      %219 = arith.mulf %218, %218 : vector<2x128xf32>
      %cst_80 = arith.constant dense<0.000000e+00> : vector<2xf32>
      %220 = vector.multi_reduction <add>, %219, %cst_80 [1] : vector<2x128xf32> to vector<2xf32>
      %221 = vector.shape_cast %220 : vector<2xf32> to vector<2x1xf32>
      %cst_81 = arith.constant 3.125000e-02 : f32
      %222 = vector.broadcast %cst_81 : f32 to vector<2x1xf32>
      %223 = arith.mulf %221, %222 : vector<2x1xf32>
      %cst_82 = arith.constant 9.99999974E-6 : f32
      %224 = vector.broadcast %cst_82 : f32 to vector<2x1xf32>
      %225 = arith.addf %223, %224 : vector<2x1xf32>
      %226 = math.rsqrt %225 : vector<2x1xf32>
      %227 = vector.broadcast %226 : vector<2x1xf32> to vector<2x128xf32>
      %228 = arith.mulf %218, %227 : vector<2x128xf32>
      %229 = vector.broadcast %207 : vector<1x128xf32> to vector<2x128xf32>
      %230 = arith.mulf %228, %229 : vector<2x128xf32>
      %231 = vector.broadcast %208 : vector<1x128xf32> to vector<2x128xf32>
      %232 = arith.addf %230, %231 : vector<2x128xf32>
      %233 = arith.truncf %232 : vector<2x128xf32> to vector<2x128xbf16>
      %c0_83 = arith.constant 0 : index
      %c0_84 = arith.constant 0 : index
      %234 = vector.load %arg21[%c0_83, %c0_84] : memref<128x128xbf16, #tpu.memory_space<vmem>>, vector<128x128xbf16>
      %cst_85 = arith.constant dense<0.000000e+00> : vector<2x128xf32>
      %235 = tpu.matmul %233, %234, %cst_85 {dimension_numbers = #tpu.dot_dimension_numbers<[1], [0], [0], [1], [0, 0, 1, 1], [], []>} : vector<2x128xbf16>, vector<128x128xbf16>, vector<2x128xf32> -> vector<2x128xf32>
      %c0_86 = arith.constant 0 : index
      %c0_87 = arith.constant 0 : index
      %c0_88 = arith.constant 0 : index
      %236 = vector.load %arg22[%c0_86, %c0_87, %c0_88] : memref<1x2x128xf32, #tpu.memory_space<vmem>>, vector<1x2x128xf32>
      %237 = vector.shape_cast %236 : vector<1x2x128xf32> to vector<2x128xf32>
      %238 = vector.shape_cast %235 : vector<2x128xf32> to vector<1x2x128xf32>
      tpu.vector_store %arg22[%c0_86, %c0_87, %c0_88], %238 {strides = array<i32>} : memref<1x2x128xf32, #tpu.memory_space<vmem>>, vector<1x2x128xf32>,
    } else {
    }
    return
  }
  func.func @transform_0(%arg0: i32, %arg1: i32) -> (i32, i32, i32) {
    %c0_i32 = arith.constant 0 : i32
    %c0_i32_0 = arith.constant 0 : i32
    %c0_i32_1 = arith.constant 0 : i32
    return %arg0, %c0_i32, %c0_i32_0 : i32, i32, i32
  }
  func.func @transform_1(%arg0: i32, %arg1: i32) -> (i32, i32) {
    %c0_i32 = arith.constant 0 : i32
    %c0_i32_0 = arith.constant 0 : i32
    %c0_i32_1 = arith.constant 0 : i32
    return %c0_i32, %c0_i32_0 : i32, i32
  }
  func.func @transform_2(%arg0: i32, %arg1: i32) -> (i32, i32) {
    %c0_i32 = arith.constant 0 : i32
    %c0_i32_0 = arith.constant 0 : i32
    %c0_i32_1 = arith.constant 0 : i32
    return %c0_i32, %c0_i32_0 : i32, i32
  }
  func.func @transform_3(%arg0: i32, %arg1: i32) -> (i32, i32) {
    %c0_i32 = arith.constant 0 : i32
    %c0_i32_0 = arith.constant 0 : i32
    %c0_i32_1 = arith.constant 0 : i32
    return %c0_i32, %c0_i32_0 : i32, i32
  }
  func.func @transform_4(%arg0: i32, %arg1: i32) -> (i32, i32) {
    %c0_i32 = arith.constant 0 : i32
    %c0_i32_0 = arith.constant 0 : i32
    %c0_i32_1 = arith.constant 0 : i32
    return %c0_i32, %c0_i32_0 : i32, i32
  }
  func.func @transform_5(%arg0: i32, %arg1: i32) -> (i32, i32, i32) {
    %c0_i32 = arith.constant 0 : i32
    %c0_i32_0 = arith.constant 0 : i32
    %c0_i32_1 = arith.constant 0 : i32
    return %arg1, %c0_i32, %c0_i32_0 : i32, i32, i32
  }
  func.func @transform_6(%arg0: i32, %arg1: i32) -> (i32, i32, i32) {
    %c0_i32 = arith.constant 0 : i32
    %c0_i32_0 = arith.constant 0 : i32
    %c0_i32_1 = arith.constant 0 : i32
    return %arg1, %c0_i32, %c0_i32_0 : i32, i32, i32
  }
  func.func @transform_7(%arg0: i32, %arg1: i32) -> (i32, i32, i32) {
    %c0_i32 = arith.constant 0 : i32
    %c0_i32_0 = arith.constant 0 : i32
    %c0_i32_1 = arith.constant 0 : i32
    return %arg1, %c0_i32, %c0_i32_0 : i32, i32, i32
  }
  func.func @transform_8(%arg0: i32, %arg1: i32) -> (i32, i32, i32) {
    %c0_i32 = arith.constant 0 : i32
    %c0_i32_0 = arith.constant 0 : i32
    %c0_i32_1 = arith.constant 0 : i32
    return %arg1, %c0_i32, %c0_i32_0 : i32, i32, i32
  }
  func.func @transform_9(%arg0: i32, %arg1: i32) -> (i32, i32, i32) {
    %c0_i32 = arith.constant 0 : i32
    %c0_i32_0 = arith.constant 0 : i32
    %c0_i32_1 = arith.constant 0 : i32
    return %arg1, %c0_i32, %c0_i32_0 : i32, i32, i32
  }
  func.func @transform_10(%arg0: i32, %arg1: i32) -> (i32, i32, i32) {
    %c0_i32 = arith.constant 0 : i32
    %c0_i32_0 = arith.constant 0 : i32
    %c0_i32_1 = arith.constant 0 : i32
    return %arg1, %c0_i32, %c0_i32_0 : i32, i32, i32
  }
  func.func @transform_11(%arg0: i32, %arg1: i32) -> (i32, i32, i32) {
    %c0_i32 = arith.constant 0 : i32
    %c0_i32_0 = arith.constant 0 : i32
    %c0_i32_1 = arith.constant 0 : i32
    return %arg1, %c0_i32, %c0_i32_0 : i32, i32, i32
  }
  func.func @transform_12(%arg0: i32, %arg1: i32) -> (i32, i32, i32) {
    %c0_i32 = arith.constant 0 : i32
    %c0_i32_0 = arith.constant 0 : i32
    %c0_i32_1 = arith.constant 0 : i32
    return %arg1, %c0_i32, %c0_i32_0 : i32, i32, i32
  }
  func.func @transform_13(%arg0: i32, %arg1: i32) -> (i32, i32, i32) {
    %c0_i32 = arith.constant 0 : i32
    %c0_i32_0 = arith.constant 0 : i32
    %c0_i32_1 = arith.constant 0 : i32
    return %arg1, %c0_i32, %c0_i32_0 : i32, i32, i32
  }
  func.func @transform_14(%arg0: i32, %arg1: i32) -> (i32, i32, i32) {
    %c0_i32 = arith.constant 0 : i32
    %c0_i32_0 = arith.constant 0 : i32
    %c0_i32_1 = arith.constant 0 : i32
    return %arg1, %c0_i32, %c0_i32_0 : i32, i32, i32
  }
  func.func @transform_15(%arg0: i32, %arg1: i32) -> (i32, i32, i32) {
    %c0_i32 = arith.constant 0 : i32
    %c0_i32_0 = arith.constant 0 : i32
    %c0_i32_1 = arith.constant 0 : i32
    return %arg1, %c0_i32, %c0_i32_0 : i32, i32, i32
  }
  func.func @transform_16(%arg0: i32, %arg1: i32) -> (i32, i32, i32) {
    %c0_i32 = arith.constant 0 : i32
    %c0_i32_0 = arith.constant 0 : i32
    %c0_i32_1 = arith.constant 0 : i32
    return %arg1, %c0_i32, %c0_i32_0 : i32, i32, i32
  }
  func.func @transform_17(%arg0: i32, %arg1: i32) -> (i32, i32) {
    %c0_i32 = arith.constant 0 : i32
    %c0_i32_0 = arith.constant 0 : i32
    %c0_i32_1 = arith.constant 0 : i32
    return %c0_i32, %c0_i32_0 : i32, i32
  }
  func.func @transform_18(%arg0: i32, %arg1: i32) -> (i32, i32) {
    %c0_i32 = arith.constant 0 : i32
    %c0_i32_0 = arith.constant 0 : i32
    %c0_i32_1 = arith.constant 0 : i32
    return %c0_i32, %c0_i32_0 : i32, i32
  }
  func.func @transform_19(%arg0: i32, %arg1: i32) -> (i32, i32) {
    %c0_i32 = arith.constant 0 : i32
    %c0_i32_0 = arith.constant 0 : i32
    %c0_i32_1 = arith.constant 0 : i32
    return %c0_i32, %c0_i32_0 : i32, i32
  }
  func.func @transform_20(%arg0: i32, %arg1: i32) -> (i32, i32, i32) {
    %c0_i32 = arith.constant 0 : i32
    %c0_i32_0 = arith.constant 0 : i32
    %c0_i32_1 = arith.constant 0 : i32
    return %arg0, %c0_i32, %c0_i32_0 : i32, i32, i32
  }
}

</mosaic_0001>

<llo_original>
// kernel: clip_vision_forward.1
$region0: #{clip_vision_forward.1}
  #allocation0 [shape = 'u32[]', space=smem, size = 0x4, offset = 0x4, fixed_abs, tag = 'smem constant byte address 0x4 - core index']
  #allocation1 [shape = 'u32[144,128]{1,0:T(1,128)}', space=vmem, size = 0x12000, scoped, tag = 'internal scratch']
  #allocation2 [shape = 'f32[16,128]{1,0:T(8,128)}', space=vmem, size = 0x2000, scoped, tag = 'scratch operand']
  %s0 = inlined_call_operand.vmem [shape: bf16[4,8,256], index: 0, kind: input, shape index: {}]
  %s1 = inlined_call_operand.vmem [shape: f32[8,128], index: 1, kind: input, shape index: {}]
  %s2 = inlined_call_operand.vmem [shape: bf16[256,128], index: 2, kind: input, shape index: {}]
  %s3 = inlined_call_operand.vmem [shape: f32[1,128], index: 3, kind: input, shape index: {}]
  %s4 = inlined_call_operand.vmem [shape: f32[1,128], index: 4, kind: input, shape index: {}]
  %s5 = inlined_call_operand.vmem [shape: f32[2,1,128], index: 5, kind: input, shape index: {}]
  %s6 = inlined_call_operand.vmem [shape: f32[2,1,128], index: 6, kind: input, shape index: {}]
  %s7 = inlined_call_operand.vmem [shape: bf16[2,128,384], index: 7, kind: input, shape index: {}]
  %s8 = inlined_call_operand.vmem [shape: f32[2,1,384], index: 8, kind: input, shape index: {}]
  %s9 = inlined_call_operand.vmem [shape: bf16[2,32,128], index: 9, kind: input, shape index: {}]
  %s10 = inlined_call_operand.vmem [shape: f32[2,1,128], index: 10, kind: input, shape index: {}]
  %s11 = inlined_call_operand.vmem [shape: f32[2,1,128], index: 11, kind: input, shape index: {}]
  %s12 = inlined_call_operand.vmem [shape: f32[2,1,128], index: 12, kind: input, shape index: {}]
  %s13 = inlined_call_operand.vmem [shape: bf16[2,128,128], index: 13, kind: input, shape index: {}]
  %s14 = inlined_call_operand.vmem [shape: f32[2,1,128], index: 14, kind: input, shape index: {}]
  %s15 = inlined_call_operand.vmem [shape: bf16[2,128,128], index: 15, kind: input, shape index: {}]
  %s16 = inlined_call_operand.vmem [shape: f32[2,1,128], index: 16, kind: input, shape index: {}]
  %s17 = inlined_call_operand.vmem [shape: f32[1,128], index: 17, kind: input, shape index: {}]
  %s18 = inlined_call_operand.vmem [shape: f32[1,128], index: 18, kind: input, shape index: {}]
  %s19 = inlined_call_operand.vmem [shape: bf16[128,128], index: 19, kind: input, shape index: {}]
  %s20 = inlined_call_operand.hbm [shape: f32[2,2,128], index: 20, kind: output, shape index: {}]
  %s21 = sld [smem:[#allocation0]]
  $region121: #{clip_vision_forward.1} parent=0
    _
  %s23 = ssub.s32 1, %s21
  %s24 = scalar_select 0, %s23, %s21
  $region1: #{clip_vision_forward.1} parent=0
    #allocation3 [shape = 'u8[2048]{0}', space=vmem, size = 0x800, scoped, tag = 'output window, operand 0']
    #allocation4 [shape = 's32[2]{0}', space=sflag, size = 0x8, scoped, tag = 'scoped memory for clip_vision_forward.1']
    %25 = vsyncpa [#allocation4], 0
    %s26 = scalar_lea.sflag [#allocation4], 1
    %27 = vsyncpa %s26, 0
    loop: start=0, step=1, limit=6
    $region2: #{clip_vision_forward.1} parent=1 // loop_pre_header
      _
    $region3: #{clip_vision_forward.1} parent=1 // loop_header
      %s29 = sphi 0, %s33
      %p30 = scmp.ge.s32.totalorder %s29, 6
      %s36 = sphi 0, %s48
      %s37 = sphi 0, %s44
      %s38 = sphi 0, %s36
      %s39 = sphi 0, %s37
      %s40 = sphi 0, %s38
      %s41 = sphi 0, %s39
      %s51 = sphi 0, %s53
      %s54 = sphi 0, %s51
      %s55 = sphi 0, %s54
      %s71 = sphi 0, %s55
      %s75 = sphi 0, %s75
      %s77 = sphi 0, %s75
      %s78 = sphi 0, %s77
      %s92 = sphi 0, %s78
      %s96 = sphi 0, %s96
      %s98 = sphi 0, %s96
      %s99 = sphi 0, %s98
      %s113 = sphi 0, %s99
      %s117 = sphi 0, %s117
      %s119 = sphi 0, %s117
      %s120 = sphi 0, %s119
      %s134 = sphi 0, %s120
      %s138 = sphi 0, %s138
      %s140 = sphi 0, %s138
      %s141 = sphi 0, %s140
      %s155 = sphi 0, %s141
      %s161 = sphi 0, %s163
      %s164 = sphi 0, %s161
      %s165 = sphi 0, %s164
      %s181 = sphi 0, %s165
      %s187 = sphi 0, %s189
      %s190 = sphi 0, %s187
      %s191 = sphi 0, %s190
      %s207 = sphi 0, %s191
      %s213 = sphi 0, %s215
      %s216 = sphi 0, %s213
      %s217 = sphi 0, %s216
      %s233 = sphi 0, %s217
      %s239 = sphi 0, %s241
      %s242 = sphi 0, %s239
      %s243 = sphi 0, %s242
      %s259 = sphi 0, %s243
      %s265 = sphi 0, %s267
      %s268 = sphi 0, %s265
      %s269 = sphi 0, %s268
      %s285 = sphi 0, %s269
      %s291 = sphi 0, %s293
      %s294 = sphi 0, %s291
      %s295 = sphi 0, %s294
      %s311 = sphi 0, %s295
      %s317 = sphi 0, %s319
      %s320 = sphi 0, %s317
      %s321 = sphi 0, %s320
      %s337 = sphi 0, %s321
      %s343 = sphi 0, %s345
      %s346 = sphi 0, %s343
      %s347 = sphi 0, %s346
      %s363 = sphi 0, %s347
      %s369 = sphi 0, %s371
      %s372 = sphi 0, %s369
      %s373 = sphi 0, %s372
      %s389 = sphi 0, %s373
      %s395 = sphi 0, %s397
      %s398 = sphi 0, %s395
      %s399 = sphi 0, %s398
      %s415 = sphi 0, %s399
      %s421 = sphi 0, %s423
      %s424 = sphi 0, %s421
      %s425 = sphi 0, %s424
      %s441 = sphi 0, %s425
      %s447 = sphi 0, %s449
      %s450 = sphi 0, %s447
      %s451 = sphi 0, %s450
      %s467 = sphi 0, %s451
      %s471 = sphi 0, %s471
      %s473 = sphi 0, %s471
      %s474 = sphi 0, %s473
      %s488 = sphi 0, %s474
      %s492 = sphi 0, %s492
      %s494 = sphi 0, %s492
      %s495 = sphi 0, %s494
      %s509 = sphi 0, %s495
      %s513 = sphi 0, %s513
      %s515 = sphi 0, %s513
      %s516 = sphi 0, %s515
      %s530 = sphi 0, %s516
      %s536 = sphi 0, %s538
      %s539 = sphi 0, %s536
      %s540 = sphi 0, %s539
      %s556 = sphi 0, %s540
    $region4: #{clip_vision_forward.1} parent=1 // loop_header_branch
      %32 = sbr.rel (%p30) target = $region8
    $region5: #{clip_vision_forward.1} parent=1 // loop_body
      %s34 = ssub.s32 %s29, 1
      %s35 = ssub.s32 %s29, 2
      %s42 = sadd.s32 1, %s37
      %p43 = scmp.ge.s32.totalorder %s42, 2
      %s44 = scalar_select %p43, 0, %s42
      %s45 = sadd.s32 1, %s36
      %s46 = scalar_select %p43, %s45, %s36
      %p47 = scmp.ge.s32.totalorder %s46, 2
      %s48 = scalar_select %p47, 0, %s46
      %s49 = ssub.s32 %s36, %s48
      %p50 = scmp.eq.s32.totalorder %s49, 0
      %s52 = sadd.s32 %s51, 1
      %s53 = scalar_select %p50, %s51, %s52
      %p56 = pneg %p50
      %p57 = scmp.eq.s32.totalorder %s29, 3
      %p58 = por %p56, %p57
      %p59 = scmp.ne.s32.totalorder %s51, %s54
      %p60 = scmp.eq.s32.totalorder %s29, 0
      %p61 = por %p59, %p60
      %p62 = scmp.ne.s32.totalorder %s51, %s54
      %p63 = scmp.eq.s32.totalorder %s34, 3
      %p64 = por %p62, %p63
      %p65 = scmp.ne.s32.totalorder %s54, %s55
      %p66 = scmp.eq.s32.totalorder %s34, 0
      %p67 = por %p65, %p66
      %p68 = scmp.ne.s32.totalorder %s54, %s55
      %p69 = scmp.eq.s32.totalorder %s35, 3
      %p70 = por %p68, %p69
      %p72 = scmp.ne.s32.totalorder %s55, %s71
      %p73 = scmp.eq.s32.totalorder %s35, 0
      %p74 = por %p72, %p73
      %s76 = sadd.s32 %s75, 1
      %p79 = scmp.eq.s32.totalorder %s29, 3
      %p80 = scmp.ne.s32.totalorder %s75, %s77
      %p81 = scmp.eq.s32.totalorder %s29, 0
      %p82 = por %p80, %p81
      %p83 = scmp.ne.s32.totalorder %s75, %s77
      %p84 = scmp.eq.s32.totalorder %s34, 3
      %p85 = por %p83, %p84
      %p86 = scmp.ne.s32.totalorder %s77, %s78
      %p87 = scmp.eq.s32.totalorder %s34, 0
      %p88 = por %p86, %p87
      %p89 = scmp.ne.s32.totalorder %s77, %s78
      %p90 = scmp.eq.s32.totalorder %s35, 3
      %p91 = por %p89, %p90
      %p93 = scmp.ne.s32.totalorder %s78, %s92
      %p94 = scmp.eq.s32.totalorder %s35, 0
      %p95 = por %p93, %p94
      %s97 = sadd.s32 %s96, 1
      %p100 = scmp.eq.s32.totalorder %s29, 3
      %p101 = scmp.ne.s32.totalorder %s96, %s98
      %p102 = scmp.eq.s32.totalorder %s29, 0
      %p103 = por %p101, %p102
      %p104 = scmp.ne.s32.totalorder %s96, %s98
      %p105 = scmp.eq.s32.totalorder %s34, 3
      %p106 = por %p104, %p105
      %p107 = scmp.ne.s32.totalorder %s98, %s99
      %p108 = scmp.eq.s32.totalorder %s34, 0
      %p109 = por %p107, %p108
      %p110 = scmp.ne.s32.totalorder %s98, %s99
      %p111 = scmp.eq.s32.totalorder %s35, 3
      %p112 = por %p110, %p111
      %p114 = scmp.ne.s32.totalorder %s99, %s113
      %p115 = scmp.eq.s32.totalorder %s35, 0
      %p116 = por %p114, %p115
      %s118 = sadd.s32 %s117, 1
      %p121 = scmp.eq.s32.totalorder %s29, 3
      %p122 = scmp.ne.s32.totalorder %s117, %s119
      %p123 = scmp.eq.s32.totalorder %s29, 0
      %p124 = por %p122, %p123
      %p125 = scmp.ne.s32.totalorder %s117, %s119
      %p126 = scmp.eq.s32.totalorder %s34, 3
      %p127 = por %p125, %p126
      %p128 = scmp.ne.s32.totalorder %s119, %s120
      %p129 = scmp.eq.s32.totalorder %s34, 0
      %p130 = por %p128, %p129
      %p131 = scmp.ne.s32.totalorder %s119, %s120
      %p132 = scmp.eq.s32.totalorder %s35, 3
      %p133 = por %p131, %p132
      %p135 = scmp.ne.s32.totalorder %s120, %s134
      %p136 = scmp.eq.s32.totalorder %s35, 0
      %p137 = por %p135, %p136
      %s139 = sadd.s32 %s138, 1
      %p142 = scmp.eq.s32.totalorder %s29, 3
      %p143 = scmp.ne.s32.totalorder %s138, %s140
      %p144 = scmp.eq.s32.totalorder %s29, 0
      %p145 = por %p143, %p144
      %p146 = scmp.ne.s32.totalorder %s138, %s140
      %p147 = scmp.eq.s32.totalorder %s34, 3
      %p148 = por %p146, %p147
      %p149 = scmp.ne.s32.totalorder %s140, %s141
      %p150 = scmp.eq.s32.totalorder %s34, 0
      %p151 = por %p149, %p150
      %p152 = scmp.ne.s32.totalorder %s140, %s141
      %p153 = scmp.eq.s32.totalorder %s35, 3
      %p154 = por %p152, %p153
      %p156 = scmp.ne.s32.totalorder %s141, %s155
      %p157 = scmp.eq.s32.totalorder %s35, 0
      %p158 = por %p156, %p157
      %s159 = ssub.s32 %s37, %s44
      %p160 = scmp.eq.s32.totalorder %s159, 0
      %s162 = sadd.s32 %s161, 1
      %s163 = scalar_select %p160, %s161, %s162
      %p166 = pneg %p160
      %p167 = scmp.eq.s32.totalorder %s29, 3
      %p168 = por %p166, %p167
      %p169 = scmp.ne.s32.totalorder %s161, %s164
      %p170 = scmp.eq.s32.totalorder %s29, 0
      %p171 = por %p169, %p170
      %p172 = scmp.ne.s32.totalorder %s161, %s164
      %p173 = scmp.eq.s32.totalorder %s34, 3
      %p174 = por %p172, %p173
      %p175 = scmp.ne.s32.totalorder %s164, %s165
      %p176 = scmp.eq.s32.totalorder %s34, 0
      %p177 = por %p175, %p176
      %p178 = scmp.ne.s32.totalorder %s164, %s165
      %p179 = scmp.eq.s32.totalorder %s35, 3
      %p180 = por %p178, %p179
      %p182 = scmp.ne.s32.totalorder %s165, %s181
      %p183 = scmp.eq.s32.totalorder %s35, 0
      %p184 = por %p182, %p183
      %s185 = ssub.s32 %s37, %s44
      %p186 = scmp.eq.s32.totalorder %s185, 0
      %s188 = sadd.s32 %s187, 1
      %s189 = scalar_select %p186, %s187, %s188
      %p192 = pneg %p186
      %p193 = scmp.eq.s32.totalorder %s29, 3
      %p194 = por %p192, %p193
      %p195 = scmp.ne.s32.totalorder %s187, %s190
      %p196 = scmp.eq.s32.totalorder %s29, 0
      %p197 = por %p195, %p196
      %p198 = scmp.ne.s32.totalorder %s187, %s190
      %p199 = scmp.eq.s32.totalorder %s34, 3
      %p200 = por %p198, %p199
      %p201 = scmp.ne.s32.totalorder %s190, %s191
      %p202 = scmp.eq.s32.totalorder %s34, 0
      %p203 = por %p201, %p202
      %p204 = scmp.ne.s32.totalorder %s190, %s191
      %p205 = scmp.eq.s32.totalorder %s35, 3
      %p206 = por %p204, %p205
      %p208 = scmp.ne.s32.totalorder %s191, %s207
      %p209 = scmp.eq.s32.totalorder %s35, 0
      %p210 = por %p208, %p209
      %s211 = ssub.s32 %s37, %s44
      %p212 = scmp.eq.s32.totalorder %s211, 0
      %s214 = sadd.s32 %s213, 1
      %s215 = scalar_select %p212, %s213, %s214
      %p218 = pneg %p212
      %p219 = scmp.eq.s32.totalorder %s29, 3
      %p220 = por %p218, %p219
      %p221 = scmp.ne.s32.totalorder %s213, %s216
      %p222 = scmp.eq.s32.totalorder %s29, 0
      %p223 = por %p221, %p222
      %p224 = scmp.ne.s32.totalorder %s213, %s216
      %p225 = scmp.eq.s32.totalorder %s34, 3
      %p226 = por %p224, %p225
      %p227 = scmp.ne.s32.totalorder %s216, %s217
      %p228 = scmp.eq.s32.totalorder %s34, 0
      %p229 = por %p227, %p228
      %p230 = scmp.ne.s32.totalorder %s216, %s217
      %p231 = scmp.eq.s32.totalorder %s35, 3
      %p232 = por %p230, %p231
      %p234 = scmp.ne.s32.totalorder %s217, %s233
      %p235 = scmp.eq.s32.totalorder %s35, 0
      %p236 = por %p234, %p235
      %s237 = ssub.s32 %s37, %s44
      %p238 = scmp.eq.s32.totalorder %s237, 0
      %s240 = sadd.s32 %s239, 1
      %s241 = scalar_select %p238, %s239, %s240
      %p244 = pneg %p238
      %p245 = scmp.eq.s32.totalorder %s29, 3
      %p246 = por %p244, %p245
      %p247 = scmp.ne.s32.totalorder %s239, %s242
      %p248 = scmp.eq.s32.totalorder %s29, 0
      %p249 = por %p247, %p248
      %p250 = scmp.ne.s32.totalorder %s239, %s242
      %p251 = scmp.eq.s32.totalorder %s34, 3
      %p252 = por %p250, %p251
      %p253 = scmp.ne.s32.totalorder %s242, %s243
      %p254 = scmp.eq.s32.totalorder %s34, 0
      %p255 = por %p253, %p254
      %p256 = scmp.ne.s32.totalorder %s242, %s243
      %p257 = scmp.eq.s32.totalorder %s35, 3
      %p258 = por %p256, %p257
      %p260 = scmp.ne.s32.totalorder %s243, %s259
      %p261 = scmp.eq.s32.totalorder %s35, 0
      %p262 = por %p260, %p261
      %s263 = ssub.s32 %s37, %s44
      %p264 = scmp.eq.s32.totalorder %s263, 0
      %s266 = sadd.s32 %s265, 1
      %s267 = scalar_select %p264, %s265, %s266
      %p270 = pneg %p264
      %p271 = scmp.eq.s32.totalorder %s29, 3
      %p272 = por %p270, %p271
      %p273 = scmp.ne.s32.totalorder %s265, %s268
      %p274 = scmp.eq.s32.totalorder %s29, 0
      %p275 = por %p273, %p274
      %p276 = scmp.ne.s32.totalorder %s265, %s268
      %p277 = scmp.eq.s32.totalorder %s34, 3
      %p278 = por %p276, %p277
      %p279 = scmp.ne.s32.totalorder %s268, %s269
      %p280 = scmp.eq.s32.totalorder %s34, 0
      %p281 = por %p279, %p280
      %p282 = scmp.ne.s32.totalorder %s268, %s269
      %p283 = scmp.eq.s32.totalorder %s35, 3
      %p284 = por %p282, %p283
      %p286 = scmp.ne.s32.totalorder %s269, %s285
      %p287 = scmp.eq.s32.totalorder %s35, 0
      %p288 = por %p286, %p287
      %s289 = ssub.s32 %s37, %s44
      %p290 = scmp.eq.s32.totalorder %s289, 0
      %s292 = sadd.s32 %s291, 1
      %s293 = scalar_select %p290, %s291, %s292
      %p296 = pneg %p290
      %p297 = scmp.eq.s32.totalorder %s29, 3
      %p298 = por %p296, %p297
      %p299 = scmp.ne.s32.totalorder %s291, %s294
      %p300 = scmp.eq.s32.totalorder %s29, 0
      %p301 = por %p299, %p300
      %p302 = scmp.ne.s32.totalorder %s291, %s294
      %p303 = scmp.eq.s32.totalorder %s34, 3
      %p304 = por %p302, %p303
      %p305 = scmp.ne.s32.totalorder %s294, %s295
      %p306 = scmp.eq.s32.totalorder %s34, 0
      %p307 = por %p305, %p306
      %p308 = scmp.ne.s32.totalorder %s294, %s295
      %p309 = scmp.eq.s32.totalorder %s35, 3
      %p310 = por %p308, %p309
      %p312 = scmp.ne.s32.totalorder %s295, %s311
      %p313 = scmp.eq.s32.totalorder %s35, 0
      %p314 = por %p312, %p313
      %s315 = ssub.s32 %s37, %s44
      %p316 = scmp.eq.s32.totalorder %s315, 0
      %s318 = sadd.s32 %s317, 1
      %s319 = scalar_select %p316, %s317, %s318
      %p322 = pneg %p316
      %p323 = scmp.eq.s32.totalorder %s29, 3
      %p324 = por %p322, %p323
      %p325 = scmp.ne.s32.totalorder %s317, %s320
      %p326 = scmp.eq.s32.totalorder %s29, 0
      %p327 = por %p325, %p326
      %p328 = scmp.ne.s32.totalorder %s317, %s320
      %p329 = scmp.eq.s32.totalorder %s34, 3
      %p330 = por %p328, %p329
      %p331 = scmp.ne.s32.totalorder %s320, %s321
      %p332 = scmp.eq.s32.totalorder %s34, 0
      %p333 = por %p331, %p332
      %p334 = scmp.ne.s32.totalorder %s320, %s321
      %p335 = scmp.eq.s32.totalorder %s35, 3
      %p336 = por %p334, %p335
      %p338 = scmp.ne.s32.totalorder %s321, %s337
      %p339 = scmp.eq.s32.totalorder %s35, 0
      %p340 = por %p338, %p339
      %s341 = ssub.s32 %s37, %s44
      %p342 = scmp.eq.s32.totalorder %s341, 0
      %s344 = sadd.s32 %s343, 1
      %s345 = scalar_select %p342, %s343, %s344
      %p348 = pneg %p342
      %p349 = scmp.eq.s32.totalorder %s29, 3
      %p350 = por %p348, %p349
      %p351 = scmp.ne.s32.totalorder %s343, %s346
      %p352 = scmp.eq.s32.totalorder %s29, 0
      %p353 = por %p351, %p352
      %p354 = scmp.ne.s32.totalorder %s343, %s346
      %p355 = scmp.eq.s32.totalorder %s34, 3
      %p356 = por %p354, %p355
      %p357 = scmp.ne.s32.totalorder %s346, %s347
      %p358 = scmp.eq.s32.totalorder %s34, 0
      %p359 = por %p357, %p358
      %p360 = scmp.ne.s32.totalorder %s346, %s347
      %p361 = scmp.eq.s32.totalorder %s35, 3
      %p362 = por %p360, %p361
      %p364 = scmp.ne.s32.totalorder %s347, %s363
      %p365 = scmp.eq.s32.totalorder %s35, 0
      %p366 = por %p364, %p365
      %s367 = ssub.s32 %s37, %s44
      %p368 = scmp.eq.s32.totalorder %s367, 0
      %s370 = sadd.s32 %s369, 1
      %s371 = scalar_select %p368, %s369, %s370
      %p374 = pneg %p368
      %p375 = scmp.eq.s32.totalorder %s29, 3
      %p376 = por %p374, %p375
      %p377 = scmp.ne.s32.totalorder %s369, %s372
      %p378 = scmp.eq.s32.totalorder %s29, 0
      %p379 = por %p377, %p378
      %p380 = scmp.ne.s32.totalorder %s369, %s372
      %p381 = scmp.eq.s32.totalorder %s34, 3
      %p382 = por %p380, %p381
      %p383 = scmp.ne.s32.totalorder %s372, %s373
      %p384 = scmp.eq.s32.totalorder %s34, 0
      %p385 = por %p383, %p384
      %p386 = scmp.ne.s32.totalorder %s372, %s373
      %p387 = scmp.eq.s32.totalorder %s35, 3
      %p388 = por %p386, %p387
      %p390 = scmp.ne.s32.totalorder %s373, %s389
      %p391 = scmp.eq.s32.totalorder %s35, 0
      %p392 = por %p390, %p391
      %s393 = ssub.s32 %s37, %s44
      %p394 = scmp.eq.s32.totalorder %s393, 0
      %s396 = sadd.s32 %s395, 1
      %s397 = scalar_select %p394, %s395, %s396
      %p400 = pneg %p394
      %p401 = scmp.eq.s32.totalorder %s29, 3
      %p402 = por %p400, %p401
      %p403 = scmp.ne.s32.totalorder %s395, %s398
      %p404 = scmp.eq.s32.totalorder %s29, 0
      %p405 = por %p403, %p404
      %p406 = scmp.ne.s32.totalorder %s395, %s398
      %p407 = scmp.eq.s32.totalorder %s34, 3
      %p408 = por %p406, %p407
      %p409 = scmp.ne.s32.totalorder %s398, %s399
      %p410 = scmp.eq.s32.totalorder %s34, 0
      %p411 = por %p409, %p410
      %p412 = scmp.ne.s32.totalorder %s398, %s399
      %p413 = scmp.eq.s32.totalorder %s35, 3
      %p414 = por %p412, %p413
      %p416 = scmp.ne.s32.totalorder %s399, %s415
      %p417 = scmp.eq.s32.totalorder %s35, 0
      %p418 = por %p416, %p417
      %s419 = ssub.s32 %s37, %s44
      %p420 = scmp.eq.s32.totalorder %s419, 0
      %s422 = sadd.s32 %s421, 1
      %s423 = scalar_select %p420, %s421, %s422
      %p426 = pneg %p420
      %p427 = scmp.eq.s32.totalorder %s29, 3
      %p428 = por %p426, %p427
      %p429 = scmp.ne.s32.totalorder %s421, %s424
      %p430 = scmp.eq.s32.totalorder %s29, 0
      %p431 = por %p429, %p430
      %p432 = scmp.ne.s32.totalorder %s421, %s424
      %p433 = scmp.eq.s32.totalorder %s34, 3
      %p434 = por %p432, %p433
      %p435 = scmp.ne.s32.totalorder %s424, %s425
      %p436 = scmp.eq.s32.totalorder %s34, 0
      %p437 = por %p435, %p436
      %p438 = scmp.ne.s32.totalorder %s424, %s425
      %p439 = scmp.eq.s32.totalorder %s35, 3
      %p440 = por %p438, %p439
      %p442 = scmp.ne.s32.totalorder %s425, %s441
      %p443 = scmp.eq.s32.totalorder %s35, 0
      %p444 = por %p442, %p443
      %s445 = ssub.s32 %s37, %s44
      %p446 = scmp.eq.s32.totalorder %s445, 0
      %s448 = sadd.s32 %s447, 1
      %s449 = scalar_select %p446, %s447, %s448
      %p452 = pneg %p446
      %p453 = scmp.eq.s32.totalorder %s29, 3
      %p454 = por %p452, %p453
      %p455 = scmp.ne.s32.totalorder %s447, %s450
      %p456 = scmp.eq.s32.totalorder %s29, 0
      %p457 = por %p455, %p456
      %p458 = scmp.ne.s32.totalorder %s447, %s450
      %p459 = scmp.eq.s32.totalorder %s34, 3
      %p460 = por %p458, %p459
      %p461 = scmp.ne.s32.totalorder %s450, %s451
      %p462 = scmp.eq.s32.totalorder %s34, 0
      %p463 = por %p461, %p462
      %p464 = scmp.ne.s32.totalorder %s450, %s451
      %p465 = scmp.eq.s32.totalorder %s35, 3
      %p466 = por %p464, %p465
      %p468 = scmp.ne.s32.totalorder %s451, %s467
      %p469 = scmp.eq.s32.totalorder %s35, 0
      %p470 = por %p468, %p469
      %s472 = sadd.s32 %s471, 1
      %p475 = scmp.eq.s32.totalorder %s29, 3
      %p476 = scmp.ne.s32.totalorder %s471, %s473
      %p477 = scmp.eq.s32.totalorder %s29, 0
      %p478 = por %p476, %p477
      %p479 = scmp.ne.s32.totalorder %s471, %s473
      %p480 = scmp.eq.s32.totalorder %s34, 3
      %p481 = por %p479, %p480
      %p482 = scmp.ne.s32.totalorder %s473, %s474
      %p483 = scmp.eq.s32.totalorder %s34, 0
      %p484 = por %p482, %p483
      %p485 = scmp.ne.s32.totalorder %s473, %s474
      %p486 = scmp.eq.s32.totalorder %s35, 3
      %p487 = por %p485, %p486
      %p489 = scmp.ne.s32.totalorder %s474, %s488
      %p490 = scmp.eq.s32.totalorder %s35, 0
      %p491 = por %p489, %p490
      %s493 = sadd.s32 %s492, 1
      %p496 = scmp.eq.s32.totalorder %s29, 3
      %p497 = scmp.ne.s32.totalorder %s492, %s494
      %p498 = scmp.eq.s32.totalorder %s29, 0
      %p499 = por %p497, %p498
      %p500 = scmp.ne.s32.totalorder %s492, %s494
      %p501 = scmp.eq.s32.totalorder %s34, 3
      %p502 = por %p500, %p501
      %p503 = scmp.ne.s32.totalorder %s494, %s495
      %p504 = scmp.eq.s32.totalorder %s34, 0
      %p505 = por %p503, %p504
      %p506 = scmp.ne.s32.totalorder %s494, %s495
      %p507 = scmp.eq.s32.totalorder %s35, 3
      %p508 = por %p506, %p507
      %p510 = scmp.ne.s32.totalorder %s495, %s509
      %p511 = scmp.eq.s32.totalorder %s35, 0
      %p512 = por %p510, %p511
      %s514 = sadd.s32 %s513, 1
      %p517 = scmp.eq.s32.totalorder %s29, 3
      %p518 = scmp.ne.s32.totalorder %s513, %s515
      %p519 = scmp.eq.s32.totalorder %s29, 0
      %p520 = por %p518, %p519
      %p521 = scmp.ne.s32.totalorder %s513, %s515
      %p522 = scmp.eq.s32.totalorder %s34, 3
      %p523 = por %p521, %p522
      %p524 = scmp.ne.s32.totalorder %s515, %s516
      %p525 = scmp.eq.s32.totalorder %s34, 0
      %p526 = por %p524, %p525
      %p527 = scmp.ne.s32.totalorder %s515, %s516
      %p528 = scmp.eq.s32.totalorder %s35, 3
      %p529 = por %p527, %p528
      %p531 = scmp.ne.s32.totalorder %s516, %s530
      %p532 = scmp.eq.s32.totalorder %s35, 0
      %p533 = por %p531, %p532
      %s534 = ssub.s32 %s36, %s48
      %p535 = scmp.eq.s32.totalorder %s534, 0
      %s537 = sadd.s32 %s536, 1
      %s538 = scalar_select %p535, %s536, %s537
      %p541 = pneg %p535
      %p542 = scmp.eq.s32.totalorder %s29, 3
      %p543 = por %p541, %p542
      %p544 = scmp.ne.s32.totalorder %s536, %s539
      %p545 = scmp.eq.s32.totalorder %s29, 0
      %p546 = por %p544, %p545
      %p547 = scmp.ne.s32.totalorder %s536, %s539
      %p548 = scmp.eq.s32.totalorder %s34, 3
      %p549 = por %p547, %p548
      %p550 = scmp.ne.s32.totalorder %s539, %s540
      %p551 = scmp.eq.s32.totalorder %s34, 0
      %p552 = por %p550, %p551
      %p553 = scmp.ne.s32.totalorder %s539, %s540
      %p554 = scmp.eq.s32.totalorder %s35, 3
      %p555 = por %p553, %p554
      %p557 = scmp.ne.s32.totalorder %s540, %s556
      %p558 = scmp.eq.s32.totalorder %s35, 0
      %p559 = por %p557, %p558
      %p560 = scmp.le.s32.totalorder 1, %s29
      %p561 = scmp.lt.s32.totalorder %s29, 5
      %p562 = pnand %p560, %p561
      %p563 = pneg %p562
      // Predicated region
      $region9: #{clip_vision_forward.1} parent=5 // pred_check
        _
      $region10: #{clip_vision_forward.1} parent=5 // pred_check_branch
        %565 = sbr.rel (%p562) target = $region12
      $region11: #{clip_vision_forward.1} parent=5 // pred_region
        %s566 = ssub.s32 %s29, 1
        // Predicated region
        $region13: #{clip_vision_forward.1} parent=11 // pred_check
          %p567 = pneg %p88
        $region14: #{clip_vision_forward.1} parent=11 // pred_check_branch
          %569 = sbr.rel (%p567) target = $region16
        $region15: #{clip_vision_forward.1} parent=11 // pred_region
          _
        $region16: #{clip_vision_forward.1} parent=11 // pred_fallthru
          _
        // Predicated region
        $region17: #{clip_vision_forward.1} parent=11 // pred_check
          %p570 = pneg %p109
        $region18: #{clip_vision_forward.1} parent=11 // pred_check_branch
          %572 = sbr.rel (%p570) target = $region20
        $region19: #{clip_vision_forward.1} parent=11 // pred_region
          _
        $region20: #{clip_vision_forward.1} parent=11 // pred_fallthru
          _
        // Predicated region
        $region21: #{clip_vision_forward.1} parent=11 // pred_check
          %p573 = pneg %p130
        $region22: #{clip_vision_forward.1} parent=11 // pred_check_branch
          %575 = sbr.rel (%p573) target = $region24
        $region23: #{clip_vision_forward.1} parent=11 // pred_region
          _
        $region24: #{clip_vision_forward.1} parent=11 // pred_fallthru
          _
        // Predicated region
        $region25: #{clip_vision_forward.1} parent=11 // pred_check
          %p576 = pneg %p151
        $region26: #{clip_vision_forward.1} parent=11 // pred_check_branch
          %578 = sbr.rel (%p576) target = $region28
        $region27: #{clip_vision_forward.1} parent=11 // pred_region
          _
        $region28: #{clip_vision_forward.1} parent=11 // pred_fallthru
          _
        // Predicated region
        $region29: #{clip_vision_forward.1} parent=11 // pred_check
          %p579 = pneg %p484
        $region30: #{clip_vision_forward.1} parent=11 // pred_check_branch
          %581 = sbr.rel (%p579) target = $region32
        $region31: #{clip_vision_forward.1} parent=11 // pred_region
          _
        $region32: #{clip_vision_forward.1} parent=11 // pred_fallthru
          _
        // Predicated region
        $region33: #{clip_vision_forward.1} parent=11 // pred_check
          %p582 = pneg %p505
        $region34: #{clip_vision_forward.1} parent=11 // pred_check_branch
          %584 = sbr.rel (%p582) target = $region36
        $region35: #{clip_vision_forward.1} parent=11 // pred_region
          _
        $region36: #{clip_vision_forward.1} parent=11 // pred_fallthru
          _
        // Predicated region
        $region37: #{clip_vision_forward.1} parent=11 // pred_check
          %p585 = pneg %p526
        $region38: #{clip_vision_forward.1} parent=11 // pred_check_branch
          %587 = sbr.rel (%p585) target = $region40
        $region39: #{clip_vision_forward.1} parent=11 // pred_region
          _
        $region40: #{clip_vision_forward.1} parent=11 // pred_fallthru
          _
      $region12: #{clip_vision_forward.1} parent=5 // pred_fallthru
        _
      %p588 = scmp.lt.s32.totalorder %s29, 4
      // Predicated region
      $region41: #{clip_vision_forward.1} parent=5 // pred_check
        %p589 = pneg %p588
      $region42: #{clip_vision_forward.1} parent=5 // pred_check_branch
        %591 = sbr.rel (%p589) target = $region44
      $region43: #{clip_vision_forward.1} parent=5 // pred_region
        // Predicated region
        $region45: #{clip_vision_forward.1} parent=43 // pred_check
          %p592 = pneg %p61
        $region46: #{clip_vision_forward.1} parent=43 // pred_check_branch
          %594 = sbr.rel (%p592) target = $region48
        $region47: #{clip_vision_forward.1} parent=43 // pred_region
          %s595 = smul.u32 2, %s36
          %p596 = scmp.lt.s32.totalorder %s595, 3
          %s597 = scalar_select %p596, %s595, 3
          %s598 = smul.addr %s597, 2
          %s599 = smul.addr %s598, 4
          %s600 = scalar_lea.vmem %s0, %s599
          %s601 = smul.u32 2, %s36
        $region48: #{clip_vision_forward.1} parent=43 // pred_fallthru
          _
        // Predicated region
        $region49: #{clip_vision_forward.1} parent=43 // pred_check
          %p602 = pneg %p171
        $region50: #{clip_vision_forward.1} parent=43 // pred_check_branch
          %604 = sbr.rel (%p602) target = $region52
        $region51: #{clip_vision_forward.1} parent=43 // pred_region
          %p605 = scmp.lt.s32.totalorder %s37, 1
          %s606 = scalar_select %p605, %s37, 1
          %s607 = scalar_lea.vmem %s5, %s606
        $region52: #{clip_vision_forward.1} parent=43 // pred_fallthru
          _
        // Predicated region
        $region53: #{clip_vision_forward.1} parent=43 // pred_check
          %p608 = pneg %p197
        $region54: #{clip_vision_forward.1} parent=43 // pred_check_branch
          %610 = sbr.rel (%p608) target = $region56
        $region55: #{clip_vision_forward.1} parent=43 // pred_region
          %p611 = scmp.lt.s32.totalorder %s37, 1
          %s612 = scalar_select %p611, %s37, 1
          %s613 = scalar_lea.vmem %s6, %s612
        $region56: #{clip_vision_forward.1} parent=43 // pred_fallthru
          _
        // Predicated region
        $region57: #{clip_vision_forward.1} parent=43 // pred_check
          %p614 = pneg %p223
        $region58: #{clip_vision_forward.1} parent=43 // pred_check_branch
          %616 = sbr.rel (%p614) target = $region60
        $region59: #{clip_vision_forward.1} parent=43 // pred_region
          %p617 = scmp.lt.s32.totalorder %s37, 1
          %s618 = scalar_select %p617, %s37, 1
          %s619 = smul.addr %s618, 48
          %s620 = smul.addr %s619, 4
          %s621 = scalar_lea.vmem %s7, %s620
        $region60: #{clip_vision_forward.1} parent=43 // pred_fallthru
          _
        // Predicated region
        $region61: #{clip_vision_forward.1} parent=43 // pred_check
          %p622 = pneg %p249
        $region62: #{clip_vision_forward.1} parent=43 // pred_check_branch
          %624 = sbr.rel (%p622) target = $region64
        $region63: #{clip_vision_forward.1} parent=43 // pred_region
          %p625 = scmp.lt.s32.totalorder %s37, 1
          %s626 = scalar_select %p625, %s37, 1
          %s627 = smul.addr %s626, 3
          %s628 = scalar_lea.vmem %s8, %s627
        $region64: #{clip_vision_forward.1} parent=43 // pred_fallthru
          _
        // Predicated region
        $region65: #{clip_vision_forward.1} parent=43 // pred_check
          %p629 = pneg %p275
        $region66: #{clip_vision_forward.1} parent=43 // pred_check_branch
          %631 = sbr.rel (%p629) target = $region68
        $region67: #{clip_vision_forward.1} parent=43 // pred_region
          %p632 = scmp.lt.s32.totalorder %s37, 1
          %s633 = scalar_select %p632, %s37, 1
          %s634 = smul.addr %s633, 4
          %s635 = smul.addr %s634, 4
          %s636 = scalar_lea.vmem %s9, %s635
        $region68: #{clip_vision_forward.1} parent=43 // pred_fallthru
          _
        // Predicated region
        $region69: #{clip_vision_forward.1} parent=43 // pred_check
          %p637 = pneg %p301
        $region70: #{clip_vision_forward.1} parent=43 // pred_check_branch
          %639 = sbr.rel (%p637) target = $region72
        $region71: #{clip_vision_forward.1} parent=43 // pred_region
          %p640 = scmp.lt.s32.totalorder %s37, 1
          %s641 = scalar_select %p640, %s37, 1
          %s642 = scalar_lea.vmem %s10, %s641
        $region72: #{clip_vision_forward.1} parent=43 // pred_fallthru
          _
        // Predicated region
        $region73: #{clip_vision_forward.1} parent=43 // pred_check
          %p643 = pneg %p327
        $region74: #{clip_vision_forward.1} parent=43 // pred_check_branch
          %645 = sbr.rel (%p643) target = $region76
        $region75: #{clip_vision_forward.1} parent=43 // pred_region
          %p646 = scmp.lt.s32.totalorder %s37, 1
          %s647 = scalar_select %p646, %s37, 1
          %s648 = scalar_lea.vmem %s11, %s647
        $region76: #{clip_vision_forward.1} parent=43 // pred_fallthru
          _
        // Predicated region
        $region77: #{clip_vision_forward.1} parent=43 // pred_check
          %p649 = pneg %p353
        $region78: #{clip_vision_forward.1} parent=43 // pred_check_branch
          %651 = sbr.rel (%p649) target = $region80
        $region79: #{clip_vision_forward.1} parent=43 // pred_region
          %p652 = scmp.lt.s32.totalorder %s37, 1
          %s653 = scalar_select %p652, %s37, 1
          %s654 = scalar_lea.vmem %s12, %s653
        $region80: #{clip_vision_forward.1} parent=43 // pred_fallthru
          _
        // Predicated region
        $region81: #{clip_vision_forward.1} parent=43 // pred_check
          %p655 = pneg %p379
        $region82: #{clip_vision_forward.1} parent=43 // pred_check_branch
          %657 = sbr.rel (%p655) target = $region84
        $region83: #{clip_vision_forward.1} parent=43 // pred_region
          %p658 = scmp.lt.s32.totalorder %s37, 1
          %s659 = scalar_select %p658, %s37, 1
          %s660 = smul.addr %s659, 16
          %s661 = smul.addr %s660, 4
          %s662 = scalar_lea.vmem %s13, %s661
        $region84: #{clip_vision_forward.1} parent=43 // pred_fallthru
          _
        // Predicated region
        $region85: #{clip_vision_forward.1} parent=43 // pred_check
          %p663 = pneg %p405
        $region86: #{clip_vision_forward.1} parent=43 // pred_check_branch
          %665 = sbr.rel (%p663) target = $region88
        $region87: #{clip_vision_forward.1} parent=43 // pred_region
          %p666 = scmp.lt.s32.totalorder %s37, 1
          %s667 = scalar_select %p666, %s37, 1
          %s668 = scalar_lea.vmem %s14, %s667
        $region88: #{clip_vision_forward.1} parent=43 // pred_fallthru
          _
        // Predicated region
        $region89: #{clip_vision_forward.1} parent=43 // pred_check
          %p669 = pneg %p431
        $region90: #{clip_vision_forward.1} parent=43 // pred_check_branch
          %671 = sbr.rel (%p669) target = $region92
        $region91: #{clip_vision_forward.1} parent=43 // pred_region
          %p672 = scmp.lt.s32.totalorder %s37, 1
          %s673 = scalar_select %p672, %s37, 1
          %s674 = smul.addr %s673, 16
          %s675 = smul.addr %s674, 4
          %s676 = scalar_lea.vmem %s15, %s675
        $region92: #{clip_vision_forward.1} parent=43 // pred_fallthru
          _
        // Predicated region
        $region93: #{clip_vision_forward.1} parent=43 // pred_check
          %p677 = pneg %p457
        $region94: #{clip_vision_forward.1} parent=43 // pred_check_branch
          %679 = sbr.rel (%p677) target = $region96
        $region95: #{clip_vision_forward.1} parent=43 // pred_region
          %p680 = scmp.lt.s32.totalorder %s37, 1
          %s681 = scalar_select %p680, %s37, 1
          %s682 = scalar_lea.vmem %s16, %s681
        $region96: #{clip_vision_forward.1} parent=43 // pred_fallthru
          _
      $region44: #{clip_vision_forward.1} parent=5 // pred_fallthru
        _
      %p683 = scmp.le.s32.totalorder 1, %s29
      %p684 = scmp.lt.s32.totalorder %s29, 5
      %p685 = pnand %p683, %p684
      %p686 = pneg %p685
      // Predicated region
      $region97: #{clip_vision_forward.1} parent=5 // pred_check
        _
      $region98: #{clip_vision_forward.1} parent=5 // pred_check_branch
        %688 = sbr.rel (%p685) target = $region100
      $region99: #{clip_vision_forward.1} parent=5 // pred_region
        %s689 = ssub.s32 %s29, 1
        %s690 = smul.u32 2, %s38
        %p691 = scmp.lt.s32.totalorder %s690, 3
        %s692 = scalar_select %p691, %s690, 3
        %s693 = smul.addr %s692, 2
        %s694 = smul.addr %s693, 4
        %s695 = scalar_lea.vmem %s0, %s694
        %p696 = pneg %p67
        %p697 = pneg %p64
        %p698 = pneg %p88
        %p699 = pneg %p85
        %p700 = pneg %p109
        %p701 = pneg %p106
        %p702 = pneg %p130
        %p703 = pneg %p127
        %p704 = pneg %p151
        %p705 = pneg %p148
        %p706 = scmp.lt.s32.totalorder %s39, 1
        %s707 = scalar_select %p706, %s39, 1
        %s708 = scalar_lea.vmem %s5, %s707
        %p709 = pneg %p177
        %p710 = pneg %p174
        %p711 = scmp.lt.s32.totalorder %s39, 1
        %s712 = scalar_select %p711, %s39, 1
        %s713 = scalar_lea.vmem %s6, %s712
        %p714 = pneg %p203
        %p715 = pneg %p200
        %p716 = scmp.lt.s32.totalorder %s39, 1
        %s717 = scalar_select %p716, %s39, 1
        %s718 = smul.addr %s717, 48
        %s719 = smul.addr %s718, 4
        %s720 = scalar_lea.vmem %s7, %s719
        %p721 = pneg %p229
        %p722 = pneg %p226
        %p723 = scmp.lt.s32.totalorder %s39, 1
        %s724 = scalar_select %p723, %s39, 1
        %s725 = smul.addr %s724, 3
        %s726 = scalar_lea.vmem %s8, %s725
        %p727 = pneg %p255
        %p728 = pneg %p252
        %p729 = scmp.lt.s32.totalorder %s39, 1
        %s730 = scalar_select %p729, %s39, 1
        %s731 = smul.addr %s730, 4
        %s732 = smul.addr %s731, 4
        %s733 = scalar_lea.vmem %s9, %s732
        %p734 = pneg %p281
        %p735 = pneg %p278
        %p736 = scmp.lt.s32.totalorder %s39, 1
        %s737 = scalar_select %p736, %s39, 1
        %s738 = scalar_lea.vmem %s10, %s737
        %p739 = pneg %p307
        %p740 = pneg %p304
        %p741 = scmp.lt.s32.totalorder %s39, 1
        %s742 = scalar_select %p741, %s39, 1
        %s743 = scalar_lea.vmem %s11, %s742
        %p744 = pneg %p333
        %p745 = pneg %p330
        %p746 = scmp.lt.s32.totalorder %s39, 1
        %s747 = scalar_select %p746, %s39, 1
        %s748 = scalar_lea.vmem %s12, %s747
        %p749 = pneg %p359
        %p750 = pneg %p356
        %p751 = scmp.lt.s32.totalorder %s39, 1
        %s752 = scalar_select %p751, %s39, 1
        %s753 = smul.addr %s752, 16
        %s754 = smul.addr %s753, 4
        %s755 = scalar_lea.vmem %s13, %s754
        %p756 = pneg %p385
        %p757 = pneg %p382
        %p758 = scmp.lt.s32.totalorder %s39, 1
        %s759 = scalar_select %p758, %s39, 1
        %s760 = scalar_lea.vmem %s14, %s759
        %p761 = pneg %p411
        %p762 = pneg %p408
        %p763 = scmp.lt.s32.totalorder %s39, 1
        %s764 = scalar_select %p763, %s39, 1
        %s765 = smul.addr %s764, 16
        %s766 = smul.addr %s765, 4
        %s767 = scalar_lea.vmem %s15, %s766
        %p768 = pneg %p437
        %p769 = pneg %p434
        %p770 = scmp.lt.s32.totalorder %s39, 1
        %s771 = scalar_select %p770, %s39, 1
        %s772 = scalar_lea.vmem %s16, %s771
        %p773 = pneg %p463
        %p774 = pneg %p460
        %p775 = pneg %p484
        %p776 = pneg %p481
        %p777 = pneg %p505
        %p778 = pneg %p502
        %p779 = pneg %p526
        %p780 = pneg %p523
        %p781 = pneg %p552
        %p782 = pneg %p549
        %s783 = sand.u32 %s539, 1
        %s784 = scalar_lea.sflag [#allocation4], %s783
        %s785 = sand.u32 %s539, 1
        %s786 = smul.addr %s785, 2
        %s787 = scalar_lea.vmem [#allocation3], %s786
        %s788 = smul.u32 2, %s38
        %p789 = scmp.lt.s32.totalorder %s788, 3
        %s790 = scalar_select %p789, %s788, 3
        %s791 = smul.addr %s790, 2
        %s792 = smul.addr %s791, 4
        %s793 = scalar_lea.vmem %s0, %s792
        %s794 = smul.u32 2, %s38
        %p795 = scmp.lt.s32.totalorder %s39, 1
        %s796 = scalar_select %p795, %s39, 1
        %s797 = scalar_lea.vmem %s5, %s796
        %p798 = scmp.lt.s32.totalorder %s39, 1
        %s799 = scalar_select %p798, %s39, 1
        %s800 = scalar_lea.vmem %s6, %s799
        %p801 = scmp.lt.s32.totalorder %s39, 1
        %s802 = scalar_select %p801, %s39, 1
        %s803 = smul.addr %s802, 48
        %s804 = smul.addr %s803, 4
        %s805 = scalar_lea.vmem %s7, %s804
        %p806 = scmp.lt.s32.totalorder %s39, 1
        %s807 = scalar_select %p806, %s39, 1
        %s808 = smul.addr %s807, 3
        %s809 = scalar_lea.vmem %s8, %s808
        %p810 = scmp.lt.s32.totalorder %s39, 1
        %s811 = scalar_select %p810, %s39, 1
        %s812 = smul.addr %s811, 4
        %s813 = smul.addr %s812, 4
        %s814 = scalar_lea.vmem %s9, %s813
        %p815 = scmp.lt.s32.totalorder %s39, 1
        %s816 = scalar_select %p815, %s39, 1
        %s817 = scalar_lea.vmem %s10, %s816
        %p818 = scmp.lt.s32.totalorder %s39, 1
        %s819 = scalar_select %p818, %s39, 1
        %s820 = scalar_lea.vmem %s11, %s819
        %p821 = scmp.lt.s32.totalorder %s39, 1
        %s822 = scalar_select %p821, %s39, 1
        %s823 = scalar_lea.vmem %s12, %s822
        %p824 = scmp.lt.s32.totalorder %s39, 1
        %s825 = scalar_select %p824, %s39, 1
        %s826 = smul.addr %s825, 16
        %s827 = smul.addr %s826, 4
        %s828 = scalar_lea.vmem %s13, %s827
        %p829 = scmp.lt.s32.totalorder %s39, 1
        %s830 = scalar_select %p829, %s39, 1
        %s831 = scalar_lea.vmem %s14, %s830
        %p832 = scmp.lt.s32.totalorder %s39, 1
        %s833 = scalar_select %p832, %s39, 1
        %s834 = smul.addr %s833, 16
        %s835 = smul.addr %s834, 4
        %s836 = scalar_lea.vmem %s15, %s835
        %p837 = scmp.lt.s32.totalorder %s39, 1
        %s838 = scalar_select %p837, %s39, 1
        %s839 = scalar_lea.vmem %s16, %s838
        %v841 = vlaneseq
        %v842 = vand.u32 %v841, 127
        %vm843 = vcmp.lt.s32.totalorder %v842, 32
        %v844 = vsel %vm843, 1, 0
        %v845 = vcvt.s32.f32 %v844
        %p846 = scmp.eq.s32.totalorder %s39, 0
        // Predicated region
        $region101: #{clip_vision_forward.1} parent=99 // pred_check
          %p847 = pneg %p846
        $region102: #{clip_vision_forward.1} parent=99 // pred_check_branch
          %849 = sbr.rel (%p847) target = $region104
        $region103: #{clip_vision_forward.1} parent=99 // pred_region
          %v850 = vld [vmem:[%s793] sm:$0xff]
          %v851 = vld [vmem:[%s2] sm:$0xf]
          %v852 = vld [vmem:[%s2 + $0x4] sm:$0xf]
          %v853 = vld [vmem:[%s2 + $0x8] sm:$0xf]
          %v854 = vld [vmem:[%s2 + $0xc] sm:$0xf]
          %v855 = vld [vmem:[%s2 + $0x10] sm:$0xf]
          %v856 = vld [vmem:[%s2 + $0x14] sm:$0xf]
          %v857 = vld [vmem:[%s2 + $0x18] sm:$0xf]
          %v858 = vld [vmem:[%s2 + $0x1c] sm:$0xf]
          %v859 = vld [vmem:[%s2 + $0x20] sm:$0xf]
          %v860 = vld [vmem:[%s2 + $0x24] sm:$0xf]
          %v861 = vld [vmem:[%s2 + $0x28] sm:$0xf]
          %v862 = vld [vmem:[%s2 + $0x2c] sm:$0xf]
          %v863 = vld [vmem:[%s2 + $0x30] sm:$0xf]
          %v864 = vld [vmem:[%s2 + $0x34] sm:$0xf]
          %v865 = vld [vmem:[%s2 + $0x38] sm:$0xf]
          %v866 = vld [vmem:[%s2 + $0x3c] sm:$0xf]
          %v867 = vld [vmem:[%s2 + $0x40] sm:$0xf]
          %v868 = vld [vmem:[%s2 + $0x44] sm:$0xf]
          %v869 = vld [vmem:[%s2 + $0x48] sm:$0xf]
          %v870 = vld [vmem:[%s2 + $0x4c] sm:$0xf]
          %v871 = vld [vmem:[%s2 + $0x50] sm:$0xf]
          %v872 = vld [vmem:[%s2 + $0x54] sm:$0xf]
          %v873 = vld [vmem:[%s2 + $0x58] sm:$0xf]
          %v874 = vld [vmem:[%s2 + $0x5c] sm:$0xf]
          %v875 = vld [vmem:[%s2 + $0x60] sm:$0xf]
          %v876 = vld [vmem:[%s2 + $0x64] sm:$0xf]
          %v877 = vld [vmem:[%s2 + $0x68] sm:$0xf]
          %v878 = vld [vmem:[%s2 + $0x6c] sm:$0xf]
          %v879 = vld [vmem:[%s2 + $0x70] sm:$0xf]
          %v880 = vld [vmem:[%s2 + $0x74] sm:$0xf]
          %v881 = vld [vmem:[%s2 + $0x78] sm:$0xf]
          %v882 = vld [vmem:[%s2 + $0x7c] sm:$0xf]
          %v883 = vld [vmem:[%s1] sm:$0xff]
          %v885 = vunpack.c.l.b16 %v850
          %v886 = vunpack.c.h.b16 %v850
          %v887 = vpack.c.b16 %v885, %v885
          %v888 = vpack.c.b16 %v886, %v886
          %v923 = vunpack.c.l.b16 %v851
          %v924 = vunpack.c.l.b16 %v852
          %v925 = vunpack.c.l.b16 %v853
          %v926 = vunpack.c.l.b16 %v854
          %v927 = vunpack.c.l.b16 %v855
          %v928 = vunpack.c.l.b16 %v856
          %v929 = vunpack.c.l.b16 %v857
          %v930 = vunpack.c.l.b16 %v858
          %v931 = vunpack.c.l.b16 %v859
          %v932 = vunpack.c.l.b16 %v860
          %v933 = vunpack.c.l.b16 %v861
          %v934 = vunpack.c.l.b16 %v862
          %v935 = vunpack.c.l.b16 %v863
          %v936 = vunpack.c.l.b16 %v864
          %v937 = vunpack.c.l.b16 %v865
          %v938 = vunpack.c.l.b16 %v866
          %v939 = vunpack.c.l.b16 %v867
          %v940 = vunpack.c.l.b16 %v868
          %v941 = vunpack.c.l.b16 %v869
          %v942 = vunpack.c.l.b16 %v870
          %v943 = vunpack.c.l.b16 %v871
          %v944 = vunpack.c.l.b16 %v872
          %v945 = vunpack.c.l.b16 %v873
          %v946 = vunpack.c.l.b16 %v874
          %v947 = vunpack.c.l.b16 %v875
          %v948 = vunpack.c.l.b16 %v876
          %v949 = vunpack.c.l.b16 %v877
          %v950 = vunpack.c.l.b16 %v878
          %v951 = vunpack.c.l.b16 %v879
          %v952 = vunpack.c.l.b16 %v880
          %v953 = vunpack.c.l.b16 %v881
          %v954 = vunpack.c.l.b16 %v882
          %v955 = vpack.c.b16 %v924, %v923
          %v956 = vpack.c.b16 %v926, %v925
          %v957 = vpack.c.b16 %v928, %v927
          %v958 = vpack.c.b16 %v930, %v929
          %v959 = vpack.c.b16 %v932, %v931
          %v960 = vpack.c.b16 %v934, %v933
          %v961 = vpack.c.b16 %v936, %v935
          %v962 = vpack.c.b16 %v938, %v937
          %v963 = vpack.c.b16 %v940, %v939
          %v964 = vpack.c.b16 %v942, %v941
          %v965 = vpack.c.b16 %v944, %v943
          %v966 = vpack.c.b16 %v946, %v945
          %v967 = vpack.c.b16 %v948, %v947
          %v968 = vpack.c.b16 %v950, %v949
          %v969 = vpack.c.b16 %v952, %v951
          %v970 = vpack.c.b16 %v954, %v953
          %987 = vmatprep.subr.bf16.mxu0 0
          %988 = vmatpush1.bf16.msra.mxu0 %v955
          %989 = vmatprep.subr.bf16.mxu0 0
          %990 = vmatpush1.bf16.msra.mxu0 %v956
          %991 = vmatprep.subr.bf16.mxu0 0
          %992 = vmatpush1.bf16.msra.mxu0 %v957
          %993 = vmatprep.subr.bf16.mxu0 0
          %994 = vmatpush1.bf16.msra.mxu0 %v958
          %995 = vmatprep.subr.bf16.mxu0 0
          %996 = vmatpush1.bf16.msra.mxu0 %v959
          %997 = vmatprep.subr.bf16.mxu0 0
          %998 = vmatpush1.bf16.msra.mxu0 %v960
          %999 = vmatprep.subr.bf16.mxu0 0
          %1000 = vmatpush1.bf16.msra.mxu0 %v961
          %1001 = vmatprep.subr.bf16.mxu0 0
          %1002 = vmatpush1.bf16.msra.mxu0 %v962
          %1003 = vmatprep.subr.bf16.mxu0 0
          %1004 = vmatpush1.bf16.msra.mxu0 %v963
          %1005 = vmatprep.subr.bf16.mxu0 0
          %1006 = vmatpush1.bf16.msra.mxu0 %v964
          %1007 = vmatprep.subr.bf16.mxu0 0
          %1008 = vmatpush1.bf16.msra.mxu0 %v965
          %1009 = vmatprep.subr.bf16.mxu0 0
          %1010 = vmatpush1.bf16.msra.mxu0 %v966
          %1011 = vmatprep.subr.bf16.mxu0 0
          %1012 = vmatpush1.bf16.msra.mxu0 %v967
          %1013 = vmatprep.subr.bf16.mxu0 0
          %1014 = vmatpush1.bf16.msra.mxu0 %v968
          %1015 = vmatprep.subr.bf16.mxu0 0
          %1016 = vmatpush1.bf16.msra.mxu0 %v969
          %1017 = vmatprep.subr.bf16.mxu0 0
          %1018 = vmatpush1.bf16.msra.mxu0 %v970
          %1019 = vmatprep.mubr.bf16.mxu0 %v888
          %1020 = vmatmul.mubr.bf16.gmra.mrb[0].mxu0 %v887
          %v1021 = vpop.f32.mrb[0].mxu0
          %v1022 = vadd.f32 %v883, %v1021
          %v1023 = vpop.f32.mrb[0].mxu0
          %v1024 = vpop.f32.mrb[0].mxu0
          %v1025 = vpop.f32.mrb[0].mxu0
          %1026 = vdwg.mxu0
          %v1027 = vld [vmem:[%s3] sm:$0x1]
          %v1028 = vld [vmem:[%s4] sm:$0x1]
          %v1029 = vmul.f32 %v1022, %v845
          %1030 = vadd.xlane.f32.xlu0 %v1029
          %v1031 = vpop.xlane.xlu0 %1030
          %v1032 = vmul.f32 %v1031, 0.03125
          %v1033 = vsub.f32 %v1022, %v1032
          %v1034 = vmul.f32 %v1033, %v845
          %v1035 = vmul.f32 %v1034, %v1034
          %1036 = vadd.xlane.f32.xlu0 %v1035
          %v1037 = vpop.xlane.xlu0 %1036
          %v1038 = vmul.f32 %v1037, 0.03125
          %v1039 = vadd.f32 %v1038, 1e-05
          %v1040 = vrsqrt.pop %v1039
          %v1041 = vmul.f32 %v1034, %v1040
          %v1043 = vlaneseq
          %v1044 = vshrl.u32 %v1043, 7
          %v1045 = vsub.s32 0, %v1044
          %v1046 = vrot.slane %v1027, %v1045
          %v1048 = vmul.f32 %v1041, %v1046
          %v1050 = vlaneseq
          %v1051 = vshrl.u32 %v1050, 7
          %v1052 = vsub.s32 0, %v1051
          %v1053 = vrot.slane %v1028, %v1052
          %v1055 = vadd.f32 %v1048, %v1053
          %1056 = vst [vmem:[#allocation2] sm:$0xff] %v1055
          %s1057 = scalar_lea.vmem %s793, 8
          %v1058 = vld [vmem:[%s1057] sm:$0xff]
          %v1059 = vld [vmem:[%s2] sm:$0xf]
          %v1060 = vld [vmem:[%s2 + $0x4] sm:$0xf]
          %v1061 = vld [vmem:[%s2 + $0x8] sm:$0xf]
          %v1062 = vld [vmem:[%s2 + $0xc] sm:$0xf]
          %v1063 = vld [vmem:[%s2 + $0x10] sm:$0xf]
          %v1064 = vld [vmem:[%s2 + $0x14] sm:$0xf]
          %v1065 = vld [vmem:[%s2 + $0x18] sm:$0xf]
          %v1066 = vld [vmem:[%s2 + $0x1c] sm:$0xf]
          %v1067 = vld [vmem:[%s2 + $0x20] sm:$0xf]
          %v1068 = vld [vmem:[%s2 + $0x24] sm:$0xf]
          %v1069 = vld [vmem:[%s2 + $0x28] sm:$0xf]
          %v1070 = vld [vmem:[%s2 + $0x2c] sm:$0xf]
          %v1071 = vld [vmem:[%s2 + $0x30] sm:$0xf]
          %v1072 = vld [vmem:[%s2 + $0x34] sm:$0xf]
          %v1073 = vld [vmem:[%s2 + $0x38] sm:$0xf]
          %v1074 = vld [vmem:[%s2 + $0x3c] sm:$0xf]
          %v1075 = vld [vmem:[%s2 + $0x40] sm:$0xf]
          %v1076 = vld [vmem:[%s2 + $0x44] sm:$0xf]
          %v1077 = vld [vmem:[%s2 + $0x48] sm:$0xf]
          %v1078 = vld [vmem:[%s2 + $0x4c] sm:$0xf]
          %v1079 = vld [vmem:[%s2 + $0x50] sm:$0xf]
          %v1080 = vld [vmem:[%s2 + $0x54] sm:$0xf]
          %v1081 = vld [vmem:[%s2 + $0x58] sm:$0xf]
          %v1082 = vld [vmem:[%s2 + $0x5c] sm:$0xf]
          %v1083 = vld [vmem:[%s2 + $0x60] sm:$0xf]
          %v1084 = vld [vmem:[%s2 + $0x64] sm:$0xf]
          %v1085 = vld [vmem:[%s2 + $0x68] sm:$0xf]
          %v1086 = vld [vmem:[%s2 + $0x6c] sm:$0xf]
          %v1087 = vld [vmem:[%s2 + $0x70] sm:$0xf]
          %v1088 = vld [vmem:[%s2 + $0x74] sm:$0xf]
          %v1089 = vld [vmem:[%s2 + $0x78] sm:$0xf]
          %v1090 = vld [vmem:[%s2 + $0x7c] sm:$0xf]
          %v1091 = vld [vmem:[%s1] sm:$0xff]
          %v1093 = vunpack.c.l.b16 %v1058
          %v1094 = vunpack.c.h.b16 %v1058
          %v1095 = vpack.c.b16 %v1093, %v1093
          %v1096 = vpack.c.b16 %v1094, %v1094
          %v1131 = vunpack.c.l.b16 %v1059
          %v1132 = vunpack.c.l.b16 %v1060
          %v1133 = vunpack.c.l.b16 %v1061
          %v1134 = vunpack.c.l.b16 %v1062
          %v1135 = vunpack.c.l.b16 %v1063
          %v1136 = vunpack.c.l.b16 %v1064
          %v1137 = vunpack.c.l.b16 %v1065
          %v1138 = vunpack.c.l.b16 %v1066
          %v1139 = vunpack.c.l.b16 %v1067
          %v1140 = vunpack.c.l.b16 %v1068
          %v1141 = vunpack.c.l.b16 %v1069
          %v1142 = vunpack.c.l.b16 %v1070
          %v1143 = vunpack.c.l.b16 %v1071
          %v1144 = vunpack.c.l.b16 %v1072
          %v1145 = vunpack.c.l.b16 %v1073
          %v1146 = vunpack.c.l.b16 %v1074
          %v1147 = vunpack.c.l.b16 %v1075
          %v1148 = vunpack.c.l.b16 %v1076
          %v1149 = vunpack.c.l.b16 %v1077
          %v1150 = vunpack.c.l.b16 %v1078
          %v1151 = vunpack.c.l.b16 %v1079
          %v1152 = vunpack.c.l.b16 %v1080
          %v1153 = vunpack.c.l.b16 %v1081
          %v1154 = vunpack.c.l.b16 %v1082
          %v1155 = vunpack.c.l.b16 %v1083
          %v1156 = vunpack.c.l.b16 %v1084
          %v1157 = vunpack.c.l.b16 %v1085
          %v1158 = vunpack.c.l.b16 %v1086
          %v1159 = vunpack.c.l.b16 %v1087
          %v1160 = vunpack.c.l.b16 %v1088
          %v1161 = vunpack.c.l.b16 %v1089
          %v1162 = vunpack.c.l.b16 %v1090
          %v1163 = vpack.c.b16 %v1132, %v1131
          %v1164 = vpack.c.b16 %v1134, %v1133
          %v1165 = vpack.c.b16 %v1136, %v1135
          %v1166 = vpack.c.b16 %v1138, %v1137
          %v1167 = vpack.c.b16 %v1140, %v1139
          %v1168 = vpack.c.b16 %v1142, %v1141
          %v1169 = vpack.c.b16 %v1144, %v1143
          %v1170 = vpack.c.b16 %v1146, %v1145
          %v1171 = vpack.c.b16 %v1148, %v1147
          %v1172 = vpack.c.b16 %v1150, %v1149
          %v1173 = vpack.c.b16 %v1152, %v1151
          %v1174 = vpack.c.b16 %v1154, %v1153
          %v1175 = vpack.c.b16 %v1156, %v1155
          %v1176 = vpack.c.b16 %v1158, %v1157
          %v1177 = vpack.c.b16 %v1160, %v1159
          %v1178 = vpack.c.b16 %v1162, %v1161
          %1195 = vmatprep.subr.bf16.mxu0 0
          %1196 = vmatpush1.bf16.msra.mxu0 %v1163
          %1197 = vmatprep.subr.bf16.mxu0 0
          %1198 = vmatpush1.bf16.msra.mxu0 %v1164
          %1199 = vmatprep.subr.bf16.mxu0 0
          %1200 = vmatpush1.bf16.msra.mxu0 %v1165
          %1201 = vmatprep.subr.bf16.mxu0 0
          %1202 = vmatpush1.bf16.msra.mxu0 %v1166
          %1203 = vmatprep.subr.bf16.mxu0 0
          %1204 = vmatpush1.bf16.msra.mxu0 %v1167
          %1205 = vmatprep.subr.bf16.mxu0 0
          %1206 = vmatpush1.bf16.msra.mxu0 %v1168
          %1207 = vmatprep.subr.bf16.mxu0 0
          %1208 = vmatpush1.bf16.msra.mxu0 %v1169
          %1209 = vmatprep.subr.bf16.mxu0 0
          %1210 = vmatpush1.bf16.msra.mxu0 %v1170
          %1211 = vmatprep.subr.bf16.mxu0 0
          %1212 = vmatpush1.bf16.msra.mxu0 %v1171
          %1213 = vmatprep.subr.bf16.mxu0 0
          %1214 = vmatpush1.bf16.msra.mxu0 %v1172
          %1215 = vmatprep.subr.bf16.mxu0 0
          %1216 = vmatpush1.bf16.msra.mxu0 %v1173
          %1217 = vmatprep.subr.bf16.mxu0 0
          %1218 = vmatpush1.bf16.msra.mxu0 %v1174
          %1219 = vmatprep.subr.bf16.mxu0 0
          %1220 = vmatpush1.bf16.msra.mxu0 %v1175
          %1221 = vmatprep.subr.bf16.mxu0 0
          %1222 = vmatpush1.bf16.msra.mxu0 %v1176
          %1223 = vmatprep.subr.bf16.mxu0 0
          %1224 = vmatpush1.bf16.msra.mxu0 %v1177
          %1225 = vmatprep.subr.bf16.mxu0 0
          %1226 = vmatpush1.bf16.msra.mxu0 %v1178
          %1227 = vmatprep.mubr.bf16.mxu0 %v1096
          %1228 = vmatmul.mubr.bf16.gmra.mrb[0].mxu0 %v1095
          %v1229 = vpop.f32.mrb[0].mxu0
          %v1230 = vadd.f32 %v1091, %v1229
          %v1231 = vpop.f32.mrb[0].mxu0
          %v1232 = vpop.f32.mrb[0].mxu0
          %v1233 = vpop.f32.mrb[0].mxu0
          %1234 = vdwg.mxu0
          %v1235 = vld [vmem:[%s3] sm:$0x1]
          %v1236 = vld [vmem:[%s4] sm:$0x1]
          %v1237 = vmul.f32 %v1230, %v845
          %1238 = vadd.xlane.f32.xlu0 %v1237
          %v1239 = vpop.xlane.xlu0 %1238
          %v1240 = vmul.f32 %v1239, 0.03125
          %v1241 = vsub.f32 %v1230, %v1240
          %v1242 = vmul.f32 %v1241, %v845
          %v1243 = vmul.f32 %v1242, %v1242
          %1244 = vadd.xlane.f32.xlu0 %v1243
          %v1245 = vpop.xlane.xlu0 %1244
          %v1246 = vmul.f32 %v1245, 0.03125
          %v1247 = vadd.f32 %v1246, 1e-05
          %v1248 = vrsqrt.pop %v1247
          %v1249 = vmul.f32 %v1242, %v1248
          %v1251 = vlaneseq
          %v1252 = vshrl.u32 %v1251, 7
          %v1253 = vsub.s32 0, %v1252
          %v1254 = vrot.slane %v1235, %v1253
          %v1256 = vmul.f32 %v1249, %v1254
          %v1258 = vlaneseq
          %v1259 = vshrl.u32 %v1258, 7
          %v1260 = vsub.s32 0, %v1259
          %v1261 = vrot.slane %v1236, %v1260
          %v1263 = vadd.f32 %v1256, %v1261
          %1264 = vst [vmem:[#allocation2 + $0x8] sm:$0xff] %v1263
        $region104: #{clip_vision_forward.1} parent=99 // pred_fallthru
          _
        %v1265 = vld [vmem:[#allocation2] sm:$0xff]
        %v1266 = vld [vmem:[#allocation2 + $0x8] sm:$0xff]
        %v1267 = vld [vmem:[%s797] sm:$0x1]
        %v1268 = vld [vmem:[%s800] sm:$0x1]
        %v1269 = vmul.f32 %v1265, %v845
        %v1270 = vmul.f32 %v1266, %v845
        %1271 = vadd.xlane.f32.xlu0 %v1269
        %v1272 = vpop.xlane.xlu0 %1271
        %1273 = vadd.xlane.f32.xlu0 %v1270
        %v1274 = vpop.xlane.xlu0 %1273
        %v1275 = vmul.f32 %v1272, 0.03125
        %v1276 = vmul.f32 %v1274, 0.03125
        %v1277 = vsub.f32 %v1265, %v1275
        %v1278 = vsub.f32 %v1266, %v1276
        %v1279 = vmul.f32 %v1277, %v845
        %v1280 = vmul.f32 %v1278, %v845
        %v1281 = vmul.f32 %v1279, %v1279
        %v1282 = vmul.f32 %v1280, %v1280
        %1283 = vadd.xlane.f32.xlu0 %v1281
        %v1284 = vpop.xlane.xlu0 %1283
        %1285 = vadd.xlane.f32.xlu0 %v1282
        %v1286 = vpop.xlane.xlu0 %1285
        %v1287 = vmul.f32 %v1284, 0.03125
        %v1288 = vmul.f32 %v1286, 0.03125
        %v1289 = vadd.f32 %v1287, 1e-05
        %v1290 = vadd.f32 %v1288, 1e-05
        %v1291 = vrsqrt.pop %v1289
        %v1292 = vrsqrt.pop %v1290
        %v1293 = vmul.f32 %v1279, %v1291
        %v1294 = vmul.f32 %v1280, %v1292
        %v1296 = vlaneseq
        %v1297 = vshrl.u32 %v1296, 7
        %v1298 = vsub.s32 0, %v1297
        %v1299 = vrot.slane %v1267, %v1298
        %v1301 = vmul.f32 %v1293, %v1299
        %v1302 = vmul.f32 %v1294, %v1299
        %v1304 = vlaneseq
        %v1305 = vshrl.u32 %v1304, 7
        %v1306 = vsub.s32 0, %v1305
        %v1307 = vrot.slane %v1268, %v1306
        %v1309 = vadd.f32 %v1301, %v1307
        %v1310 = vadd.f32 %v1302, %v1307
        %v1311 = vpack.c.bf16 %v1310, %v1309
        %v1312 = vld [vmem:[%s805] sm:$0xff]
        %v1313 = vld [vmem:[%s805 + $0x8] sm:$0xf]
        %v1314 = vld [vmem:[%s805 + $0xc] sm:$0xff]
        %v1315 = vld [vmem:[%s805 + $0x14] sm:$0xf]
        %v1316 = vld [vmem:[%s805 + $0x18] sm:$0xff]
        %v1317 = vld [vmem:[%s805 + $0x20] sm:$0xf]
        %v1318 = vld [vmem:[%s805 + $0x24] sm:$0xff]
        %v1319 = vld [vmem:[%s805 + $0x2c] sm:$0xf]
        %v1320 = vld [vmem:[%s805 + $0x30] sm:$0xff]
        %v1321 = vld [vmem:[%s805 + $0x38] sm:$0xf]
        %v1322 = vld [vmem:[%s805 + $0x3c] sm:$0xff]
        %v1323 = vld [vmem:[%s805 + $0x44] sm:$0xf]
        %v1324 = vld [vmem:[%s805 + $0x48] sm:$0xff]
        %v1325 = vld [vmem:[%s805 + $0x50] sm:$0xf]
        %v1326 = vld [vmem:[%s805 + $0x54] sm:$0xff]
        %v1327 = vld [vmem:[%s805 + $0x5c] sm:$0xf]
        %v1328 = vld [vmem:[%s805 + $0x60] sm:$0xff]
        %v1329 = vld [vmem:[%s805 + $0x68] sm:$0xf]
        %v1330 = vld [vmem:[%s805 + $0x6c] sm:$0xff]
        %v1331 = vld [vmem:[%s805 + $0x74] sm:$0xf]
        %v1332 = vld [vmem:[%s805 + $0x78] sm:$0xff]
        %v1333 = vld [vmem:[%s805 + $0x80] sm:$0xf]
        %v1334 = vld [vmem:[%s805 + $0x84] sm:$0xff]
        %v1335 = vld [vmem:[%s805 + $0x8c] sm:$0xf]
        %v1336 = vld [vmem:[%s805 + $0x90] sm:$0xff]
        %v1337 = vld [vmem:[%s805 + $0x98] sm:$0xf]
        %v1338 = vld [vmem:[%s805 + $0x9c] sm:$0xff]
        %v1339 = vld [vmem:[%s805 + $0xa4] sm:$0xf]
        %v1340 = vld [vmem:[%s805 + $0xa8] sm:$0xff]
        %v1341 = vld [vmem:[%s805 + $0xb0] sm:$0xf]
        %v1342 = vld [vmem:[%s805 + $0xb4] sm:$0xff]
        %v1343 = vld [vmem:[%s805 + $0xbc] sm:$0xf]
        %v1344 = vld [vmem:[%s809] sm:$0x7]
        %v1346 = vlaneseq
        %v1347 = vshrl.u32 %v1346, 7
        %v1348 = vsub.s32 0, %v1347
        %v1349 = vrot.slane %v1344, %v1348
        %v1350 = vlaneseq
        %v1351 = vshrl.u32 %v1350, 7
        %v1352 = vsub.s32 1, %v1351
        %v1353 = vrot.slane %v1344, %v1352
        %v1354 = vlaneseq
        %v1355 = vshrl.u32 %v1354, 7
        %v1356 = vsub.s32 2, %v1355
        %v1357 = vrot.slane %v1344, %v1356
        %v1393 = vunpack.c.l.b16 %v1312
        %v1394 = vunpack.c.h.b16 %v1312
        %v1395 = vunpack.c.l.b16 %v1313
        %v1396 = vunpack.c.l.b16 %v1314
        %v1397 = vunpack.c.h.b16 %v1314
        %v1398 = vunpack.c.l.b16 %v1315
        %v1399 = vunpack.c.l.b16 %v1316
        %v1400 = vunpack.c.h.b16 %v1316
        %v1401 = vunpack.c.l.b16 %v1317
        %v1402 = vunpack.c.l.b16 %v1318
        %v1403 = vunpack.c.h.b16 %v1318
        %v1404 = vunpack.c.l.b16 %v1319
        %v1405 = vunpack.c.l.b16 %v1320
        %v1406 = vunpack.c.h.b16 %v1320
        %v1407 = vunpack.c.l.b16 %v1321
        %v1408 = vunpack.c.l.b16 %v1322
        %v1409 = vunpack.c.h.b16 %v1322
        %v1410 = vunpack.c.l.b16 %v1323
        %v1411 = vunpack.c.l.b16 %v1324
        %v1412 = vunpack.c.h.b16 %v1324
        %v1413 = vunpack.c.l.b16 %v1325
        %v1414 = vunpack.c.l.b16 %v1326
        %v1415 = vunpack.c.h.b16 %v1326
        %v1416 = vunpack.c.l.b16 %v1327
        %v1417 = vunpack.c.l.b16 %v1328
        %v1418 = vunpack.c.h.b16 %v1328
        %v1419 = vunpack.c.l.b16 %v1329
        %v1420 = vunpack.c.l.b16 %v1330
        %v1421 = vunpack.c.h.b16 %v1330
        %v1422 = vunpack.c.l.b16 %v1331
        %v1423 = vunpack.c.l.b16 %v1332
        %v1424 = vunpack.c.h.b16 %v1332
        %v1425 = vunpack.c.l.b16 %v1333
        %v1426 = vunpack.c.l.b16 %v1334
        %v1427 = vunpack.c.h.b16 %v1334
        %v1428 = vunpack.c.l.b16 %v1335
        %v1429 = vunpack.c.l.b16 %v1336
        %v1430 = vunpack.c.h.b16 %v1336
        %v1431 = vunpack.c.l.b16 %v1337
        %v1432 = vunpack.c.l.b16 %v1338
        %v1433 = vunpack.c.h.b16 %v1338
        %v1434 = vunpack.c.l.b16 %v1339
        %v1435 = vunpack.c.l.b16 %v1340
        %v1436 = vunpack.c.h.b16 %v1340
        %v1437 = vunpack.c.l.b16 %v1341
        %v1438 = vunpack.c.l.b16 %v1342
        %v1439 = vunpack.c.h.b16 %v1342
        %v1440 = vunpack.c.l.b16 %v1343
        %v1441 = vpack.c.b16 %v1396, %v1393
        %v1442 = vpack.c.b16 %v1397, %v1394
        %v1443 = vpack.c.b16 %v1398, %v1395
        %v1444 = vpack.c.b16 %v1402, %v1399
        %v1445 = vpack.c.b16 %v1403, %v1400
        %v1446 = vpack.c.b16 %v1404, %v1401
        %v1447 = vpack.c.b16 %v1408, %v1405
        %v1448 = vpack.c.b16 %v1409, %v1406
        %v1449 = vpack.c.b16 %v1410, %v1407
        %v1450 = vpack.c.b16 %v1414, %v1411
        %v1451 = vpack.c.b16 %v1415, %v1412
        %v1452 = vpack.c.b16 %v1416, %v1413
        %v1453 = vpack.c.b16 %v1420, %v1417
        %v1454 = vpack.c.b16 %v1421, %v1418
        %v1455 = vpack.c.b16 %v1422, %v1419
        %v1456 = vpack.c.b16 %v1426, %v1423
        %v1457 = vpack.c.b16 %v1427, %v1424
        %v1458 = vpack.c.b16 %v1428, %v1425
        %v1459 = vpack.c.b16 %v1432, %v1429
        %v1460 = vpack.c.b16 %v1433, %v1430
        %v1461 = vpack.c.b16 %v1434, %v1431
        %v1462 = vpack.c.b16 %v1438, %v1435
        %v1463 = vpack.c.b16 %v1439, %v1436
        %v1464 = vpack.c.b16 %v1440, %v1437
        %1489 = vmatprep.subr.bf16.mxu0 %v1442
        %1490 = vmatpush1.bf16.msra.mxu0 %v1441
        %1491 = vmatprep.subr.bf16.mxu0 %v1445
        %1492 = vmatpush1.bf16.msra.mxu0 %v1444
        %1493 = vmatprep.subr.bf16.mxu0 %v1448
        %1494 = vmatpush1.bf16.msra.mxu0 %v1447
        %1495 = vmatprep.subr.bf16.mxu0 %v1451
        %1496 = vmatpush1.bf16.msra.mxu0 %v1450
        %1497 = vmatprep.subr.bf16.mxu0 %v1454
        %1498 = vmatpush1.bf16.msra.mxu0 %v1453
        %1499 = vmatprep.subr.bf16.mxu0 %v1457
        %1500 = vmatpush1.bf16.msra.mxu0 %v1456
        %1501 = vmatprep.subr.bf16.mxu0 %v1460
        %1502 = vmatpush1.bf16.msra.mxu0 %v1459
        %1503 = vmatprep.subr.bf16.mxu0 %v1463
        %1504 = vmatpush1.bf16.msra.mxu0 %v1462
        %1505 = vmatprep.subr.bf16.mxu0 0
        %1506 = vmatpush1.bf16.msra.mxu0 0
        %1507 = vmatprep.subr.bf16.mxu0 0
        %1508 = vmatpush1.bf16.msra.mxu0 0
        %1509 = vmatprep.subr.bf16.mxu0 0
        %1510 = vmatpush1.bf16.msra.mxu0 0
        %1511 = vmatprep.subr.bf16.mxu0 0
        %1512 = vmatpush1.bf16.msra.mxu0 0
        %1513 = vmatprep.subr.bf16.mxu0 0
        %1514 = vmatpush1.bf16.msra.mxu0 0
        %1515 = vmatprep.subr.bf16.mxu0 0
        %1516 = vmatpush1.bf16.msra.mxu0 0
        %1517 = vmatprep.subr.bf16.mxu0 0
        %1518 = vmatpush1.bf16.msra.mxu0 0
        %1519 = vmatprep.subr.bf16.mxu0 0
        %1520 = vmatpush1.bf16.msra.mxu0 0
        %1521 = vmatprep.mubr.bf16.mxu0 0
        %1522 = vmatmul.mubr.bf16.gmra.mrb[0].mxu0 %v1311
        %v1523 = vpop.f32.mrb[0].mxu0
        %v1524 = vadd.f32 %v1349, %v1523
        %v1525 = vpop.f32.mrb[0].mxu0
        %v1526 = vadd.f32 %v1353, %v1525
        %v1527 = vpop.f32.mrb[0].mxu0
        %v1528 = vadd.f32 %v1349, %v1527
        %v1529 = vpop.f32.mrb[0].mxu0
        %v1530 = vadd.f32 %v1353, %v1529
        %1531 = vdwg.mxu0
        %1532 = vmatprep.subr.bf16.mxu0 0
        %1533 = vmatpush1.bf16.msra.mxu0 %v1443
        %1534 = vmatprep.subr.bf16.mxu0 0
        %1535 = vmatpush1.bf16.msra.mxu0 %v1446
        %1536 = vmatprep.subr.bf16.mxu0 0
        %1537 = vmatpush1.bf16.msra.mxu0 %v1449
        %1538 = vmatprep.subr.bf16.mxu0 0
        %1539 = vmatpush1.bf16.msra.mxu0 %v1452
        %1540 = vmatprep.subr.bf16.mxu0 0
        %1541 = vmatpush1.bf16.msra.mxu0 %v1455
        %1542 = vmatprep.subr.bf16.mxu0 0
        %1543 = vmatpush1.bf16.msra.mxu0 %v1458
        %1544 = vmatprep.subr.bf16.mxu0 0
        %1545 = vmatpush1.bf16.msra.mxu0 %v1461
        %1546 = vmatprep.subr.bf16.mxu0 0
        %1547 = vmatpush1.bf16.msra.mxu0 %v1464
        %1548 = vmatprep.subr.bf16.mxu0 0
        %1549 = vmatpush1.bf16.msra.mxu0 0
        %1550 = vmatprep.subr.bf16.mxu0 0
        %1551 = vmatpush1.bf16.msra.mxu0 0
        %1552 = vmatprep.subr.bf16.mxu0 0
        %1553 = vmatpush1.bf16.msra.mxu0 0
        %1554 = vmatprep.subr.bf16.mxu0 0
        %1555 = vmatpush1.bf16.msra.mxu0 0
        %1556 = vmatprep.subr.bf16.mxu0 0
        %1557 = vmatpush1.bf16.msra.mxu0 0
        %1558 = vmatprep.subr.bf16.mxu0 0
        %1559 = vmatpush1.bf16.msra.mxu0 0
        %1560 = vmatprep.subr.bf16.mxu0 0
        %1561 = vmatpush1.bf16.msra.mxu0 0
        %1562 = vmatprep.subr.bf16.mxu0 0
        %1563 = vmatpush1.bf16.msra.mxu0 0
        %1564 = vmatprep.mubr.bf16.mxu0 0
        %1565 = vmatmul.mubr.bf16.gmra.mrb[0].mxu0 %v1311
        %v1566 = vpop.f32.mrb[0].mxu0
        %v1567 = vadd.f32 %v1357, %v1566
        %v1568 = vpop.f32.mrb[0].mxu0
        %v1569 = vpop.f32.mrb[0].mxu0
        %v1570 = vadd.f32 %v1357, %v1569
        %v1571 = vpop.f32.mrb[0].mxu0
        %1572 = vdwg.mxu0
        %vm1573 = vcmp.lt.s32.totalorder %v842, 5
        %v1574 = vsel %vm1573, 0.0, -1e+09
        %v1575 = vpack.c.bf16 %v1524, %v1524
        %v1576 = vpack.c.bf16 %v1526, %v1526
        %v1577 = vpack.c.bf16 %v1567, %v1567
        %vm1578 = vcmask 130048
        %v1580 = vsel %vm1578, %v1575, 0
        %v1583 = vsel %vm1578, %v1576, 0
        %1585 = vmatprep.subr.bf16.mxu0 0
        %1586 = vmatpush1.bf16.xpose.msra.mxu0 %v1583
        %1587 = vmatprep.subr.bf16.mxu0 0
        %1588 = vmatpush1.bf16.xpose.msra.mxu0 0
        %1589 = vmatprep.subr.bf16.mxu0 0
        %1590 = vmatpush1.bf16.xpose.msra.mxu0 0
        %1591 = vmatprep.subr.bf16.mxu0 0
        %1592 = vmatpush1.bf16.xpose.msra.mxu0 0
        %1593 = vmatprep.subr.bf16.mxu0 0
        %1594 = vmatpush1.bf16.xpose.msra.mxu0 0
        %1595 = vmatprep.subr.bf16.mxu0 0
        %1596 = vmatpush1.bf16.xpose.msra.mxu0 0
        %1597 = vmatprep.subr.bf16.mxu0 0
        %1598 = vmatpush1.bf16.xpose.msra.mxu0 0
        %1599 = vmatprep.subr.bf16.mxu0 0
        %1600 = vmatpush1.bf16.xpose.msra.mxu0 0
        %1601 = vmatprep.subr.bf16.mxu0 0
        %1602 = vmatpush1.bf16.xpose.msra.mxu0 0
        %1603 = vmatprep.subr.bf16.mxu0 0
        %1604 = vmatpush1.bf16.xpose.msra.mxu0 0
        %1605 = vmatprep.subr.bf16.mxu0 0
        %1606 = vmatpush1.bf16.xpose.msra.mxu0 0
        %1607 = vmatprep.subr.bf16.mxu0 0
        %1608 = vmatpush1.bf16.xpose.msra.mxu0 0
        %1609 = vmatprep.subr.bf16.mxu0 0
        %1610 = vmatpush1.bf16.xpose.msra.mxu0 0
        %1611 = vmatprep.subr.bf16.mxu0 0
        %1612 = vmatpush1.bf16.xpose.msra.mxu0 0
        %1613 = vmatprep.subr.bf16.mxu0 0
        %1614 = vmatpush1.bf16.xpose.msra.mxu0 0
        %1615 = vmatprep.subr.bf16.mxu0 0
        %1616 = vmatpush1.bf16.xpose.msra.mxu0 0
        %1617 = vmatprep.mubr.bf16.mxu0 0
        %1618 = vmatmul.mubr.bf16.gmra.mrb[0].mxu0 %v1580
        %v1619 = vpop.f32.mrb[0].mxu0
        %v1620 = vadd.f32 %v1574, %v1619
        %v1621 = vpop.f32.mrb[0].mxu0
        %v1622 = vpop.f32.mrb[0].mxu0
        %v1623 = vpop.f32.mrb[0].mxu0
        %1624 = vdwg.mxu0
        %vm1625 = vcmask 64512
        %v1626 = vsel %vm1625, %v1620, -inf
        %1627 = vmax.xlane.f32.xlu0 %v1626
        %v1628 = vpop.xlane.xlu0 %1627
        %v1629 = vsub.f32 %v1620, %v1628
        %v1630 = vmul.f32 %v1629, 1.442695
        %v1631 = vpow.pop %v1630
        %v1632 = vsel %vm1625, %v1631, 0.0
        %1633 = vadd.xlane.f32.xlu0 %v1632
        %v1634 = vpop.xlane.xlu0 %1633
        %v1635 = vrcp.pop %v1634
        %v1636 = vmul.f32 %v1631, %v1635
        %v1637 = vpack.c.bf16 %v1636, %v1636
        %v1639 = vsel %vm1625, %v1637, 0
        %vm1641 = vcmask 1043456
        %v1643 = vsel %vm1641, %v1577, 0
        %1645 = vmatprep.subr.bf16.mxu0 0
        %1646 = vmatpush1.bf16.msra.mxu0 %v1643
        %1647 = vmatprep.subr.bf16.mxu0 0
        %1648 = vmatpush1.bf16.msra.mxu0 0
        %1649 = vmatprep.subr.bf16.mxu0 0
        %1650 = vmatpush1.bf16.msra.mxu0 0
        %1651 = vmatprep.subr.bf16.mxu0 0
        %1652 = vmatpush1.bf16.msra.mxu0 0
        %1653 = vmatprep.subr.bf16.mxu0 0
        %1654 = vmatpush1.bf16.msra.mxu0 0
        %1655 = vmatprep.subr.bf16.mxu0 0
        %1656 = vmatpush1.bf16.msra.mxu0 0
        %1657 = vmatprep.subr.bf16.mxu0 0
        %1658 = vmatpush1.bf16.msra.mxu0 0
        %1659 = vmatprep.subr.bf16.mxu0 0
        %1660 = vmatpush1.bf16.msra.mxu0 0
        %1661 = vmatprep.subr.bf16.mxu0 0
        %1662 = vmatpush1.bf16.msra.mxu0 0
        %1663 = vmatprep.subr.bf16.mxu0 0
        %1664 = vmatpush1.bf16.msra.mxu0 0
        %1665 = vmatprep.subr.bf16.mxu0 0
        %1666 = vmatpush1.bf16.msra.mxu0 0
        %1667 = vmatprep.subr.bf16.mxu0 0
        %1668 = vmatpush1.bf16.msra.mxu0 0
        %1669 = vmatprep.subr.bf16.mxu0 0
        %1670 = vmatpush1.bf16.msra.mxu0 0
        %1671 = vmatprep.subr.bf16.mxu0 0
        %1672 = vmatpush1.bf16.msra.mxu0 0
        %1673 = vmatprep.subr.bf16.mxu0 0
        %1674 = vmatpush1.bf16.msra.mxu0 0
        %1675 = vmatprep.subr.bf16.mxu0 0
        %1676 = vmatpush1.bf16.msra.mxu0 0
        %1677 = vmatprep.mubr.bf16.mxu0 0
        %1678 = vmatmul.mubr.bf16.gmra.mrb[0].mxu0 %v1639
        %v1679 = vpop.f32.mrb[0].mxu0
        %v1680 = vadd.f32 0.0, %v1679
        %v1681 = vpop.f32.mrb[0].mxu0
        %v1682 = vpop.f32.mrb[0].mxu0
        %v1683 = vpop.f32.mrb[0].mxu0
        %1684 = vdwg.mxu0
        %1686 = vrot.lane.b32.xlu0 %v1575, 112
        %v1687 = vpop.permute.xlu0 %1686
        %1689 = vrot.lane.b32.xlu0 %v1576, 112
        %v1690 = vpop.permute.xlu0 %1689
        %v1692 = vsel %vm1578, %v1687, 0
        %v1695 = vsel %vm1578, %v1690, 0
        %1697 = vmatprep.subr.bf16.mxu0 0
        %1698 = vmatpush1.bf16.xpose.msra.mxu0 %v1695
        %1699 = vmatprep.subr.bf16.mxu0 0
        %1700 = vmatpush1.bf16.xpose.msra.mxu0 0
        %1701 = vmatprep.subr.bf16.mxu0 0
        %1702 = vmatpush1.bf16.xpose.msra.mxu0 0
        %1703 = vmatprep.subr.bf16.mxu0 0
        %1704 = vmatpush1.bf16.xpose.msra.mxu0 0
        %1705 = vmatprep.subr.bf16.mxu0 0
        %1706 = vmatpush1.bf16.xpose.msra.mxu0 0
        %1707 = vmatprep.subr.bf16.mxu0 0
        %1708 = vmatpush1.bf16.xpose.msra.mxu0 0
        %1709 = vmatprep.subr.bf16.mxu0 0
        %1710 = vmatpush1.bf16.xpose.msra.mxu0 0
        %1711 = vmatprep.subr.bf16.mxu0 0
        %1712 = vmatpush1.bf16.xpose.msra.mxu0 0
        %1713 = vmatprep.subr.bf16.mxu0 0
        %1714 = vmatpush1.bf16.xpose.msra.mxu0 0
        %1715 = vmatprep.subr.bf16.mxu0 0
        %1716 = vmatpush1.bf16.xpose.msra.mxu0 0
        %1717 = vmatprep.subr.bf16.mxu0 0
        %1718 = vmatpush1.bf16.xpose.msra.mxu0 0
        %1719 = vmatprep.subr.bf16.mxu0 0
        %1720 = vmatpush1.bf16.xpose.msra.mxu0 0
        %1721 = vmatprep.subr.bf16.mxu0 0
        %1722 = vmatpush1.bf16.xpose.msra.mxu0 0
        %1723 = vmatprep.subr.bf16.mxu0 0
        %1724 = vmatpush1.bf16.xpose.msra.mxu0 0
        %1725 = vmatprep.subr.bf16.mxu0 0
        %1726 = vmatpush1.bf16.xpose.msra.mxu0 0
        %1727 = vmatprep.subr.bf16.mxu0 0
        %1728 = vmatpush1.bf16.xpose.msra.mxu0 0
        %1729 = vmatprep.mubr.bf16.mxu0 0
        %1730 = vmatmul.mubr.bf16.gmra.mrb[0].mxu0 %v1692
        %v1731 = vpop.f32.mrb[0].mxu0
        %v1732 = vadd.f32 %v1574, %v1731
        %v1733 = vpop.f32.mrb[0].mxu0
        %v1734 = vpop.f32.mrb[0].mxu0
        %v1735 = vpop.f32.mrb[0].mxu0
        %1736 = vdwg.mxu0
        %v1737 = vsel %vm1625, %v1732, -inf
        %1738 = vmax.xlane.f32.xlu0 %v1737
        %v1739 = vpop.xlane.xlu0 %1738
        %v1740 = vsub.f32 %v1732, %v1739
        %v1741 = vmul.f32 %v1740, 1.442695
        %v1742 = vpow.pop %v1741
        %v1743 = vsel %vm1625, %v1742, 0.0
        %1744 = vadd.xlane.f32.xlu0 %v1743
        %v1745 = vpop.xlane.xlu0 %1744
        %v1746 = vrcp.pop %v1745
        %v1747 = vmul.f32 %v1742, %v1746
        %v1748 = vpack.c.bf16 %v1747, %v1747
        %1750 = vrot.lane.b32.xlu0 %v1577, 112
        %v1751 = vpop.permute.xlu0 %1750
        %v1753 = vsel %vm1625, %v1748, 0
        %v1756 = vsel %vm1641, %v1751, 0
        %1758 = vmatprep.subr.bf16.mxu0 0
        %1759 = vmatpush1.bf16.msra.mxu0 %v1756
        %1760 = vmatprep.subr.bf16.mxu0 0
        %1761 = vmatpush1.bf16.msra.mxu0 0
        %1762 = vmatprep.subr.bf16.mxu0 0
        %1763 = vmatpush1.bf16.msra.mxu0 0
        %1764 = vmatprep.subr.bf16.mxu0 0
        %1765 = vmatpush1.bf16.msra.mxu0 0
        %1766 = vmatprep.subr.bf16.mxu0 0
        %1767 = vmatpush1.bf16.msra.mxu0 0
        %1768 = vmatprep.subr.bf16.mxu0 0
        %1769 = vmatpush1.bf16.msra.mxu0 0
        %1770 = vmatprep.subr.bf16.mxu0 0
        %1771 = vmatpush1.bf16.msra.mxu0 0
        %1772 = vmatprep.subr.bf16.mxu0 0
        %1773 = vmatpush1.bf16.msra.mxu0 0
        %1774 = vmatprep.subr.bf16.mxu0 0
        %1775 = vmatpush1.bf16.msra.mxu0 0
        %1776 = vmatprep.subr.bf16.mxu0 0
        %1777 = vmatpush1.bf16.msra.mxu0 0
        %1778 = vmatprep.subr.bf16.mxu0 0
        %1779 = vmatpush1.bf16.msra.mxu0 0
        %1780 = vmatprep.subr.bf16.mxu0 0
        %1781 = vmatpush1.bf16.msra.mxu0 0
        %1782 = vmatprep.subr.bf16.mxu0 0
        %1783 = vmatpush1.bf16.msra.mxu0 0
        %1784 = vmatprep.subr.bf16.mxu0 0
        %1785 = vmatpush1.bf16.msra.mxu0 0
        %1786 = vmatprep.subr.bf16.mxu0 0
        %1787 = vmatpush1.bf16.msra.mxu0 0
        %1788 = vmatprep.subr.bf16.mxu0 0
        %1789 = vmatpush1.bf16.msra.mxu0 0
        %1790 = vmatprep.mubr.bf16.mxu0 0
        %1791 = vmatmul.mubr.bf16.gmra.mrb[0].mxu0 %v1753
        %v1792 = vpop.f32.mrb[0].mxu0
        %v1793 = vadd.f32 0.0, %v1792
        %v1794 = vpop.f32.mrb[0].mxu0
        %v1795 = vpop.f32.mrb[0].mxu0
        %v1796 = vpop.f32.mrb[0].mxu0
        %1797 = vdwg.mxu0
        %1799 = vrot.lane.b32.xlu0 %v1793, 16
        %v1800 = vpop.permute.xlu0 %1799
        %v1802 = vsel %vm1578, %v1680, %v1800
        %v1803 = vpack.c.bf16 %v1528, %v1528
        %v1804 = vpack.c.bf16 %v1530, %v1530
        %v1805 = vpack.c.bf16 %v1570, %v1570
        %v1807 = vsel %vm1578, %v1803, 0
        %v1810 = vsel %vm1578, %v1804, 0
        %1812 = vmatprep.subr.bf16.mxu0 0
        %1813 = vmatpush1.bf16.xpose.msra.mxu0 %v1810
        %1814 = vmatprep.subr.bf16.mxu0 0
        %1815 = vmatpush1.bf16.xpose.msra.mxu0 0
        %1816 = vmatprep.subr.bf16.mxu0 0
        %1817 = vmatpush1.bf16.xpose.msra.mxu0 0
        %1818 = vmatprep.subr.bf16.mxu0 0
        %1819 = vmatpush1.bf16.xpose.msra.mxu0 0
        %1820 = vmatprep.subr.bf16.mxu0 0
        %1821 = vmatpush1.bf16.xpose.msra.mxu0 0
        %1822 = vmatprep.subr.bf16.mxu0 0
        %1823 = vmatpush1.bf16.xpose.msra.mxu0 0
        %1824 = vmatprep.subr.bf16.mxu0 0
        %1825 = vmatpush1.bf16.xpose.msra.mxu0 0
        %1826 = vmatprep.subr.bf16.mxu0 0
        %1827 = vmatpush1.bf16.xpose.msra.mxu0 0
        %1828 = vmatprep.subr.bf16.mxu0 0
        %1829 = vmatpush1.bf16.xpose.msra.mxu0 0
        %1830 = vmatprep.subr.bf16.mxu0 0
        %1831 = vmatpush1.bf16.xpose.msra.mxu0 0
        %1832 = vmatprep.subr.bf16.mxu0 0
        %1833 = vmatpush1.bf16.xpose.msra.mxu0 0
        %1834 = vmatprep.subr.bf16.mxu0 0
        %1835 = vmatpush1.bf16.xpose.msra.mxu0 0
        %1836 = vmatprep.subr.bf16.mxu0 0
        %1837 = vmatpush1.bf16.xpose.msra.mxu0 0
        %1838 = vmatprep.subr.bf16.mxu0 0
        %1839 = vmatpush1.bf16.xpose.msra.mxu0 0
        %1840 = vmatprep.subr.bf16.mxu0 0
        %1841 = vmatpush1.bf16.xpose.msra.mxu0 0
        %1842 = vmatprep.subr.bf16.mxu0 0
        %1843 = vmatpush1.bf16.xpose.msra.mxu0 0
        %1844 = vmatprep.mubr.bf16.mxu0 0
        %1845 = vmatmul.mubr.bf16.gmra.mrb[0].mxu0 %v1807
        %v1846 = vpop.f32.mrb[0].mxu0
        %v1847 = vadd.f32 %v1574, %v1846
        %v1848 = vpop.f32.mrb[0].mxu0
        %v1849 = vpop.f32.mrb[0].mxu0
        %v1850 = vpop.f32.mrb[0].mxu0
        %1851 = vdwg.mxu0
        %v1852 = vsel %vm1625, %v1847, -inf
        %1853 = vmax.xlane.f32.xlu0 %v1852
        %v1854 = vpop.xlane.xlu0 %1853
        %v1855 = vsub.f32 %v1847, %v1854
        %v1856 = vmul.f32 %v1855, 1.442695
        %v1857 = vpow.pop %v1856
        %v1858 = vsel %vm1625, %v1857, 0.0
        %1859 = vadd.xlane.f32.xlu0 %v1858
        %v1860 = vpop.xlane.xlu0 %1859
        %v1861 = vrcp.pop %v1860
        %v1862 = vmul.f32 %v1857, %v1861
        %v1863 = vpack.c.bf16 %v1862, %v1862
        %v1865 = vsel %vm1625, %v1863, 0
        %v1868 = vsel %vm1641, %v1805, 0
        %1870 = vmatprep.subr.bf16.mxu0 0
        %1871 = vmatpush1.bf16.msra.mxu0 %v1868
        %1872 = vmatprep.subr.bf16.mxu0 0
        %1873 = vmatpush1.bf16.msra.mxu0 0
        %1874 = vmatprep.subr.bf16.mxu0 0
        %1875 = vmatpush1.bf16.msra.mxu0 0
        %1876 = vmatprep.subr.bf16.mxu0 0
        %1877 = vmatpush1.bf16.msra.mxu0 0
        %1878 = vmatprep.subr.bf16.mxu0 0
        %1879 = vmatpush1.bf16.msra.mxu0 0
        %1880 = vmatprep.subr.bf16.mxu0 0
        %1881 = vmatpush1.bf16.msra.mxu0 0
        %1882 = vmatprep.subr.bf16.mxu0 0
        %1883 = vmatpush1.bf16.msra.mxu0 0
        %1884 = vmatprep.subr.bf16.mxu0 0
        %1885 = vmatpush1.bf16.msra.mxu0 0
        %1886 = vmatprep.subr.bf16.mxu0 0
        %1887 = vmatpush1.bf16.msra.mxu0 0
        %1888 = vmatprep.subr.bf16.mxu0 0
        %1889 = vmatpush1.bf16.msra.mxu0 0
        %1890 = vmatprep.subr.bf16.mxu0 0
        %1891 = vmatpush1.bf16.msra.mxu0 0
        %1892 = vmatprep.subr.bf16.mxu0 0
        %1893 = vmatpush1.bf16.msra.mxu0 0
        %1894 = vmatprep.subr.bf16.mxu0 0
        %1895 = vmatpush1.bf16.msra.mxu0 0
        %1896 = vmatprep.subr.bf16.mxu0 0
        %1897 = vmatpush1.bf16.msra.mxu0 0
        %1898 = vmatprep.subr.bf16.mxu0 0
        %1899 = vmatpush1.bf16.msra.mxu0 0
        %1900 = vmatprep.subr.bf16.mxu0 0
        %1901 = vmatpush1.bf16.msra.mxu0 0
        %1902 = vmatprep.mubr.bf16.mxu0 0
        %1903 = vmatmul.mubr.bf16.gmra.mrb[0].mxu0 %v1865
        %v1904 = vpop.f32.mrb[0].mxu0
        %v1905 = vadd.f32 0.0, %v1904
        %v1906 = vpop.f32.mrb[0].mxu0
        %v1907 = vpop.f32.mrb[0].mxu0
        %v1908 = vpop.f32.mrb[0].mxu0
        %1909 = vdwg.mxu0
        %1911 = vrot.lane.b32.xlu0 %v1803, 112
        %v1912 = vpop.permute.xlu0 %1911
        %1914 = vrot.lane.b32.xlu0 %v1804, 112
        %v1915 = vpop.permute.xlu0 %1914
        %v1917 = vsel %vm1578, %v1912, 0
        %v1920 = vsel %vm1578, %v1915, 0
        %1922 = vmatprep.subr.bf16.mxu0 0
        %1923 = vmatpush1.bf16.xpose.msra.mxu0 %v1920
        %1924 = vmatprep.subr.bf16.mxu0 0
        %1925 = vmatpush1.bf16.xpose.msra.mxu0 0
        %1926 = vmatprep.subr.bf16.mxu0 0
        %1927 = vmatpush1.bf16.xpose.msra.mxu0 0
        %1928 = vmatprep.subr.bf16.mxu0 0
        %1929 = vmatpush1.bf16.xpose.msra.mxu0 0
        %1930 = vmatprep.subr.bf16.mxu0 0
        %1931 = vmatpush1.bf16.xpose.msra.mxu0 0
        %1932 = vmatprep.subr.bf16.mxu0 0
        %1933 = vmatpush1.bf16.xpose.msra.mxu0 0
        %1934 = vmatprep.subr.bf16.mxu0 0
        %1935 = vmatpush1.bf16.xpose.msra.mxu0 0
        %1936 = vmatprep.subr.bf16.mxu0 0
        %1937 = vmatpush1.bf16.xpose.msra.mxu0 0
        %1938 = vmatprep.subr.bf16.mxu0 0
        %1939 = vmatpush1.bf16.xpose.msra.mxu0 0
        %1940 = vmatprep.subr.bf16.mxu0 0
        %1941 = vmatpush1.bf16.xpose.msra.mxu0 0
        %1942 = vmatprep.subr.bf16.mxu0 0
        %1943 = vmatpush1.bf16.xpose.msra.mxu0 0
        %1944 = vmatprep.subr.bf16.mxu0 0
        %1945 = vmatpush1.bf16.xpose.msra.mxu0 0
        %1946 = vmatprep.subr.bf16.mxu0 0
        %1947 = vmatpush1.bf16.xpose.msra.mxu0 0
        %1948 = vmatprep.subr.bf16.mxu0 0
        %1949 = vmatpush1.bf16.xpose.msra.mxu0 0
        %1950 = vmatprep.subr.bf16.mxu0 0
        %1951 = vmatpush1.bf16.xpose.msra.mxu0 0
        %1952 = vmatprep.subr.bf16.mxu0 0
        %1953 = vmatpush1.bf16.xpose.msra.mxu0 0
        %1954 = vmatprep.mubr.bf16.mxu0 0
        %1955 = vmatmul.mubr.bf16.gmra.mrb[0].mxu0 %v1917
        %v1956 = vpop.f32.mrb[0].mxu0
        %v1957 = vadd.f32 %v1574, %v1956
        %v1958 = vpop.f32.mrb[0].mxu0
        %v1959 = vpop.f32.mrb[0].mxu0
        %v1960 = vpop.f32.mrb[0].mxu0
        %1961 = vdwg.mxu0
        %v1962 = vsel %vm1625, %v1957, -inf
        %1963 = vmax.xlane.f32.xlu0 %v1962
        %v1964 = vpop.xlane.xlu0 %1963
        %v1965 = vsub.f32 %v1957, %v1964
        %v1966 = vmul.f32 %v1965, 1.442695
        %v1967 = vpow.pop %v1966
        %v1968 = vsel %vm1625, %v1967, 0.0
        %1969 = vadd.xlane.f32.xlu0 %v1968
        %v1970 = vpop.xlane.xlu0 %1969
        %v1971 = vrcp.pop %v1970
        %v1972 = vmul.f32 %v1967, %v1971
        %v1973 = vpack.c.bf16 %v1972, %v1972
        %1975 = vrot.lane.b32.xlu0 %v1805, 112
        %v1976 = vpop.permute.xlu0 %1975
        %v1978 = vsel %vm1625, %v1973, 0
        %v1981 = vsel %vm1641, %v1976, 0
        %1983 = vmatprep.subr.bf16.mxu0 0
        %1984 = vmatpush1.bf16.msra.mxu0 %v1981
        %1985 = vmatprep.subr.bf16.mxu0 0
        %1986 = vmatpush1.bf16.msra.mxu0 0
        %1987 = vmatprep.subr.bf16.mxu0 0
        %1988 = vmatpush1.bf16.msra.mxu0 0
        %1989 = vmatprep.subr.bf16.mxu0 0
        %1990 = vmatpush1.bf16.msra.mxu0 0
        %1991 = vmatprep.subr.bf16.mxu0 0
        %1992 = vmatpush1.bf16.msra.mxu0 0
        %1993 = vmatprep.subr.bf16.mxu0 0
        %1994 = vmatpush1.bf16.msra.mxu0 0
        %1995 = vmatprep.subr.bf16.mxu0 0
        %1996 = vmatpush1.bf16.msra.mxu0 0
        %1997 = vmatprep.subr.bf16.mxu0 0
        %1998 = vmatpush1.bf16.msra.mxu0 0
        %1999 = vmatprep.subr.bf16.mxu0 0
        %2000 = vmatpush1.bf16.msra.mxu0 0
        %2001 = vmatprep.subr.bf16.mxu0 0
        %2002 = vmatpush1.bf16.msra.mxu0 0
        %2003 = vmatprep.subr.bf16.mxu0 0
        %2004 = vmatpush1.bf16.msra.mxu0 0
        %2005 = vmatprep.subr.bf16.mxu0 0
        %2006 = vmatpush1.bf16.msra.mxu0 0
        %2007 = vmatprep.subr.bf16.mxu0 0
        %2008 = vmatpush1.bf16.msra.mxu0 0
        %2009 = vmatprep.subr.bf16.mxu0 0
        %2010 = vmatpush1.bf16.msra.mxu0 0
        %2011 = vmatprep.subr.bf16.mxu0 0
        %2012 = vmatpush1.bf16.msra.mxu0 0
        %2013 = vmatprep.subr.bf16.mxu0 0
        %2014 = vmatpush1.bf16.msra.mxu0 0
        %2015 = vmatprep.mubr.bf16.mxu0 0
        %2016 = vmatmul.mubr.bf16.gmra.mrb[0].mxu0 %v1978
        %v2017 = vpop.f32.mrb[0].mxu0
        %v2018 = vadd.f32 0.0, %v2017
        %v2019 = vpop.f32.mrb[0].mxu0
        %v2020 = vpop.f32.mrb[0].mxu0
        %v2021 = vpop.f32.mrb[0].mxu0
        %2022 = vdwg.mxu0
        %2024 = vrot.lane.b32.xlu0 %v2018, 16
        %v2025 = vpop.permute.xlu0 %2024
        %v2027 = vsel %vm1578, %v1905, %v2025
        %v2028 = vpack.c.bf16 %v2027, %v1802
        %v2029 = vld [vmem:[%s814] sm:$0xf]
        %v2030 = vld [vmem:[%s814 + $0x4] sm:$0xf]
        %v2031 = vld [vmem:[%s814 + $0x8] sm:$0xf]
        %v2032 = vld [vmem:[%s814 + $0xc] sm:$0xf]
        %v2037 = vunpack.c.l.b16 %v2029
        %v2038 = vunpack.c.l.b16 %v2030
        %v2039 = vunpack.c.l.b16 %v2031
        %v2040 = vunpack.c.l.b16 %v2032
        %v2041 = vpack.c.b16 %v2038, %v2037
        %v2042 = vpack.c.b16 %v2040, %v2039
        %vm2045 = vcmask 261120
        %v2047 = vsel %vm2045, %v2028, 0
        %2049 = vmatprep.subr.bf16.mxu0 0
        %2050 = vmatpush1.bf16.msra.mxu0 %v2041
        %2051 = vmatprep.subr.bf16.mxu0 0
        %2052 = vmatpush1.bf16.msra.mxu0 %v2042
        %2053 = vmatprep.subr.bf16.mxu0 0
        %2054 = vmatpush1.bf16.msra.mxu0 0
        %2055 = vmatprep.subr.bf16.mxu0 0
        %2056 = vmatpush1.bf16.msra.mxu0 0
        %2057 = vmatprep.subr.bf16.mxu0 0
        %2058 = vmatpush1.bf16.msra.mxu0 0
        %2059 = vmatprep.subr.bf16.mxu0 0
        %2060 = vmatpush1.bf16.msra.mxu0 0
        %2061 = vmatprep.subr.bf16.mxu0 0
        %2062 = vmatpush1.bf16.msra.mxu0 0
        %2063 = vmatprep.subr.bf16.mxu0 0
        %2064 = vmatpush1.bf16.msra.mxu0 0
        %2065 = vmatprep.subr.bf16.mxu0 0
        %2066 = vmatpush1.bf16.msra.mxu0 0
        %2067 = vmatprep.subr.bf16.mxu0 0
        %2068 = vmatpush1.bf16.msra.mxu0 0
        %2069 = vmatprep.subr.bf16.mxu0 0
        %2070 = vmatpush1.bf16.msra.mxu0 0
        %2071 = vmatprep.subr.bf16.mxu0 0
        %2072 = vmatpush1.bf16.msra.mxu0 0
        %2073 = vmatprep.subr.bf16.mxu0 0
        %2074 = vmatpush1.bf16.msra.mxu0 0
        %2075 = vmatprep.subr.bf16.mxu0 0
        %2076 = vmatpush1.bf16.msra.mxu0 0
        %2077 = vmatprep.subr.bf16.mxu0 0
        %2078 = vmatpush1.bf16.msra.mxu0 0
        %2079 = vmatprep.subr.bf16.mxu0 0
        %2080 = vmatpush1.bf16.msra.mxu0 0
        %2081 = vmatprep.mubr.bf16.mxu0 0
        %2082 = vmatmul.mubr.bf16.gmra.mrb[0].mxu0 %v2047
        %v2083 = vpop.f32.mrb[0].mxu0
        %v2084 = vadd.f32 0.0, %v2083
        %v2085 = vpop.f32.mrb[0].mxu0
        %v2086 = vpop.f32.mrb[0].mxu0
        %v2087 = vadd.f32 0.0, %v2086
        %v2088 = vpop.f32.mrb[0].mxu0
        %2089 = vdwg.mxu0
        %v2090 = vadd.f32 %v1265, %v2084
        %v2091 = vadd.f32 %v1266, %v2087
        %v2092 = vld [vmem:[%s817] sm:$0x1]
        %v2094 = vlaneseq
        %v2095 = vshrl.u32 %v2094, 7
        %v2096 = vsub.s32 0, %v2095
        %v2097 = vrot.slane %v2092, %v2096
        %v2099 = vadd.f32 %v2090, %v2097
        %v2100 = vadd.f32 %v2091, %v2097
        %v2101 = vld [vmem:[%s820] sm:$0x1]
        %v2102 = vld [vmem:[%s823] sm:$0x1]
        %v2103 = vmul.f32 %v2099, %v845
        %v2104 = vmul.f32 %v2100, %v845
        %2105 = vadd.xlane.f32.xlu0 %v2103
        %v2106 = vpop.xlane.xlu0 %2105
        %2107 = vadd.xlane.f32.xlu0 %v2104
        %v2108 = vpop.xlane.xlu0 %2107
        %v2109 = vmul.f32 %v2106, 0.03125
        %v2110 = vmul.f32 %v2108, 0.03125
        %v2111 = vsub.f32 %v2099, %v2109
        %v2112 = vsub.f32 %v2100, %v2110
        %v2113 = vmul.f32 %v2111, %v845
        %v2114 = vmul.f32 %v2112, %v845
        %v2115 = vmul.f32 %v2113, %v2113
        %v2116 = vmul.f32 %v2114, %v2114
        %2117 = vadd.xlane.f32.xlu0 %v2115
        %v2118 = vpop.xlane.xlu0 %2117
        %2119 = vadd.xlane.f32.xlu0 %v2116
        %v2120 = vpop.xlane.xlu0 %2119
        %v2121 = vmul.f32 %v2118, 0.03125
        %v2122 = vmul.f32 %v2120, 0.03125
        %v2123 = vadd.f32 %v2121, 1e-05
        %v2124 = vadd.f32 %v2122, 1e-05
        %v2125 = vrsqrt.pop %v2123
        %v2126 = vrsqrt.pop %v2124
        %v2127 = vmul.f32 %v2113, %v2125
        %v2128 = vmul.f32 %v2114, %v2126
        %v2130 = vlaneseq
        %v2131 = vshrl.u32 %v2130, 7
        %v2132 = vsub.s32 0, %v2131
        %v2133 = vrot.slane %v2101, %v2132
        %v2135 = vmul.f32 %v2127, %v2133
        %v2136 = vmul.f32 %v2128, %v2133
        %v2138 = vlaneseq
        %v2139 = vshrl.u32 %v2138, 7
        %v2140 = vsub.s32 0, %v2139
        %v2141 = vrot.slane %v2102, %v2140
        %v2143 = vadd.f32 %v2135, %v2141
        %v2144 = vadd.f32 %v2136, %v2141
        %v2145 = vpack.c.bf16 %v2144, %v2143
        %v2146 = vld [vmem:[%s828] sm:$0xf]
        %v2147 = vld [vmem:[%s828 + $0x4] sm:$0xf]
        %v2148 = vld [vmem:[%s828 + $0x8] sm:$0xf]
        %v2149 = vld [vmem:[%s828 + $0xc] sm:$0xf]
        %v2150 = vld [vmem:[%s828 + $0x10] sm:$0xf]
        %v2151 = vld [vmem:[%s828 + $0x14] sm:$0xf]
        %v2152 = vld [vmem:[%s828 + $0x18] sm:$0xf]
        %v2153 = vld [vmem:[%s828 + $0x1c] sm:$0xf]
        %v2154 = vld [vmem:[%s828 + $0x20] sm:$0xf]
        %v2155 = vld [vmem:[%s828 + $0x24] sm:$0xf]
        %v2156 = vld [vmem:[%s828 + $0x28] sm:$0xf]
        %v2157 = vld [vmem:[%s828 + $0x2c] sm:$0xf]
        %v2158 = vld [vmem:[%s828 + $0x30] sm:$0xf]
        %v2159 = vld [vmem:[%s828 + $0x34] sm:$0xf]
        %v2160 = vld [vmem:[%s828 + $0x38] sm:$0xf]
        %v2161 = vld [vmem:[%s828 + $0x3c] sm:$0xf]
        %v2162 = vld [vmem:[%s831] sm:$0x1]
        %v2164 = vlaneseq
        %v2165 = vshrl.u32 %v2164, 7
        %v2166 = vsub.s32 0, %v2165
        %v2167 = vrot.slane %v2162, %v2166
        %v2185 = vunpack.c.l.b16 %v2146
        %v2186 = vunpack.c.l.b16 %v2147
        %v2187 = vunpack.c.l.b16 %v2148
        %v2188 = vunpack.c.l.b16 %v2149
        %v2189 = vunpack.c.l.b16 %v2150
        %v2190 = vunpack.c.l.b16 %v2151
        %v2191 = vunpack.c.l.b16 %v2152
        %v2192 = vunpack.c.l.b16 %v2153
        %v2193 = vunpack.c.l.b16 %v2154
        %v2194 = vunpack.c.l.b16 %v2155
        %v2195 = vunpack.c.l.b16 %v2156
        %v2196 = vunpack.c.l.b16 %v2157
        %v2197 = vunpack.c.l.b16 %v2158
        %v2198 = vunpack.c.l.b16 %v2159
        %v2199 = vunpack.c.l.b16 %v2160
        %v2200 = vunpack.c.l.b16 %v2161
        %v2201 = vpack.c.b16 %v2186, %v2185
        %v2202 = vpack.c.b16 %v2188, %v2187
        %v2203 = vpack.c.b16 %v2190, %v2189
        %v2204 = vpack.c.b16 %v2192, %v2191
        %v2205 = vpack.c.b16 %v2194, %v2193
        %v2206 = vpack.c.b16 %v2196, %v2195
        %v2207 = vpack.c.b16 %v2198, %v2197
        %v2208 = vpack.c.b16 %v2200, %v2199
        %2217 = vmatprep.subr.bf16.mxu0 0
        %2218 = vmatpush1.bf16.msra.mxu0 %v2201
        %2219 = vmatprep.subr.bf16.mxu0 0
        %2220 = vmatpush1.bf16.msra.mxu0 %v2202
        %2221 = vmatprep.subr.bf16.mxu0 0
        %2222 = vmatpush1.bf16.msra.mxu0 %v2203
        %2223 = vmatprep.subr.bf16.mxu0 0
        %2224 = vmatpush1.bf16.msra.mxu0 %v2204
        %2225 = vmatprep.subr.bf16.mxu0 0
        %2226 = vmatpush1.bf16.msra.mxu0 %v2205
        %2227 = vmatprep.subr.bf16.mxu0 0
        %2228 = vmatpush1.bf16.msra.mxu0 %v2206
        %2229 = vmatprep.subr.bf16.mxu0 0
        %2230 = vmatpush1.bf16.msra.mxu0 %v2207
        %2231 = vmatprep.subr.bf16.mxu0 0
        %2232 = vmatpush1.bf16.msra.mxu0 %v2208
        %2233 = vmatprep.subr.bf16.mxu0 0
        %2234 = vmatpush1.bf16.msra.mxu0 0
        %2235 = vmatprep.subr.bf16.mxu0 0
        %2236 = vmatpush1.bf16.msra.mxu0 0
        %2237 = vmatprep.subr.bf16.mxu0 0
        %2238 = vmatpush1.bf16.msra.mxu0 0
        %2239 = vmatprep.subr.bf16.mxu0 0
        %2240 = vmatpush1.bf16.msra.mxu0 0
        %2241 = vmatprep.subr.bf16.mxu0 0
        %2242 = vmatpush1.bf16.msra.mxu0 0
        %2243 = vmatprep.subr.bf16.mxu0 0
        %2244 = vmatpush1.bf16.msra.mxu0 0
        %2245 = vmatprep.subr.bf16.mxu0 0
        %2246 = vmatpush1.bf16.msra.mxu0 0
        %2247 = vmatprep.subr.bf16.mxu0 0
        %2248 = vmatpush1.bf16.msra.mxu0 0
        %2249 = vmatprep.mubr.bf16.mxu0 0
        %2250 = vmatmul.mubr.bf16.gmra.mrb[0].mxu0 %v2145
        %v2251 = vpop.f32.mrb[0].mxu0
        %v2252 = vadd.f32 %v2167, %v2251
        %v2253 = vpop.f32.mrb[0].mxu0
        %v2254 = vpop.f32.mrb[0].mxu0
        %v2255 = vadd.f32 %v2167, %v2254
        %v2256 = vpop.f32.mrb[0].mxu0
        %2257 = vdwg.mxu0
        %v2258 = vmul.f32 %v2252, 1.702
        %v2259 = vmul.f32 %v2255, 1.702
        %v2260 = vxor.u32 %v2258, 2147483648
        %v2261 = vxor.u32 %v2259, 2147483648
        %v2262 = vmul.f32 %v2260, 1.442695
        %v2263 = vpow.pop %v2262
        %v2264 = vmul.f32 %v2261, 1.442695
        %v2265 = vpow.pop %v2264
        %v2266 = vadd.f32 %v2263, 1.0
        %v2267 = vadd.f32 %v2265, 1.0
        %v2268 = vrcp.pop %v2266
        %v2269 = vmul.f32 1.0, %v2268
        %v2270 = vrcp.pop %v2267
        %v2271 = vmul.f32 1.0, %v2270
        %v2272 = vmul.f32 %v2252, %v2269
        %v2273 = vmul.f32 %v2255, %v2271
        %v2274 = vpack.c.bf16 %v2273, %v2272
        %v2275 = vld [vmem:[%s836] sm:$0xf]
        %v2276 = vld [vmem:[%s836 + $0x4] sm:$0xf]
        %v2277 = vld [vmem:[%s836 + $0x8] sm:$0xf]
        %v2278 = vld [vmem:[%s836 + $0xc] sm:$0xf]
        %v2279 = vld [vmem:[%s836 + $0x10] sm:$0xf]
        %v2280 = vld [vmem:[%s836 + $0x14] sm:$0xf]
        %v2281 = vld [vmem:[%s836 + $0x18] sm:$0xf]
        %v2282 = vld [vmem:[%s836 + $0x1c] sm:$0xf]
        %v2283 = vld [vmem:[%s836 + $0x20] sm:$0xf]
        %v2284 = vld [vmem:[%s836 + $0x24] sm:$0xf]
        %v2285 = vld [vmem:[%s836 + $0x28] sm:$0xf]
        %v2286 = vld [vmem:[%s836 + $0x2c] sm:$0xf]
        %v2287 = vld [vmem:[%s836 + $0x30] sm:$0xf]
        %v2288 = vld [vmem:[%s836 + $0x34] sm:$0xf]
        %v2289 = vld [vmem:[%s836 + $0x38] sm:$0xf]
        %v2290 = vld [vmem:[%s836 + $0x3c] sm:$0xf]
        %v2291 = vld [vmem:[%s839] sm:$0x1]
        %v2293 = vlaneseq
        %v2294 = vshrl.u32 %v2293, 7
        %v2295 = vsub.s32 0, %v2294
        %v2296 = vrot.slane %v2291, %v2295
        %v2314 = vunpack.c.l.b16 %v2275
        %v2315 = vunpack.c.l.b16 %v2276
        %v2316 = vunpack.c.l.b16 %v2277
        %v2317 = vunpack.c.l.b16 %v2278
        %v2318 = vunpack.c.l.b16 %v2279
        %v2319 = vunpack.c.l.b16 %v2280
        %v2320 = vunpack.c.l.b16 %v2281
        %v2321 = vunpack.c.l.b16 %v2282
        %v2322 = vunpack.c.l.b16 %v2283
        %v2323 = vunpack.c.l.b16 %v2284
        %v2324 = vunpack.c.l.b16 %v2285
        %v2325 = vunpack.c.l.b16 %v2286
        %v2326 = vunpack.c.l.b16 %v2287
        %v2327 = vunpack.c.l.b16 %v2288
        %v2328 = vunpack.c.l.b16 %v2289
        %v2329 = vunpack.c.l.b16 %v2290
        %v2330 = vpack.c.b16 %v2315, %v2314
        %v2331 = vpack.c.b16 %v2317, %v2316
        %v2332 = vpack.c.b16 %v2319, %v2318
        %v2333 = vpack.c.b16 %v2321, %v2320
        %v2334 = vpack.c.b16 %v2323, %v2322
        %v2335 = vpack.c.b16 %v2325, %v2324
        %v2336 = vpack.c.b16 %v2327, %v2326
        %v2337 = vpack.c.b16 %v2329, %v2328
        %2346 = vmatprep.subr.bf16.mxu0 0
        %2347 = vmatpush1.bf16.msra.mxu0 %v2330
        %2348 = vmatprep.subr.bf16.mxu0 0
        %2349 = vmatpush1.bf16.msra.mxu0 %v2331
        %2350 = vmatprep.subr.bf16.mxu0 0
        %2351 = vmatpush1.bf16.msra.mxu0 %v2332
        %2352 = vmatprep.subr.bf16.mxu0 0
        %2353 = vmatpush1.bf16.msra.mxu0 %v2333
        %2354 = vmatprep.subr.bf16.mxu0 0
        %2355 = vmatpush1.bf16.msra.mxu0 %v2334
        %2356 = vmatprep.subr.bf16.mxu0 0
        %2357 = vmatpush1.bf16.msra.mxu0 %v2335
        %2358 = vmatprep.subr.bf16.mxu0 0
        %2359 = vmatpush1.bf16.msra.mxu0 %v2336
        %2360 = vmatprep.subr.bf16.mxu0 0
        %2361 = vmatpush1.bf16.msra.mxu0 %v2337
        %2362 = vmatprep.subr.bf16.mxu0 0
        %2363 = vmatpush1.bf16.msra.mxu0 0
        %2364 = vmatprep.subr.bf16.mxu0 0
        %2365 = vmatpush1.bf16.msra.mxu0 0
        %2366 = vmatprep.subr.bf16.mxu0 0
        %2367 = vmatpush1.bf16.msra.mxu0 0
        %2368 = vmatprep.subr.bf16.mxu0 0
        %2369 = vmatpush1.bf16.msra.mxu0 0
        %2370 = vmatprep.subr.bf16.mxu0 0
        %2371 = vmatpush1.bf16.msra.mxu0 0
        %2372 = vmatprep.subr.bf16.mxu0 0
        %2373 = vmatpush1.bf16.msra.mxu0 0
        %2374 = vmatprep.subr.bf16.mxu0 0
        %2375 = vmatpush1.bf16.msra.mxu0 0
        %2376 = vmatprep.subr.bf16.mxu0 0
        %2377 = vmatpush1.bf16.msra.mxu0 0
        %2378 = vmatprep.mubr.bf16.mxu0 0
        %2379 = vmatmul.mubr.bf16.gmra.mrb[0].mxu0 %v2274
        %v2380 = vpop.f32.mrb[0].mxu0
        %v2381 = vadd.f32 %v2296, %v2380
        %v2382 = vpop.f32.mrb[0].mxu0
        %v2383 = vpop.f32.mrb[0].mxu0
        %v2384 = vadd.f32 %v2296, %v2383
        %v2385 = vpop.f32.mrb[0].mxu0
        %2386 = vdwg.mxu0
        %v2387 = vadd.f32 %v2099, %v2381
        %v2388 = vadd.f32 %v2100, %v2384
        %2389 = vst [vmem:[#allocation2] sm:$0xff] %v2387
        %2390 = vst [vmem:[#allocation2 + $0x8] sm:$0xff] %v2388
        %p2391 = scmp.eq.s32.totalorder %s39, 1
        // Predicated region
        $region105: #{clip_vision_forward.1} parent=99 // pred_check
          %p2392 = pneg %p2391
        $region106: #{clip_vision_forward.1} parent=99 // pred_check_branch
          %2394 = sbr.rel (%p2392) target = $region108
        $region107: #{clip_vision_forward.1} parent=99 // pred_region
          %v2396 = vrot.slane %v2388, 7
          %vm2398 = vcmask 1040384
          %v2399 = vsel %vm2398, %v2387, %v2396
          %v2400 = vld [vmem:[%s17] sm:$0x1]
          %v2401 = vld [vmem:[%s18] sm:$0x1]
          %v2402 = vmul.f32 %v2399, %v845
          %vm2403 = vcmask 1041408
          %v2404 = vsel %vm2403, %v2402, 0.0
          %2405 = vadd.xlane.f32.xlu0 %v2404
          %v2406 = vpop.xlane.xlu0 %2405
          %v2407 = vmul.f32 %v2406, 0.03125
          %v2408 = vsub.f32 %v2399, %v2407
          %v2409 = vmul.f32 %v2408, %v845
          %v2410 = vmul.f32 %v2409, %v2409
          %v2411 = vsel %vm2403, %v2410, 0.0
          %2412 = vadd.xlane.f32.xlu0 %v2411
          %v2413 = vpop.xlane.xlu0 %2412
          %v2414 = vmul.f32 %v2413, 0.03125
          %v2415 = vadd.f32 %v2414, 1e-05
          %v2416 = vrsqrt.pop %v2415
          %v2417 = vmul.f32 %v2409, %v2416
          %v2419 = vlaneseq
          %v2420 = vshrl.u32 %v2419, 7
          %v2421 = vsub.s32 0, %v2420
          %v2422 = vrot.slane %v2400, %v2421
          %v2424 = vmul.f32 %v2417, %v2422
          %v2426 = vlaneseq
          %v2427 = vshrl.u32 %v2426, 7
          %v2428 = vsub.s32 0, %v2427
          %v2429 = vrot.slane %v2401, %v2428
          %v2431 = vadd.f32 %v2424, %v2429
          %v2432 = vpack.c.bf16 %v2431, %v2431
          %v2433 = vld [vmem:[%s19] sm:$0xf]
          %v2434 = vld [vmem:[%s19 + $0x4] sm:$0xf]
          %v2435 = vld [vmem:[%s19 + $0x8] sm:$0xf]
          %v2436 = vld [vmem:[%s19 + $0xc] sm:$0xf]
          %v2437 = vld [vmem:[%s19 + $0x10] sm:$0xf]
          %v2438 = vld [vmem:[%s19 + $0x14] sm:$0xf]
          %v2439 = vld [vmem:[%s19 + $0x18] sm:$0xf]
          %v2440 = vld [vmem:[%s19 + $0x1c] sm:$0xf]
          %v2441 = vld [vmem:[%s19 + $0x20] sm:$0xf]
          %v2442 = vld [vmem:[%s19 + $0x24] sm:$0xf]
          %v2443 = vld [vmem:[%s19 + $0x28] sm:$0xf]
          %v2444 = vld [vmem:[%s19 + $0x2c] sm:$0xf]
          %v2445 = vld [vmem:[%s19 + $0x30] sm:$0xf]
          %v2446 = vld [vmem:[%s19 + $0x34] sm:$0xf]
          %v2447 = vld [vmem:[%s19 + $0x38] sm:$0xf]
          %v2448 = vld [vmem:[%s19 + $0x3c] sm:$0xf]
          %v2465 = vunpack.c.l.b16 %v2433
          %v2466 = vunpack.c.l.b16 %v2434
          %v2467 = vunpack.c.l.b16 %v2435
          %v2468 = vunpack.c.l.b16 %v2436
          %v2469 = vunpack.c.l.b16 %v2437
          %v2470 = vunpack.c.l.b16 %v2438
          %v2471 = vunpack.c.l.b16 %v2439
          %v2472 = vunpack.c.l.b16 %v2440
          %v2473 = vunpack.c.l.b16 %v2441
          %v2474 = vunpack.c.l.b16 %v2442
          %v2475 = vunpack.c.l.b16 %v2443
          %v2476 = vunpack.c.l.b16 %v2444
          %v2477 = vunpack.c.l.b16 %v2445
          %v2478 = vunpack.c.l.b16 %v2446
          %v2479 = vunpack.c.l.b16 %v2447
          %v2480 = vunpack.c.l.b16 %v2448
          %v2481 = vpack.c.b16 %v2466, %v2465
          %v2482 = vpack.c.b16 %v2468, %v2467
          %v2483 = vpack.c.b16 %v2470, %v2469
          %v2484 = vpack.c.b16 %v2472, %v2471
          %v2485 = vpack.c.b16 %v2474, %v2473
          %v2486 = vpack.c.b16 %v2476, %v2475
          %v2487 = vpack.c.b16 %v2478, %v2477
          %v2488 = vpack.c.b16 %v2480, %v2479
          %2497 = vmatprep.subr.bf16.mxu0 0
          %2498 = vmatpush1.bf16.msra.mxu0 %v2481
          %2499 = vmatprep.subr.bf16.mxu0 0
          %2500 = vmatpush1.bf16.msra.mxu0 %v2482
          %2501 = vmatprep.subr.bf16.mxu0 0
          %2502 = vmatpush1.bf16.msra.mxu0 %v2483
          %2503 = vmatprep.subr.bf16.mxu0 0
          %2504 = vmatpush1.bf16.msra.mxu0 %v2484
          %2505 = vmatprep.subr.bf16.mxu0 0
          %2506 = vmatpush1.bf16.msra.mxu0 %v2485
          %2507 = vmatprep.subr.bf16.mxu0 0
          %2508 = vmatpush1.bf16.msra.mxu0 %v2486
          %2509 = vmatprep.subr.bf16.mxu0 0
          %2510 = vmatpush1.bf16.msra.mxu0 %v2487
          %2511 = vmatprep.subr.bf16.mxu0 0
          %2512 = vmatpush1.bf16.msra.mxu0 %v2488
          %2513 = vmatprep.subr.bf16.mxu0 0
          %2514 = vmatpush1.bf16.msra.mxu0 0
          %2515 = vmatprep.subr.bf16.mxu0 0
          %2516 = vmatpush1.bf16.msra.mxu0 0
          %2517 = vmatprep.subr.bf16.mxu0 0
          %2518 = vmatpush1.bf16.msra.mxu0 0
          %2519 = vmatprep.subr.bf16.mxu0 0
          %2520 = vmatpush1.bf16.msra.mxu0 0
          %2521 = vmatprep.subr.bf16.mxu0 0
          %2522 = vmatpush1.bf16.msra.mxu0 0
          %2523 = vmatprep.subr.bf16.mxu0 0
          %2524 = vmatpush1.bf16.msra.mxu0 0
          %2525 = vmatprep.subr.bf16.mxu0 0
          %2526 = vmatpush1.bf16.msra.mxu0 0
          %2527 = vmatprep.subr.bf16.mxu0 0
          %2528 = vmatpush1.bf16.msra.mxu0 0
          %2529 = vmatprep.mubr.bf16.mxu0 0
          %2530 = vmatmul.mubr.bf16.gmra.mrb[0].mxu0 %v2432
          %v2531 = vpop.f32.mrb[0].mxu0
          %v2532 = vadd.f32 0.0, %v2531
          %v2533 = vpop.f32.mrb[0].mxu0
          %v2534 = vpop.f32.mrb[0].mxu0
          %v2535 = vpop.f32.mrb[0].mxu0
          %2536 = vdwg.mxu0
          %2537 = vst [vmem:[%s787] sm:$0x3] %v2532
        $region108: #{clip_vision_forward.1} parent=99 // pred_fallthru
          _
        %s2538 = sand.u32 %s539, 1
        %s2539 = scalar_lea.sflag [#allocation4], %s2538
        %s2540 = sand.u32 %s539, 1
        %s2541 = smul.addr %s2540, 2
        %s2542 = scalar_lea.vmem [#allocation3], %s2541
        // Predicated region
        $region109: #{clip_vision_forward.1} parent=99 // pred_check
          %p2543 = pneg %p549
        $region110: #{clip_vision_forward.1} parent=99 // pred_check_branch
          %2545 = sbr.rel (%p2543) target = $region112
        $region111: #{clip_vision_forward.1} parent=99 // pred_region
          %s2547 = ssub.s32 32, 32
          %2548 = vsyncadd %s2539, %s2547
          %s2549 = smul.addr %s38, 32
          %s2550 = scalar_lea.hbm %s20, %s2549
          %s2552 = sshll.u32 %s2542, 4
          %s2553 = int_to_ptr.vmem [resolvable:$true] %s2552
          %2555 = dma.vmem_to_hbm [thread:$0]  %s2553, 32, %s2550, %s2539
        $region112: #{clip_vision_forward.1} parent=99 // pred_fallthru
          _
      $region100: #{clip_vision_forward.1} parent=5 // pred_fallthru
        _
      %p2556 = scmp.le.s32.totalorder 2, %s29
      // Predicated region
      $region113: #{clip_vision_forward.1} parent=5 // pred_check
        %p2557 = pneg %p2556
      $region114: #{clip_vision_forward.1} parent=5 // pred_check_branch
        %2559 = sbr.rel (%p2557) target = $region116
      $region115: #{clip_vision_forward.1} parent=5 // pred_region
        %s2560 = ssub.s32 %s29, 2
        // Predicated region
        $region117: #{clip_vision_forward.1} parent=115 // pred_check
          %p2561 = pneg %p555
        $region118: #{clip_vision_forward.1} parent=115 // pred_check_branch
          %2563 = sbr.rel (%p2561) target = $region120
        $region119: #{clip_vision_forward.1} parent=115 // pred_region
          %s2564 = sand.u32 %s540, 1
          %s2565 = scalar_lea.sflag [#allocation4], %s2564
          %s2566 = sand.u32 %s540, 1
          %s2567 = smul.addr %s2566, 2
          %s2568 = scalar_lea.vmem [#allocation3], %s2567
          %2569 = dma.done %s2565, 32
        $region120: #{clip_vision_forward.1} parent=115 // pred_fallthru
          _
      $region116: #{clip_vision_forward.1} parent=5 // pred_fallthru
        _
    $region6: #{clip_vision_forward.1} parent=1 // loop_footer
      %s33 = sadd.s32 1, %s29
    $region7: #{clip_vision_forward.1} parent=1 // loop_footer_branch
      %28 = sbr.rel target = $region3
    $region8: #{clip_vision_forward.1} parent=1 // loop_exit
      _
    %2570 = vsyncpa [#allocation4], 1
    %s2571 = scalar_lea.sflag [#allocation4], 1
    %2572 = vsyncpa %s2571, 1

</llo_original>
